<compile_context>
chip_gen: v6e
topology: v6e:2x2x1
jax: 0.10.0
libtpu: 0.0.40
codegen_flags: <defaults>
</compile_context>

<pallas_src>
import jax
import jax.numpy as jnp
from jax import lax
from jax.experimental import pallas as pl
from jax.experimental.pallas import tpu as pltpu


# --------------------------- fused encoder kernel ----------------------------
def _make_encoder_kernel(n_layers, hidden_dim, chunk, total_t):
    """Fused kernel: per-chunk batched layer-0 projection + recurrent loop."""
    L = n_layers
    H = hidden_dim
    n_chunks = -(-total_t // chunk)

    def kernel(*refs):
        x_ref = refs[0]                              # (chunk, B, F) bf16 frame features
        w_ih0_ref = refs[1]                          # (F, 4H) bf16  layer-0 input weights
        b0_ref = refs[2]                             # (1, 4H) f32   layer-0 bias (b_ih+b_hh)
        idx = 3
        w_hh_refs = refs[idx:idx + L];      idx += L        # L x (H, 4H) bf16
        w_ih_refs = refs[idx:idx + L - 1];  idx += L - 1    # (L-1) x (H, 4H) bf16
        b_refs = refs[idx:idx + L - 1];     idx += L - 1    # (L-1) x (1, 4H) f32
        h_out_ref = refs[idx]                        # (L, B, H) f32
        c_out_ref = refs[idx + 1]                    # (L, B, H) f32
        ih0_sc = refs[idx + 2]                       # (chunk, B, 4H) f32 scratch
        h_sc = refs[idx + 3]                         # (L, B, H) f32 scratch (state)
        c_sc = refs[idx + 4]                         # (L, B, H) f32 scratch (state)

        ci = pl.program_id(0)

        @pl.when(ci == 0)
        def _init():
            # nn.LSTM default: zero initial hidden/cell state.
            h_sc[...] = jnp.zeros_like(h_sc)
            c_sc[...] = jnp.zeros_like(c_sc)

        # ---- hoisted layer-0 input projection: one big MXU pass per chunk ----
        x_all = x_ref[...]                                           # [Tc, B, F] bf16
        tc, b, f = x_all.shape
        proj = jnp.dot(x_all.reshape(tc * b, f), w_ih0_ref[...],
                       preferred_element_type=jnp.float32)           # [Tc*B, 4H] f32
        proj = proj + b0_ref[...]
        ih0_sc[...] = proj.reshape(ih0_sc.shape)

        # ---------------------------- recurrence ------------------------------
        def step(t, carry):
            hs, cs = carry                                           # tuples of [B,H] f32
            new_hs, new_cs = [], []
            x_gates = ih0_sc[t]                                      # [B, 4H] f32 (x@W_ih0 + b0)
            layer_in = None                                          # bf16 input to layer l>=1
            for l in range(L):
                rec = jnp.dot(hs[l].astype(jnp.bfloat16), w_hh_refs[l][...],
                              preferred_element_type=jnp.float32)    # h @ W_hh
                if l == 0:
                    gates = x_gates + rec
                else:
                    gates = (jnp.dot(layer_in, w_ih_refs[l - 1][...],
                                     preferred_element_type=jnp.float32)
                             + rec + b_refs[l - 1][...])
                # gate order [i, f, o | g]: one contiguous sigmoid, one tanh.
                sig = jax.nn.sigmoid(gates[:, :3 * H])
                g_g = jnp.tanh(gates[:, 3 * H:])
                i_g = sig[:, 0 * H:1 * H]
                f_g = sig[:, 1 * H:2 * H]
                o_g = sig[:, 2 * H:3 * H]
                c_new = f_g * cs[l] + i_g * g_g                      # f32 elementwise
                h_new = o_g * jnp.tanh(c_new)
                new_hs.append(h_new)
                new_cs.append(c_new)
                layer_in = h_new.astype(jnp.bfloat16)                # dropout==identity (eval)
            return tuple(new_hs), tuple(new_cs)

        hs = tuple(h_sc[l] for l in range(L))
        cs = tuple(c_sc[l] for l in range(L))
        carry = (hs, cs)
        if n_chunks == 1:
            # Static, short trip count: fully unroll for LLO scheduler visibility.
            for t in range(total_t):
                carry = step(t, carry)
        else:
            steps = jnp.minimum(chunk, total_t - ci * chunk)         # ragged last chunk
            carry = lax.fori_loop(0, steps, step, carry)
        hs, cs = carry

        for l in range(L):
            h_sc[l] = hs[l]
            c_sc[l] = cs[l]

        @pl.when(ci == pl.num_programs(0) - 1)
        def _finish():
            h_out_ref[...] = h_sc[...]
            c_out_ref[...] = c_sc[...]

    return kernel


# --------------------------------- wrapper ------------------------------------
def encoder_forward(params, cnn_features, *, max_chunk=32):
    """cnn_features: [T, B, F] f32.  Returns (hidden [L,B,H], cell [L,B,H])."""
    T, B, F = cnn_features.shape
    L = len(params["w_hh"])
    H = params["w_hh"][0].shape[0]
    G = 4 * H

    chunk = T if T <= max_chunk else max_chunk
    n_chunks = pl.cdiv(T, chunk)

    kernel = _make_encoder_kernel(L, H, chunk, T)

    # bf16 features: halves input DMA bytes; matmul accumulation stays f32.
    x_bf16 = cnn_features.astype(jnp.bfloat16)

    const2 = lambda i: (0, 0)   # whole-array, grid-constant blocks -> VMEM resident
    in_specs = [pl.BlockSpec((chunk, B, F), lambda i: (i, 0, 0)),
                pl.BlockSpec(params["w_ih0"].shape, const2),
                pl.BlockSpec(params["b0"].shape, const2)]
    in_specs += [pl.BlockSpec(w.shape, const2) for w in params["w_hh"]]
    in_specs += [pl.BlockSpec(w.shape, const2) for w in params["w_ih"]]
    in_specs += [pl.BlockSpec(b.shape, const2) for b in params["b"]]

    grid_spec = pltpu.PrefetchScalarGridSpec(
        num_scalar_prefetch=0,
        grid=(n_chunks,),
        in_specs=in_specs,
        out_specs=(pl.BlockSpec((L, B, H), lambda i: (0, 0, 0)),
                   pl.BlockSpec((L, B, H), lambda i: (0, 0, 0))),
        scratch_shapes=[pltpu.VMEM((chunk, B, G), jnp.float32),   # hoisted layer-0 gates
                        pltpu.VMEM((L, B, H), jnp.float32),       # h state
                        pltpu.VMEM((L, B, H), jnp.float32)],      # c state
    )

    return pl.pallas_call(
        kernel,
        out_shape=(jax.ShapeDtypeStruct((L, B, H), jnp.float32),
                   jax.ShapeDtypeStruct((L, B, H), jnp.float32)),
        grid_spec=grid_spec,
        compiler_params=pltpu.CompilerParams(
            dimension_semantics=("arbitrary",),        # time chunks are a recurrence
            vmem_limit_bytes=32 * 1024 * 1024),
    )(x_bf16, params["w_ih0"], params["b0"],
      *params["w_hh"], *params["w_ih"], *params["b"])


# ------------------------------ pure-JAX reference ----------------------------
def encoder_forward_ref(ref_layers, cnn_features):
    """True fp32 PyTorch nn.LSTM semantics (gate order i,f,g,o, separate biases)."""
    T, B, F = cnn_features.shape
    L = len(ref_layers)
    H = ref_layers[0][1].shape[0]
    h = [jnp.zeros((B, H), jnp.float32) for _ in range(L)]
    c = [jnp.zeros((B, H), jnp.float32) for _ in range(L)]
    for t in range(T):
        x = cnn_features[t]
        for l in range(L):
            w_ih_t, w_hh_t, b_ih, b_hh = ref_layers[l]
            gates = x @ w_ih_t + h[l] @ w_hh_t + b_ih + b_hh
            i, f, g, o = jnp.split(gates, 4, axis=-1)
            i = jax.nn.sigmoid(i)
            f = jax.nn.sigmoid(f)
            g = jnp.tanh(g)
            o = jax.nn.sigmoid(o)
            c[l] = f * c[l] + i * g
            h[l] = o * jnp.tanh(c[l])
            x = h[l]
    return jnp.stack(h), jnp.stack(c)


# ------------------------------- parameter init --------------------------------
def init_encoder_params(key, input_dim, hidden_dim, n_layers):
    """PyTorch-style uniform(-1/sqrt(H), 1/sqrt(H)) LSTM init.

    Returns:
      kernel_params: bf16 weights transposed to [in, 4H] with gate columns
        reordered (i,f,g,o) -> (i,f,o,g), biases pre-summed (b_ih+b_hh) in f32.
      ref_layers: raw f32 weights in PyTorch layout for the reference.
    """
    H = hidden_dim
    bound = 1.0 / float(H) ** 0.5
    keys = jax.random.split(key, 4 * n_layers)

    def reorder(w):  # last-dim gate columns: (i, f, g, o) -> (i, f, o, g)
        return jnp.concatenate(
            [w[..., :2 * H], w[..., 3 * H:], w[..., 2 * H:3 * H]], axis=-1)

    ref_layers = []
    w_hh_k, w_ih_k, b_k = [], [], []
    w_ih0_k, b0_k = None, None
    for l in range(n_layers):
        in_dim = input_dim if l == 0 else H
        k0, k1, k2, k3 = keys[4 * l: 4 * l + 4]
        w_ih_t = jax.random.uniform(k0, (in_dim, 4 * H), jnp.float32, -bound, bound)
        w_hh_t = jax.random.uniform(k1, (H, 4 * H), jnp.float32, -bound, bound)
        b_ih = jax.random.uniform(k2, (4 * H,), jnp.float32, -bound, bound)
        b_hh = jax.random.uniform(k3, (4 * H,), jnp.float32, -bound, bound)
        ref_layers.append((w_ih_t, w_hh_t, b_ih, b_hh))

        b_sum = reorder((b_ih + b_hh).reshape(1, 4 * H))
        if l == 0:
            w_ih0_k = reorder(w_ih_t).astype(jnp.bfloat16)
            b0_k = b_sum
        else:
            w_ih_k.append(reorder(w_ih_t).astype(jnp.bfloat16))
            b_k.append(b_sum)
        w_hh_k.append(reorder(w_hh_t).astype(jnp.bfloat16))

    kernel_params = {"w_ih0": w_ih0_k, "b0": b0_k,
                     "w_hh": w_hh_k, "w_ih": w_ih_k, "b": b_k}
    return kernel_params, ref_layers


if __name__ == "__main__":
    IN_FEATURES = 1024   # per spec: nn.LSTM(1024, hidden_dim, n_layers, ...)
    HIDDEN_DIM = 64
    N_LAYERS = 2
    SEQ_LEN = 6
    BATCH = 8            # multiple of 8 sublanes

    root = jax.random.PRNGKey(0)
    k_params, k_feat = jax.random.split(root)

    kernel_params, ref_layers = init_encoder_params(
        k_params, IN_FEATURES, HIDDEN_DIM, N_LAYERS)

    # TODO(synk): Inception3D per-frame CNN is not defined in the spec; its
    # [T, B, 1024] feature outputs are generated here as the kernel input.
    cnn_features = 0.1 * jax.random.normal(
        k_feat, (SEQ_LEN, BATCH, IN_FEATURES), jnp.float32)

    hidden, cell = encoder_forward(kernel_params, cnn_features)
    jax.block_until_ready((hidden, cell))

    h_ref, c_ref = encoder_forward_ref(ref_layers, cnn_features)
    assert hidden.shape == (N_LAYERS, BATCH, HIDDEN_DIM)
    assert cell.shape == (N_LAYERS, BATCH, HIDDEN_DIM)
    # Tolerance covers bf16 weight/feature quantization vs. the true-f32
    # PyTorch-semantics reference (addresses prior correctness concern).
    assert jnp.allclose(hidden, h_ref, atol=2e-2, rtol=2e-2)
    assert jnp.allclose(cell, c_ref, atol=2e-2, rtol=2e-2)

    print("KERNEL_OK")
</pallas_src>

<mosaic_0001>
module attributes {stable_mosaic.version = 11 : i64} {
  func.func @kernel(%arg0: i32, %arg1: memref<6x8x1024xbf16, #tpu.memory_space<vmem>>, %arg2: memref<1024x256xbf16, #tpu.memory_space<vmem>>, %arg3: memref<1x256xf32, #tpu.memory_space<vmem>>, %arg4: memref<64x256xbf16, #tpu.memory_space<vmem>>, %arg5: memref<64x256xbf16, #tpu.memory_space<vmem>>, %arg6: memref<64x256xbf16, #tpu.memory_space<vmem>>, %arg7: memref<1x256xf32, #tpu.memory_space<vmem>>, %arg8: memref<2x8x64xf32, #tpu.memory_space<vmem>>, %arg9: memref<2x8x64xf32, #tpu.memory_space<vmem>>, %arg10: memref<6x8x256xf32, #tpu.memory_space<vmem>>, %arg11: memref<2x8x64xf32, #tpu.memory_space<vmem>>, %arg12: memref<2x8x64xf32, #tpu.memory_space<vmem>>) attributes {dimension_semantics = [#tpu.dimension_semantics<arbitrary>], iteration_bounds = array<i64: 1>, scalar_prefetch = 0 : i64, scratch_operands = 3 : i64, tpu.core_type = #tpu.core_type<tc>, window_params = [{transform_indices = @transform_0, window_bounds = array<i64: 6, 8, 1024>}, {pipeline_mode = #tpu.pipeline_mode<synchronous>, transform_indices = @transform_1, window_bounds = array<i64: 1024, 256>}, {pipeline_mode = #tpu.pipeline_mode<synchronous>, transform_indices = @transform_2, window_bounds = array<i64: 1, 256>}, {pipeline_mode = #tpu.pipeline_mode<synchronous>, transform_indices = @transform_3, window_bounds = array<i64: 64, 256>}, {pipeline_mode = #tpu.pipeline_mode<synchronous>, transform_indices = @transform_4, window_bounds = array<i64: 64, 256>}, {pipeline_mode = #tpu.pipeline_mode<synchronous>, transform_indices = @transform_5, window_bounds = array<i64: 64, 256>}, {pipeline_mode = #tpu.pipeline_mode<synchronous>, transform_indices = @transform_6, window_bounds = array<i64: 1, 256>}, {pipeline_mode = #tpu.pipeline_mode<synchronous>, transform_indices = @transform_7, window_bounds = array<i64: 2, 8, 64>}, {pipeline_mode = #tpu.pipeline_mode<synchronous>, transform_indices = @transform_8, window_bounds = array<i64: 2, 8, 64>}]} {
    %c0_i32 = arith.constant 0 : i32
    %0 = arith.cmpi eq, %arg0, %c0_i32 : i32
    %1 = arith.extui %0 : i1 to i32
    %c0_i32_0 = arith.constant 0 : i32
    %2 = arith.cmpi ne, %1, %c0_i32_0 : i32
    scf.if %2 {
      %cst_127 = arith.constant 0.000000e+00 : f32
      %323 = vector.broadcast %cst_127 : f32 to vector<2x8x64xf32>
      %c0_128 = arith.constant 0 : index
      %c0_129 = arith.constant 0 : index
      %c0_130 = arith.constant 0 : index
      %324 = vector.load %arg11[%c0_128, %c0_129, %c0_130] : memref<2x8x64xf32, #tpu.memory_space<vmem>>, vector<2x8x64xf32>
      tpu.vector_store %arg11[%c0_128, %c0_129, %c0_130], %323 {strides = array<i32>} : memref<2x8x64xf32, #tpu.memory_space<vmem>>, vector<2x8x64xf32>,
      %cst_131 = arith.constant 0.000000e+00 : f32
      %325 = vector.broadcast %cst_131 : f32 to vector<2x8x64xf32>
      %c0_132 = arith.constant 0 : index
      %c0_133 = arith.constant 0 : index
      %c0_134 = arith.constant 0 : index
      %326 = vector.load %arg12[%c0_132, %c0_133, %c0_134] : memref<2x8x64xf32, #tpu.memory_space<vmem>>, vector<2x8x64xf32>
      tpu.vector_store %arg12[%c0_132, %c0_133, %c0_134], %325 {strides = array<i32>} : memref<2x8x64xf32, #tpu.memory_space<vmem>>, vector<2x8x64xf32>,
    } else {
    }
    %c0 = arith.constant 0 : index
    %c0_1 = arith.constant 0 : index
    %c0_2 = arith.constant 0 : index
    %3 = vector.load %arg1[%c0, %c0_1, %c0_2] : memref<6x8x1024xbf16, #tpu.memory_space<vmem>>, vector<6x8x1024xbf16>
    %4 = vector.shape_cast %3 : vector<6x8x1024xbf16> to vector<48x1024xbf16>
    %c0_3 = arith.constant 0 : index
    %c0_4 = arith.constant 0 : index
    %5 = vector.load %arg2[%c0_3, %c0_4] : memref<1024x256xbf16, #tpu.memory_space<vmem>>, vector<1024x256xbf16>
    %cst = arith.constant dense<0.000000e+00> : vector<48x256xf32>
    %6 = tpu.matmul %4, %5, %cst {dimension_numbers = #tpu.dot_dimension_numbers<[1], [0], [0], [1], [0, 0, 1, 1], [], []>} : vector<48x1024xbf16>, vector<1024x256xbf16>, vector<48x256xf32> -> vector<48x256xf32>
    %c0_5 = arith.constant 0 : index
    %c0_6 = arith.constant 0 : index
    %7 = vector.load %arg3[%c0_5, %c0_6] : memref<1x256xf32, #tpu.memory_space<vmem>>, vector<1x256xf32>
    %8 = vector.broadcast %7 : vector<1x256xf32> to vector<48x256xf32>
    %9 = arith.addf %6, %8 : vector<48x256xf32>
    %10 = vector.shape_cast %9 : vector<48x256xf32> to vector<6x8x256xf32>
    %c0_7 = arith.constant 0 : index
    %c0_8 = arith.constant 0 : index
    %c0_9 = arith.constant 0 : index
    %11 = vector.load %arg10[%c0_7, %c0_8, %c0_9] : memref<6x8x256xf32, #tpu.memory_space<vmem>>, vector<6x8x256xf32>
    tpu.vector_store %arg10[%c0_7, %c0_8, %c0_9], %10 {strides = array<i32>} : memref<6x8x256xf32, #tpu.memory_space<vmem>>, vector<6x8x256xf32>,
    %c0_10 = arith.constant 0 : index
    %c0_11 = arith.constant 0 : index
    %c0_12 = arith.constant 0 : index
    %12 = vector.load %arg11[%c0_10, %c0_11, %c0_12] : memref<2x8x64xf32, #tpu.memory_space<vmem>>, vector<1x8x64xf32>
    %13 = vector.shape_cast %12 : vector<1x8x64xf32> to vector<8x64xf32>
    %c1 = arith.constant 1 : index
    %c0_13 = arith.constant 0 : index
    %c0_14 = arith.constant 0 : index
    %14 = vector.load %arg11[%c1, %c0_13, %c0_14] : memref<2x8x64xf32, #tpu.memory_space<vmem>>, vector<1x8x64xf32>
    %15 = vector.shape_cast %14 : vector<1x8x64xf32> to vector<8x64xf32>
    %c0_15 = arith.constant 0 : index
    %c0_16 = arith.constant 0 : index
    %c0_17 = arith.constant 0 : index
    %16 = vector.load %arg12[%c0_15, %c0_16, %c0_17] : memref<2x8x64xf32, #tpu.memory_space<vmem>>, vector<1x8x64xf32>
    %17 = vector.shape_cast %16 : vector<1x8x64xf32> to vector<8x64xf32>
    %c1_18 = arith.constant 1 : index
    %c0_19 = arith.constant 0 : index
    %c0_20 = arith.constant 0 : index
    %18 = vector.load %arg12[%c1_18, %c0_19, %c0_20] : memref<2x8x64xf32, #tpu.memory_space<vmem>>, vector<1x8x64xf32>
    %19 = vector.shape_cast %18 : vector<1x8x64xf32> to vector<8x64xf32>
    %c0_21 = arith.constant 0 : index
    %c0_22 = arith.constant 0 : index
    %c0_23 = arith.constant 0 : index
    %20 = vector.load %arg10[%c0_21, %c0_22, %c0_23] : memref<6x8x256xf32, #tpu.memory_space<vmem>>, vector<1x8x256xf32>
    %21 = vector.shape_cast %20 : vector<1x8x256xf32> to vector<8x256xf32>
    %22 = arith.truncf %13 : vector<8x64xf32> to vector<8x64xbf16>
    %c0_24 = arith.constant 0 : index
    %c0_25 = arith.constant 0 : index
    %23 = vector.load %arg4[%c0_24, %c0_25] : memref<64x256xbf16, #tpu.memory_space<vmem>>, vector<64x256xbf16>
    %cst_26 = arith.constant dense<0.000000e+00> : vector<8x256xf32>
    %24 = tpu.matmul %22, %23, %cst_26 {dimension_numbers = #tpu.dot_dimension_numbers<[1], [0], [0], [1], [0, 0, 1, 1], [], []>} : vector<8x64xbf16>, vector<64x256xbf16>, vector<8x256xf32> -> vector<8x256xf32>
    %25 = arith.addf %21, %24 : vector<8x256xf32>
    %26 = vector.extract_strided_slice %25 {offsets = [0, 0], sizes = [8, 192], strides = [1, 1]} : vector<8x256xf32> to vector<8x192xf32>
    %27 = arith.negf %26 : vector<8x192xf32>
    %28 = math.exp %27 : vector<8x192xf32>
    %cst_27 = arith.constant 1.000000e+00 : f32
    %29 = vector.broadcast %cst_27 : f32 to vector<8x192xf32>
    %30 = arith.addf %29, %28 : vector<8x192xf32>
    %31 = arith.divf %29, %30 : vector<8x192xf32>
    %32 = vector.extract_strided_slice %25 {offsets = [0, 192], sizes = [8, 64], strides = [1, 1]} : vector<8x256xf32> to vector<8x64xf32>
    %33 = math.tanh %32 : vector<8x64xf32>
    %34 = vector.extract_strided_slice %31 {offsets = [0, 0], sizes = [8, 64], strides = [1, 1]} : vector<8x192xf32> to vector<8x64xf32>
    %35 = vector.extract_strided_slice %31 {offsets = [0, 64], sizes = [8, 64], strides = [1, 1]} : vector<8x192xf32> to vector<8x64xf32>
    %36 = vector.extract_strided_slice %31 {offsets = [0, 128], sizes = [8, 64], strides = [1, 1]} : vector<8x192xf32> to vector<8x64xf32>
    %37 = arith.mulf %35, %17 : vector<8x64xf32>
    %38 = arith.mulf %34, %33 : vector<8x64xf32>
    %39 = arith.addf %37, %38 : vector<8x64xf32>
    %40 = math.tanh %39 : vector<8x64xf32>
    %41 = arith.mulf %36, %40 : vector<8x64xf32>
    %42 = arith.truncf %41 : vector<8x64xf32> to vector<8x64xbf16>
    %43 = arith.truncf %15 : vector<8x64xf32> to vector<8x64xbf16>
    %c0_28 = arith.constant 0 : index
    %c0_29 = arith.constant 0 : index
    %44 = vector.load %arg5[%c0_28, %c0_29] : memref<64x256xbf16, #tpu.memory_space<vmem>>, vector<64x256xbf16>
    %cst_30 = arith.constant dense<0.000000e+00> : vector<8x256xf32>
    %45 = tpu.matmul %43, %44, %cst_30 {dimension_numbers = #tpu.dot_dimension_numbers<[1], [0], [0], [1], [0, 0, 1, 1], [], []>} : vector<8x64xbf16>, vector<64x256xbf16>, vector<8x256xf32> -> vector<8x256xf32>
    %c0_31 = arith.constant 0 : index
    %c0_32 = arith.constant 0 : index
    %46 = vector.load %arg6[%c0_31, %c0_32] : memref<64x256xbf16, #tpu.memory_space<vmem>>, vector<64x256xbf16>
    %cst_33 = arith.constant dense<0.000000e+00> : vector<8x256xf32>
    %47 = tpu.matmul %42, %46, %cst_33 {dimension_numbers = #tpu.dot_dimension_numbers<[1], [0], [0], [1], [0, 0, 1, 1], [], []>} : vector<8x64xbf16>, vector<64x256xbf16>, vector<8x256xf32> -> vector<8x256xf32>
    %48 = arith.addf %47, %45 : vector<8x256xf32>
    %c0_34 = arith.constant 0 : index
    %c0_35 = arith.constant 0 : index
    %49 = vector.load %arg7[%c0_34, %c0_35] : memref<1x256xf32, #tpu.memory_space<vmem>>, vector<1x256xf32>
    %50 = vector.broadcast %49 : vector<1x256xf32> to vector<8x256xf32>
    %51 = arith.addf %48, %50 : vector<8x256xf32>
    %52 = vector.extract_strided_slice %51 {offsets = [0, 0], sizes = [8, 192], strides = [1, 1]} : vector<8x256xf32> to vector<8x192xf32>
    %53 = arith.negf %52 : vector<8x192xf32>
    %54 = math.exp %53 : vector<8x192xf32>
    %cst_36 = arith.constant 1.000000e+00 : f32
    %55 = vector.broadcast %cst_36 : f32 to vector<8x192xf32>
    %56 = arith.addf %55, %54 : vector<8x192xf32>
    %57 = arith.divf %55, %56 : vector<8x192xf32>
    %58 = vector.extract_strided_slice %51 {offsets = [0, 192], sizes = [8, 64], strides = [1, 1]} : vector<8x256xf32> to vector<8x64xf32>
    %59 = math.tanh %58 : vector<8x64xf32>
    %60 = vector.extract_strided_slice %57 {offsets = [0, 0], sizes = [8, 64], strides = [1, 1]} : vector<8x192xf32> to vector<8x64xf32>
    %61 = vector.extract_strided_slice %57 {offsets = [0, 64], sizes = [8, 64], strides = [1, 1]} : vector<8x192xf32> to vector<8x64xf32>
    %62 = vector.extract_strided_slice %57 {offsets = [0, 128], sizes = [8, 64], strides = [1, 1]} : vector<8x192xf32> to vector<8x64xf32>
    %63 = arith.mulf %61, %19 : vector<8x64xf32>
    %64 = arith.mulf %60, %59 : vector<8x64xf32>
    %65 = arith.addf %63, %64 : vector<8x64xf32>
    %66 = math.tanh %65 : vector<8x64xf32>
    %67 = arith.mulf %62, %66 : vector<8x64xf32>
    %c1_37 = arith.constant 1 : index
    %c0_38 = arith.constant 0 : index
    %c0_39 = arith.constant 0 : index
    %68 = vector.load %arg10[%c1_37, %c0_38, %c0_39] : memref<6x8x256xf32, #tpu.memory_space<vmem>>, vector<1x8x256xf32>
    %69 = vector.shape_cast %68 : vector<1x8x256xf32> to vector<8x256xf32>
    %70 = arith.truncf %41 : vector<8x64xf32> to vector<8x64xbf16>
    %c0_40 = arith.constant 0 : index
    %c0_41 = arith.constant 0 : index
    %71 = vector.load %arg4[%c0_40, %c0_41] : memref<64x256xbf16, #tpu.memory_space<vmem>>, vector<64x256xbf16>
    %cst_42 = arith.constant dense<0.000000e+00> : vector<8x256xf32>
    %72 = tpu.matmul %70, %71, %cst_42 {dimension_numbers = #tpu.dot_dimension_numbers<[1], [0], [0], [1], [0, 0, 1, 1], [], []>} : vector<8x64xbf16>, vector<64x256xbf16>, vector<8x256xf32> -> vector<8x256xf32>
    %73 = arith.addf %69, %72 : vector<8x256xf32>
    %74 = vector.extract_strided_slice %73 {offsets = [0, 0], sizes = [8, 192], strides = [1, 1]} : vector<8x256xf32> to vector<8x192xf32>
    %75 = arith.negf %74 : vector<8x192xf32>
    %76 = math.exp %75 : vector<8x192xf32>
    %cst_43 = arith.constant 1.000000e+00 : f32
    %77 = vector.broadcast %cst_43 : f32 to vector<8x192xf32>
    %78 = arith.addf %77, %76 : vector<8x192xf32>
    %79 = arith.divf %77, %78 : vector<8x192xf32>
    %80 = vector.extract_strided_slice %73 {offsets = [0, 192], sizes = [8, 64], strides = [1, 1]} : vector<8x256xf32> to vector<8x64xf32>
    %81 = math.tanh %80 : vector<8x64xf32>
    %82 = vector.extract_strided_slice %79 {offsets = [0, 0], sizes = [8, 64], strides = [1, 1]} : vector<8x192xf32> to vector<8x64xf32>
    %83 = vector.extract_strided_slice %79 {offsets = [0, 64], sizes = [8, 64], strides = [1, 1]} : vector<8x192xf32> to vector<8x64xf32>
    %84 = vector.extract_strided_slice %79 {offsets = [0, 128], sizes = [8, 64], strides = [1, 1]} : vector<8x192xf32> to vector<8x64xf32>
    %85 = arith.mulf %83, %39 : vector<8x64xf32>
    %86 = arith.mulf %82, %81 : vector<8x64xf32>
    %87 = arith.addf %85, %86 : vector<8x64xf32>
    %88 = math.tanh %87 : vector<8x64xf32>
    %89 = arith.mulf %84, %88 : vector<8x64xf32>
    %90 = arith.truncf %89 : vector<8x64xf32> to vector<8x64xbf16>
    %91 = arith.truncf %67 : vector<8x64xf32> to vector<8x64xbf16>
    %c0_44 = arith.constant 0 : index
    %c0_45 = arith.constant 0 : index
    %92 = vector.load %arg5[%c0_44, %c0_45] : memref<64x256xbf16, #tpu.memory_space<vmem>>, vector<64x256xbf16>
    %cst_46 = arith.constant dense<0.000000e+00> : vector<8x256xf32>
    %93 = tpu.matmul %91, %92, %cst_46 {dimension_numbers = #tpu.dot_dimension_numbers<[1], [0], [0], [1], [0, 0, 1, 1], [], []>} : vector<8x64xbf16>, vector<64x256xbf16>, vector<8x256xf32> -> vector<8x256xf32>
    %c0_47 = arith.constant 0 : index
    %c0_48 = arith.constant 0 : index
    %94 = vector.load %arg6[%c0_47, %c0_48] : memref<64x256xbf16, #tpu.memory_space<vmem>>, vector<64x256xbf16>
    %cst_49 = arith.constant dense<0.000000e+00> : vector<8x256xf32>
    %95 = tpu.matmul %90, %94, %cst_49 {dimension_numbers = #tpu.dot_dimension_numbers<[1], [0], [0], [1], [0, 0, 1, 1], [], []>} : vector<8x64xbf16>, vector<64x256xbf16>, vector<8x256xf32> -> vector<8x256xf32>
    %96 = arith.addf %95, %93 : vector<8x256xf32>
    %c0_50 = arith.constant 0 : index
    %c0_51 = arith.constant 0 : index
    %97 = vector.load %arg7[%c0_50, %c0_51] : memref<1x256xf32, #tpu.memory_space<vmem>>, vector<1x256xf32>
    %98 = vector.broadcast %97 : vector<1x256xf32> to vector<8x256xf32>
    %99 = arith.addf %96, %98 : vector<8x256xf32>
    %100 = vector.extract_strided_slice %99 {offsets = [0, 0], sizes = [8, 192], strides = [1, 1]} : vector<8x256xf32> to vector<8x192xf32>
    %101 = arith.negf %100 : vector<8x192xf32>
    %102 = math.exp %101 : vector<8x192xf32>
    %cst_52 = arith.constant 1.000000e+00 : f32
    %103 = vector.broadcast %cst_52 : f32 to vector<8x192xf32>
    %104 = arith.addf %103, %102 : vector<8x192xf32>
    %105 = arith.divf %103, %104 : vector<8x192xf32>
    %106 = vector.extract_strided_slice %99 {offsets = [0, 192], sizes = [8, 64], strides = [1, 1]} : vector<8x256xf32> to vector<8x64xf32>
    %107 = math.tanh %106 : vector<8x64xf32>
    %108 = vector.extract_strided_slice %105 {offsets = [0, 0], sizes = [8, 64], strides = [1, 1]} : vector<8x192xf32> to vector<8x64xf32>
    %109 = vector.extract_strided_slice %105 {offsets = [0, 64], sizes = [8, 64], strides = [1, 1]} : vector<8x192xf32> to vector<8x64xf32>
    %110 = vector.extract_strided_slice %105 {offsets = [0, 128], sizes = [8, 64], strides = [1, 1]} : vector<8x192xf32> to vector<8x64xf32>
    %111 = arith.mulf %109, %65 : vector<8x64xf32>
    %112 = arith.mulf %108, %107 : vector<8x64xf32>
    %113 = arith.addf %111, %112 : vector<8x64xf32>
    %114 = math.tanh %113 : vector<8x64xf32>
    %115 = arith.mulf %110, %114 : vector<8x64xf32>
    %c2 = arith.constant 2 : index
    %c0_53 = arith.constant 0 : index
    %c0_54 = arith.constant 0 : index
    %116 = vector.load %arg10[%c2, %c0_53, %c0_54] : memref<6x8x256xf32, #tpu.memory_space<vmem>>, vector<1x8x256xf32>
    %117 = vector.shape_cast %116 : vector<1x8x256xf32> to vector<8x256xf32>
    %118 = arith.truncf %89 : vector<8x64xf32> to vector<8x64xbf16>
    %c0_55 = arith.constant 0 : index
    %c0_56 = arith.constant 0 : index
    %119 = vector.load %arg4[%c0_55, %c0_56] : memref<64x256xbf16, #tpu.memory_space<vmem>>, vector<64x256xbf16>
    %cst_57 = arith.constant dense<0.000000e+00> : vector<8x256xf32>
    %120 = tpu.matmul %118, %119, %cst_57 {dimension_numbers = #tpu.dot_dimension_numbers<[1], [0], [0], [1], [0, 0, 1, 1], [], []>} : vector<8x64xbf16>, vector<64x256xbf16>, vector<8x256xf32> -> vector<8x256xf32>
    %121 = arith.addf %117, %120 : vector<8x256xf32>
    %122 = vector.extract_strided_slice %121 {offsets = [0, 0], sizes = [8, 192], strides = [1, 1]} : vector<8x256xf32> to vector<8x192xf32>
    %123 = arith.negf %122 : vector<8x192xf32>
    %124 = math.exp %123 : vector<8x192xf32>
    %cst_58 = arith.constant 1.000000e+00 : f32
    %125 = vector.broadcast %cst_58 : f32 to vector<8x192xf32>
    %126 = arith.addf %125, %124 : vector<8x192xf32>
    %127 = arith.divf %125, %126 : vector<8x192xf32>
    %128 = vector.extract_strided_slice %121 {offsets = [0, 192], sizes = [8, 64], strides = [1, 1]} : vector<8x256xf32> to vector<8x64xf32>
    %129 = math.tanh %128 : vector<8x64xf32>
    %130 = vector.extract_strided_slice %127 {offsets = [0, 0], sizes = [8, 64], strides = [1, 1]} : vector<8x192xf32> to vector<8x64xf32>
    %131 = vector.extract_strided_slice %127 {offsets = [0, 64], sizes = [8, 64], strides = [1, 1]} : vector<8x192xf32> to vector<8x64xf32>
    %132 = vector.extract_strided_slice %127 {offsets = [0, 128], sizes = [8, 64], strides = [1, 1]} : vector<8x192xf32> to vector<8x64xf32>
    %133 = arith.mulf %131, %87 : vector<8x64xf32>
    %134 = arith.mulf %130, %129 : vector<8x64xf32>
    %135 = arith.addf %133, %134 : vector<8x64xf32>
    %136 = math.tanh %135 : vector<8x64xf32>
    %137 = arith.mulf %132, %136 : vector<8x64xf32>
    %138 = arith.truncf %137 : vector<8x64xf32> to vector<8x64xbf16>
    %139 = arith.truncf %115 : vector<8x64xf32> to vector<8x64xbf16>
    %c0_59 = arith.constant 0 : index
    %c0_60 = arith.constant 0 : index
    %140 = vector.load %arg5[%c0_59, %c0_60] : memref<64x256xbf16, #tpu.memory_space<vmem>>, vector<64x256xbf16>
    %cst_61 = arith.constant dense<0.000000e+00> : vector<8x256xf32>
    %141 = tpu.matmul %139, %140, %cst_61 {dimension_numbers = #tpu.dot_dimension_numbers<[1], [0], [0], [1], [0, 0, 1, 1], [], []>} : vector<8x64xbf16>, vector<64x256xbf16>, vector<8x256xf32> -> vector<8x256xf32>
    %c0_62 = arith.constant 0 : index
    %c0_63 = arith.constant 0 : index
    %142 = vector.load %arg6[%c0_62, %c0_63] : memref<64x256xbf16, #tpu.memory_space<vmem>>, vector<64x256xbf16>
    %cst_64 = arith.constant dense<0.000000e+00> : vector<8x256xf32>
    %143 = tpu.matmul %138, %142, %cst_64 {dimension_numbers = #tpu.dot_dimension_numbers<[1], [0], [0], [1], [0, 0, 1, 1], [], []>} : vector<8x64xbf16>, vector<64x256xbf16>, vector<8x256xf32> -> vector<8x256xf32>
    %144 = arith.addf %143, %141 : vector<8x256xf32>
    %c0_65 = arith.constant 0 : index
    %c0_66 = arith.constant 0 : index
    %145 = vector.load %arg7[%c0_65, %c0_66] : memref<1x256xf32, #tpu.memory_space<vmem>>, vector<1x256xf32>
    %146 = vector.broadcast %145 : vector<1x256xf32> to vector<8x256xf32>
    %147 = arith.addf %144, %146 : vector<8x256xf32>
    %148 = vector.extract_strided_slice %147 {offsets = [0, 0], sizes = [8, 192], strides = [1, 1]} : vector<8x256xf32> to vector<8x192xf32>
    %149 = arith.negf %148 : vector<8x192xf32>
    %150 = math.exp %149 : vector<8x192xf32>
    %cst_67 = arith.constant 1.000000e+00 : f32
    %151 = vector.broadcast %cst_67 : f32 to vector<8x192xf32>
    %152 = arith.addf %151, %150 : vector<8x192xf32>
    %153 = arith.divf %151, %152 : vector<8x192xf32>
    %154 = vector.extract_strided_slice %147 {offsets = [0, 192], sizes = [8, 64], strides = [1, 1]} : vector<8x256xf32> to vector<8x64xf32>
    %155 = math.tanh %154 : vector<8x64xf32>
    %156 = vector.extract_strided_slice %153 {offsets = [0, 0], sizes = [8, 64], strides = [1, 1]} : vector<8x192xf32> to vector<8x64xf32>
    %157 = vector.extract_strided_slice %153 {offsets = [0, 64], sizes = [8, 64], strides = [1, 1]} : vector<8x192xf32> to vector<8x64xf32>
    %158 = vector.extract_strided_slice %153 {offsets = [0, 128], sizes = [8, 64], strides = [1, 1]} : vector<8x192xf32> to vector<8x64xf32>
    %159 = arith.mulf %157, %113 : vector<8x64xf32>
    %160 = arith.mulf %156, %155 : vector<8x64xf32>
    %161 = arith.addf %159, %160 : vector<8x64xf32>
    %162 = math.tanh %161 : vector<8x64xf32>
    %163 = arith.mulf %158, %162 : vector<8x64xf32>
    %c3 = arith.constant 3 : index
    %c0_68 = arith.constant 0 : index
    %c0_69 = arith.constant 0 : index
    %164 = vector.load %arg10[%c3, %c0_68, %c0_69] : memref<6x8x256xf32, #tpu.memory_space<vmem>>, vector<1x8x256xf32>
    %165 = vector.shape_cast %164 : vector<1x8x256xf32> to vector<8x256xf32>
    %166 = arith.truncf %137 : vector<8x64xf32> to vector<8x64xbf16>
    %c0_70 = arith.constant 0 : index
    %c0_71 = arith.constant 0 : index
    %167 = vector.load %arg4[%c0_70, %c0_71] : memref<64x256xbf16, #tpu.memory_space<vmem>>, vector<64x256xbf16>
    %cst_72 = arith.constant dense<0.000000e+00> : vector<8x256xf32>
    %168 = tpu.matmul %166, %167, %cst_72 {dimension_numbers = #tpu.dot_dimension_numbers<[1], [0], [0], [1], [0, 0, 1, 1], [], []>} : vector<8x64xbf16>, vector<64x256xbf16>, vector<8x256xf32> -> vector<8x256xf32>
    %169 = arith.addf %165, %168 : vector<8x256xf32>
    %170 = vector.extract_strided_slice %169 {offsets = [0, 0], sizes = [8, 192], strides = [1, 1]} : vector<8x256xf32> to vector<8x192xf32>
    %171 = arith.negf %170 : vector<8x192xf32>
    %172 = math.exp %171 : vector<8x192xf32>
    %cst_73 = arith.constant 1.000000e+00 : f32
    %173 = vector.broadcast %cst_73 : f32 to vector<8x192xf32>
    %174 = arith.addf %173, %172 : vector<8x192xf32>
    %175 = arith.divf %173, %174 : vector<8x192xf32>
    %176 = vector.extract_strided_slice %169 {offsets = [0, 192], sizes = [8, 64], strides = [1, 1]} : vector<8x256xf32> to vector<8x64xf32>
    %177 = math.tanh %176 : vector<8x64xf32>
    %178 = vector.extract_strided_slice %175 {offsets = [0, 0], sizes = [8, 64], strides = [1, 1]} : vector<8x192xf32> to vector<8x64xf32>
    %179 = vector.extract_strided_slice %175 {offsets = [0, 64], sizes = [8, 64], strides = [1, 1]} : vector<8x192xf32> to vector<8x64xf32>
    %180 = vector.extract_strided_slice %175 {offsets = [0, 128], sizes = [8, 64], strides = [1, 1]} : vector<8x192xf32> to vector<8x64xf32>
    %181 = arith.mulf %179, %135 : vector<8x64xf32>
    %182 = arith.mulf %178, %177 : vector<8x64xf32>
    %183 = arith.addf %181, %182 : vector<8x64xf32>
    %184 = math.tanh %183 : vector<8x64xf32>
    %185 = arith.mulf %180, %184 : vector<8x64xf32>
    %186 = arith.truncf %185 : vector<8x64xf32> to vector<8x64xbf16>
    %187 = arith.truncf %163 : vector<8x64xf32> to vector<8x64xbf16>
    %c0_74 = arith.constant 0 : index
    %c0_75 = arith.constant 0 : index
    %188 = vector.load %arg5[%c0_74, %c0_75] : memref<64x256xbf16, #tpu.memory_space<vmem>>, vector<64x256xbf16>
    %cst_76 = arith.constant dense<0.000000e+00> : vector<8x256xf32>
    %189 = tpu.matmul %187, %188, %cst_76 {dimension_numbers = #tpu.dot_dimension_numbers<[1], [0], [0], [1], [0, 0, 1, 1], [], []>} : vector<8x64xbf16>, vector<64x256xbf16>, vector<8x256xf32> -> vector<8x256xf32>
    %c0_77 = arith.constant 0 : index
    %c0_78 = arith.constant 0 : index
    %190 = vector.load %arg6[%c0_77, %c0_78] : memref<64x256xbf16, #tpu.memory_space<vmem>>, vector<64x256xbf16>
    %cst_79 = arith.constant dense<0.000000e+00> : vector<8x256xf32>
    %191 = tpu.matmul %186, %190, %cst_79 {dimension_numbers = #tpu.dot_dimension_numbers<[1], [0], [0], [1], [0, 0, 1, 1], [], []>} : vector<8x64xbf16>, vector<64x256xbf16>, vector<8x256xf32> -> vector<8x256xf32>
    %192 = arith.addf %191, %189 : vector<8x256xf32>
    %c0_80 = arith.constant 0 : index
    %c0_81 = arith.constant 0 : index
    %193 = vector.load %arg7[%c0_80, %c0_81] : memref<1x256xf32, #tpu.memory_space<vmem>>, vector<1x256xf32>
    %194 = vector.broadcast %193 : vector<1x256xf32> to vector<8x256xf32>
    %195 = arith.addf %192, %194 : vector<8x256xf32>
    %196 = vector.extract_strided_slice %195 {offsets = [0, 0], sizes = [8, 192], strides = [1, 1]} : vector<8x256xf32> to vector<8x192xf32>
    %197 = arith.negf %196 : vector<8x192xf32>
    %198 = math.exp %197 : vector<8x192xf32>
    %cst_82 = arith.constant 1.000000e+00 : f32
    %199 = vector.broadcast %cst_82 : f32 to vector<8x192xf32>
    %200 = arith.addf %199, %198 : vector<8x192xf32>
    %201 = arith.divf %199, %200 : vector<8x192xf32>
    %202 = vector.extract_strided_slice %195 {offsets = [0, 192], sizes = [8, 64], strides = [1, 1]} : vector<8x256xf32> to vector<8x64xf32>
    %203 = math.tanh %202 : vector<8x64xf32>
    %204 = vector.extract_strided_slice %201 {offsets = [0, 0], sizes = [8, 64], strides = [1, 1]} : vector<8x192xf32> to vector<8x64xf32>
    %205 = vector.extract_strided_slice %201 {offsets = [0, 64], sizes = [8, 64], strides = [1, 1]} : vector<8x192xf32> to vector<8x64xf32>
    %206 = vector.extract_strided_slice %201 {offsets = [0, 128], sizes = [8, 64], strides = [1, 1]} : vector<8x192xf32> to vector<8x64xf32>
    %207 = arith.mulf %205, %161 : vector<8x64xf32>
    %208 = arith.mulf %204, %203 : vector<8x64xf32>
    %209 = arith.addf %207, %208 : vector<8x64xf32>
    %210 = math.tanh %209 : vector<8x64xf32>
    %211 = arith.mulf %206, %210 : vector<8x64xf32>
    %c4 = arith.constant 4 : index
    %c0_83 = arith.constant 0 : index
    %c0_84 = arith.constant 0 : index
    %212 = vector.load %arg10[%c4, %c0_83, %c0_84] : memref<6x8x256xf32, #tpu.memory_space<vmem>>, vector<1x8x256xf32>
    %213 = vector.shape_cast %212 : vector<1x8x256xf32> to vector<8x256xf32>
    %214 = arith.truncf %185 : vector<8x64xf32> to vector<8x64xbf16>
    %c0_85 = arith.constant 0 : index
    %c0_86 = arith.constant 0 : index
    %215 = vector.load %arg4[%c0_85, %c0_86] : memref<64x256xbf16, #tpu.memory_space<vmem>>, vector<64x256xbf16>
    %cst_87 = arith.constant dense<0.000000e+00> : vector<8x256xf32>
    %216 = tpu.matmul %214, %215, %cst_87 {dimension_numbers = #tpu.dot_dimension_numbers<[1], [0], [0], [1], [0, 0, 1, 1], [], []>} : vector<8x64xbf16>, vector<64x256xbf16>, vector<8x256xf32> -> vector<8x256xf32>
    %217 = arith.addf %213, %216 : vector<8x256xf32>
    %218 = vector.extract_strided_slice %217 {offsets = [0, 0], sizes = [8, 192], strides = [1, 1]} : vector<8x256xf32> to vector<8x192xf32>
    %219 = arith.negf %218 : vector<8x192xf32>
    %220 = math.exp %219 : vector<8x192xf32>
    %cst_88 = arith.constant 1.000000e+00 : f32
    %221 = vector.broadcast %cst_88 : f32 to vector<8x192xf32>
    %222 = arith.addf %221, %220 : vector<8x192xf32>
    %223 = arith.divf %221, %222 : vector<8x192xf32>
    %224 = vector.extract_strided_slice %217 {offsets = [0, 192], sizes = [8, 64], strides = [1, 1]} : vector<8x256xf32> to vector<8x64xf32>
    %225 = math.tanh %224 : vector<8x64xf32>
    %226 = vector.extract_strided_slice %223 {offsets = [0, 0], sizes = [8, 64], strides = [1, 1]} : vector<8x192xf32> to vector<8x64xf32>
    %227 = vector.extract_strided_slice %223 {offsets = [0, 64], sizes = [8, 64], strides = [1, 1]} : vector<8x192xf32> to vector<8x64xf32>
    %228 = vector.extract_strided_slice %223 {offsets = [0, 128], sizes = [8, 64], strides = [1, 1]} : vector<8x192xf32> to vector<8x64xf32>
    %229 = arith.mulf %227, %183 : vector<8x64xf32>
    %230 = arith.mulf %226, %225 : vector<8x64xf32>
    %231 = arith.addf %229, %230 : vector<8x64xf32>
    %232 = math.tanh %231 : vector<8x64xf32>
    %233 = arith.mulf %228, %232 : vector<8x64xf32>
    %234 = arith.truncf %233 : vector<8x64xf32> to vector<8x64xbf16>
    %235 = arith.truncf %211 : vector<8x64xf32> to vector<8x64xbf16>
    %c0_89 = arith.constant 0 : index
    %c0_90 = arith.constant 0 : index
    %236 = vector.load %arg5[%c0_89, %c0_90] : memref<64x256xbf16, #tpu.memory_space<vmem>>, vector<64x256xbf16>
    %cst_91 = arith.constant dense<0.000000e+00> : vector<8x256xf32>
    %237 = tpu.matmul %235, %236, %cst_91 {dimension_numbers = #tpu.dot_dimension_numbers<[1], [0], [0], [1], [0, 0, 1, 1], [], []>} : vector<8x64xbf16>, vector<64x256xbf16>, vector<8x256xf32> -> vector<8x256xf32>
    %c0_92 = arith.constant 0 : index
    %c0_93 = arith.constant 0 : index
    %238 = vector.load %arg6[%c0_92, %c0_93] : memref<64x256xbf16, #tpu.memory_space<vmem>>, vector<64x256xbf16>
    %cst_94 = arith.constant dense<0.000000e+00> : vector<8x256xf32>
    %239 = tpu.matmul %234, %238, %cst_94 {dimension_numbers = #tpu.dot_dimension_numbers<[1], [0], [0], [1], [0, 0, 1, 1], [], []>} : vector<8x64xbf16>, vector<64x256xbf16>, vector<8x256xf32> -> vector<8x256xf32>
    %240 = arith.addf %239, %237 : vector<8x256xf32>
    %c0_95 = arith.constant 0 : index
    %c0_96 = arith.constant 0 : index
    %241 = vector.load %arg7[%c0_95, %c0_96] : memref<1x256xf32, #tpu.memory_space<vmem>>, vector<1x256xf32>
    %242 = vector.broadcast %241 : vector<1x256xf32> to vector<8x256xf32>
    %243 = arith.addf %240, %242 : vector<8x256xf32>
    %244 = vector.extract_strided_slice %243 {offsets = [0, 0], sizes = [8, 192], strides = [1, 1]} : vector<8x256xf32> to vector<8x192xf32>
    %245 = arith.negf %244 : vector<8x192xf32>
    %246 = math.exp %245 : vector<8x192xf32>
    %cst_97 = arith.constant 1.000000e+00 : f32
    %247 = vector.broadcast %cst_97 : f32 to vector<8x192xf32>
    %248 = arith.addf %247, %246 : vector<8x192xf32>
    %249 = arith.divf %247, %248 : vector<8x192xf32>
    %250 = vector.extract_strided_slice %243 {offsets = [0, 192], sizes = [8, 64], strides = [1, 1]} : vector<8x256xf32> to vector<8x64xf32>
    %251 = math.tanh %250 : vector<8x64xf32>
    %252 = vector.extract_strided_slice %249 {offsets = [0, 0], sizes = [8, 64], strides = [1, 1]} : vector<8x192xf32> to vector<8x64xf32>
    %253 = vector.extract_strided_slice %249 {offsets = [0, 64], sizes = [8, 64], strides = [1, 1]} : vector<8x192xf32> to vector<8x64xf32>
    %254 = vector.extract_strided_slice %249 {offsets = [0, 128], sizes = [8, 64], strides = [1, 1]} : vector<8x192xf32> to vector<8x64xf32>
    %255 = arith.mulf %253, %209 : vector<8x64xf32>
    %256 = arith.mulf %252, %251 : vector<8x64xf32>
    %257 = arith.addf %255, %256 : vector<8x64xf32>
    %258 = math.tanh %257 : vector<8x64xf32>
    %259 = arith.mulf %254, %258 : vector<8x64xf32>
    %c5 = arith.constant 5 : index
    %c0_98 = arith.constant 0 : index
    %c0_99 = arith.constant 0 : index
    %260 = vector.load %arg10[%c5, %c0_98, %c0_99] : memref<6x8x256xf32, #tpu.memory_space<vmem>>, vector<1x8x256xf32>
    %261 = vector.shape_cast %260 : vector<1x8x256xf32> to vector<8x256xf32>
    %262 = arith.truncf %233 : vector<8x64xf32> to vector<8x64xbf16>
    %c0_100 = arith.constant 0 : index
    %c0_101 = arith.constant 0 : index
    %263 = vector.load %arg4[%c0_100, %c0_101] : memref<64x256xbf16, #tpu.memory_space<vmem>>, vector<64x256xbf16>
    %cst_102 = arith.constant dense<0.000000e+00> : vector<8x256xf32>
    %264 = tpu.matmul %262, %263, %cst_102 {dimension_numbers = #tpu.dot_dimension_numbers<[1], [0], [0], [1], [0, 0, 1, 1], [], []>} : vector<8x64xbf16>, vector<64x256xbf16>, vector<8x256xf32> -> vector<8x256xf32>
    %265 = arith.addf %261, %264 : vector<8x256xf32>
    %266 = vector.extract_strided_slice %265 {offsets = [0, 0], sizes = [8, 192], strides = [1, 1]} : vector<8x256xf32> to vector<8x192xf32>
    %267 = arith.negf %266 : vector<8x192xf32>
    %268 = math.exp %267 : vector<8x192xf32>
    %cst_103 = arith.constant 1.000000e+00 : f32
    %269 = vector.broadcast %cst_103 : f32 to vector<8x192xf32>
    %270 = arith.addf %269, %268 : vector<8x192xf32>
    %271 = arith.divf %269, %270 : vector<8x192xf32>
    %272 = vector.extract_strided_slice %265 {offsets = [0, 192], sizes = [8, 64], strides = [1, 1]} : vector<8x256xf32> to vector<8x64xf32>
    %273 = math.tanh %272 : vector<8x64xf32>
    %274 = vector.extract_strided_slice %271 {offsets = [0, 0], sizes = [8, 64], strides = [1, 1]} : vector<8x192xf32> to vector<8x64xf32>
    %275 = vector.extract_strided_slice %271 {offsets = [0, 64], sizes = [8, 64], strides = [1, 1]} : vector<8x192xf32> to vector<8x64xf32>
    %276 = vector.extract_strided_slice %271 {offsets = [0, 128], sizes = [8, 64], strides = [1, 1]} : vector<8x192xf32> to vector<8x64xf32>
    %277 = arith.mulf %275, %231 : vector<8x64xf32>
    %278 = arith.mulf %274, %273 : vector<8x64xf32>
    %279 = arith.addf %277, %278 : vector<8x64xf32>
    %280 = math.tanh %279 : vector<8x64xf32>
    %281 = arith.mulf %276, %280 : vector<8x64xf32>
    %282 = arith.truncf %281 : vector<8x64xf32> to vector<8x64xbf16>
    %283 = arith.truncf %259 : vector<8x64xf32> to vector<8x64xbf16>
    %c0_104 = arith.constant 0 : index
    %c0_105 = arith.constant 0 : index
    %284 = vector.load %arg5[%c0_104, %c0_105] : memref<64x256xbf16, #tpu.memory_space<vmem>>, vector<64x256xbf16>
    %cst_106 = arith.constant dense<0.000000e+00> : vector<8x256xf32>
    %285 = tpu.matmul %283, %284, %cst_106 {dimension_numbers = #tpu.dot_dimension_numbers<[1], [0], [0], [1], [0, 0, 1, 1], [], []>} : vector<8x64xbf16>, vector<64x256xbf16>, vector<8x256xf32> -> vector<8x256xf32>
    %c0_107 = arith.constant 0 : index
    %c0_108 = arith.constant 0 : index
    %286 = vector.load %arg6[%c0_107, %c0_108] : memref<64x256xbf16, #tpu.memory_space<vmem>>, vector<64x256xbf16>
    %cst_109 = arith.constant dense<0.000000e+00> : vector<8x256xf32>
    %287 = tpu.matmul %282, %286, %cst_109 {dimension_numbers = #tpu.dot_dimension_numbers<[1], [0], [0], [1], [0, 0, 1, 1], [], []>} : vector<8x64xbf16>, vector<64x256xbf16>, vector<8x256xf32> -> vector<8x256xf32>
    %288 = arith.addf %287, %285 : vector<8x256xf32>
    %c0_110 = arith.constant 0 : index
    %c0_111 = arith.constant 0 : index
    %289 = vector.load %arg7[%c0_110, %c0_111] : memref<1x256xf32, #tpu.memory_space<vmem>>, vector<1x256xf32>
    %290 = vector.broadcast %289 : vector<1x256xf32> to vector<8x256xf32>
    %291 = arith.addf %288, %290 : vector<8x256xf32>
    %292 = vector.extract_strided_slice %291 {offsets = [0, 0], sizes = [8, 192], strides = [1, 1]} : vector<8x256xf32> to vector<8x192xf32>
    %293 = arith.negf %292 : vector<8x192xf32>
    %294 = math.exp %293 : vector<8x192xf32>
    %cst_112 = arith.constant 1.000000e+00 : f32
    %295 = vector.broadcast %cst_112 : f32 to vector<8x192xf32>
    %296 = arith.addf %295, %294 : vector<8x192xf32>
    %297 = arith.divf %295, %296 : vector<8x192xf32>
    %298 = vector.extract_strided_slice %291 {offsets = [0, 192], sizes = [8, 64], strides = [1, 1]} : vector<8x256xf32> to vector<8x64xf32>
    %299 = math.tanh %298 : vector<8x64xf32>
    %300 = vector.extract_strided_slice %297 {offsets = [0, 0], sizes = [8, 64], strides = [1, 1]} : vector<8x192xf32> to vector<8x64xf32>
    %301 = vector.extract_strided_slice %297 {offsets = [0, 64], sizes = [8, 64], strides = [1, 1]} : vector<8x192xf32> to vector<8x64xf32>
    %302 = vector.extract_strided_slice %297 {offsets = [0, 128], sizes = [8, 64], strides = [1, 1]} : vector<8x192xf32> to vector<8x64xf32>
    %303 = arith.mulf %301, %257 : vector<8x64xf32>
    %304 = arith.mulf %300, %299 : vector<8x64xf32>
    %305 = arith.addf %303, %304 : vector<8x64xf32>
    %306 = math.tanh %305 : vector<8x64xf32>
    %307 = arith.mulf %302, %306 : vector<8x64xf32>
    %c0_113 = arith.constant 0 : index
    %c0_114 = arith.constant 0 : index
    %c0_115 = arith.constant 0 : index
    %308 = vector.load %arg11[%c0_113, %c0_114, %c0_115] : memref<2x8x64xf32, #tpu.memory_space<vmem>>, vector<1x8x64xf32>
    %309 = vector.shape_cast %308 : vector<1x8x64xf32> to vector<8x64xf32>
    %310 = vector.shape_cast %281 : vector<8x64xf32> to vector<1x8x64xf32>
    tpu.vector_store %arg11[%c0_113, %c0_114, %c0_115], %310 {strides = array<i32>} : memref<2x8x64xf32, #tpu.memory_space<vmem>>, vector<1x8x64xf32>,
    %c0_116 = arith.constant 0 : index
    %c0_117 = arith.constant 0 : index
    %c0_118 = arith.constant 0 : index
    %311 = vector.load %arg12[%c0_116, %c0_117, %c0_118] : memref<2x8x64xf32, #tpu.memory_space<vmem>>, vector<1x8x64xf32>
    %312 = vector.shape_cast %311 : vector<1x8x64xf32> to vector<8x64xf32>
    %313 = vector.shape_cast %279 : vector<8x64xf32> to vector<1x8x64xf32>
    tpu.vector_store %arg12[%c0_116, %c0_117, %c0_118], %313 {strides = array<i32>} : memref<2x8x64xf32, #tpu.memory_space<vmem>>, vector<1x8x64xf32>,
    %c1_119 = arith.constant 1 : index
    %c0_120 = arith.constant 0 : index
    %c0_121 = arith.constant 0 : index
    %314 = vector.load %arg11[%c1_119, %c0_120, %c0_121] : memref<2x8x64xf32, #tpu.memory_space<vmem>>, vector<1x8x64xf32>
    %315 = vector.shape_cast %314 : vector<1x8x64xf32> to vector<8x64xf32>
    %316 = vector.shape_cast %307 : vector<8x64xf32> to vector<1x8x64xf32>
    tpu.vector_store %arg11[%c1_119, %c0_120, %c0_121], %316 {strides = array<i32>} : memref<2x8x64xf32, #tpu.memory_space<vmem>>, vector<1x8x64xf32>,
    %c1_122 = arith.constant 1 : index
    %c0_123 = arith.constant 0 : index
    %c0_124 = arith.constant 0 : index
    %317 = vector.load %arg12[%c1_122, %c0_123, %c0_124] : memref<2x8x64xf32, #tpu.memory_space<vmem>>, vector<1x8x64xf32>
    %318 = vector.shape_cast %317 : vector<1x8x64xf32> to vector<8x64xf32>
    %319 = vector.shape_cast %305 : vector<8x64xf32> to vector<1x8x64xf32>
    tpu.vector_store %arg12[%c1_122, %c0_123, %c0_124], %319 {strides = array<i32>} : memref<2x8x64xf32, #tpu.memory_space<vmem>>, vector<1x8x64xf32>,
    %c0_i32_125 = arith.constant 0 : i32
    %320 = arith.cmpi eq, %arg0, %c0_i32_125 : i32
    %321 = arith.extui %320 : i1 to i32
    %c0_i32_126 = arith.constant 0 : i32
    %322 = arith.cmpi ne, %321, %c0_i32_126 : i32
    scf.if %322 {
      %c0_127 = arith.constant 0 : index
      %c0_128 = arith.constant 0 : index
      %c0_129 = arith.constant 0 : index
      %323 = vector.load %arg11[%c0_127, %c0_128, %c0_129] : memref<2x8x64xf32, #tpu.memory_space<vmem>>, vector<2x8x64xf32>
      %c0_130 = arith.constant 0 : index
      %c0_131 = arith.constant 0 : index
      %c0_132 = arith.constant 0 : index
      %324 = vector.load %arg8[%c0_130, %c0_131, %c0_132] : memref<2x8x64xf32, #tpu.memory_space<vmem>>, vector<2x8x64xf32>
      tpu.vector_store %arg8[%c0_130, %c0_131, %c0_132], %323 {strides = array<i32>} : memref<2x8x64xf32, #tpu.memory_space<vmem>>, vector<2x8x64xf32>,
      %c0_133 = arith.constant 0 : index
      %c0_134 = arith.constant 0 : index
      %c0_135 = arith.constant 0 : index
      %325 = vector.load %arg12[%c0_133, %c0_134, %c0_135] : memref<2x8x64xf32, #tpu.memory_space<vmem>>, vector<2x8x64xf32>
      %c0_136 = arith.constant 0 : index
      %c0_137 = arith.constant 0 : index
      %c0_138 = arith.constant 0 : index
      %326 = vector.load %arg9[%c0_136, %c0_137, %c0_138] : memref<2x8x64xf32, #tpu.memory_space<vmem>>, vector<2x8x64xf32>
      tpu.vector_store %arg9[%c0_136, %c0_137, %c0_138], %325 {strides = array<i32>} : memref<2x8x64xf32, #tpu.memory_space<vmem>>, vector<2x8x64xf32>,
    } else {
    }
    return
  }
  func.func @transform_0(%arg0: i32) -> (i32, i32, i32) {
    %c0_i32 = arith.constant 0 : i32
    %c0_i32_0 = arith.constant 0 : i32
    %c0_i32_1 = arith.constant 0 : i32
    return %arg0, %c0_i32, %c0_i32_0 : i32, i32, i32
  }
  func.func @transform_1(%arg0: i32) -> (i32, i32) {
    %c0_i32 = arith.constant 0 : i32
    %c0_i32_0 = arith.constant 0 : i32
    %c0_i32_1 = arith.constant 0 : i32
    return %c0_i32, %c0_i32_0 : i32, i32
  }
  func.func @transform_2(%arg0: i32) -> (i32, i32) {
    %c0_i32 = arith.constant 0 : i32
    %c0_i32_0 = arith.constant 0 : i32
    %c0_i32_1 = arith.constant 0 : i32
    return %c0_i32, %c0_i32_0 : i32, i32
  }
  func.func @transform_3(%arg0: i32) -> (i32, i32) {
    %c0_i32 = arith.constant 0 : i32
    %c0_i32_0 = arith.constant 0 : i32
    %c0_i32_1 = arith.constant 0 : i32
    return %c0_i32, %c0_i32_0 : i32, i32
  }
  func.func @transform_4(%arg0: i32) -> (i32, i32) {
    %c0_i32 = arith.constant 0 : i32
    %c0_i32_0 = arith.constant 0 : i32
    %c0_i32_1 = arith.constant 0 : i32
    return %c0_i32, %c0_i32_0 : i32, i32
  }
  func.func @transform_5(%arg0: i32) -> (i32, i32) {
    %c0_i32 = arith.constant 0 : i32
    %c0_i32_0 = arith.constant 0 : i32
    %c0_i32_1 = arith.constant 0 : i32
    return %c0_i32, %c0_i32_0 : i32, i32
  }
  func.func @transform_6(%arg0: i32) -> (i32, i32) {
    %c0_i32 = arith.constant 0 : i32
    %c0_i32_0 = arith.constant 0 : i32
    %c0_i32_1 = arith.constant 0 : i32
    return %c0_i32, %c0_i32_0 : i32, i32
  }
  func.func @transform_7(%arg0: i32) -> (i32, i32, i32) {
    %c0_i32 = arith.constant 0 : i32
    %c0_i32_0 = arith.constant 0 : i32
    %c0_i32_1 = arith.constant 0 : i32
    %c0_i32_2 = arith.constant 0 : i32
    return %c0_i32, %c0_i32_0, %c0_i32_1 : i32, i32, i32
  }
  func.func @transform_8(%arg0: i32) -> (i32, i32, i32) {
    %c0_i32 = arith.constant 0 : i32
    %c0_i32_0 = arith.constant 0 : i32
    %c0_i32_1 = arith.constant 0 : i32
    %c0_i32_2 = arith.constant 0 : i32
    return %c0_i32, %c0_i32_0, %c0_i32_1 : i32, i32, i32
  }
}

</mosaic_0001>

<llo_original>
// kernel: tpu_custom_call.1
$region0: #{tpu_custom_call.1}
  #allocation0 [shape = 'u32[]', space=smem, size = 0x4, offset = 0x4, fixed_abs, tag = 'smem constant byte address 0x4 - core index']
  #allocation1 [shape = 'u32[144,128]{1,0:T(1,128)}', space=vmem, size = 0x12000, scoped, tag = 'internal scratch']
  #allocation2 [shape = 'f32[6,8,256]{2,1,0:T(8,128)}', space=vmem, size = 0xc000, scoped, tag = 'scratch operand']
  #allocation3 [shape = 'f32[2,8,64]{2,1,0:T(8,128)}', space=vmem, size = 0x2000, scoped, tag = 'scratch operand']
  #allocation4 [shape = 'f32[2,8,64]{2,1,0:T(8,128)}', space=vmem, size = 0x2000, scoped, tag = 'scratch operand']
  %s0 = inlined_call_operand.hbm [shape: bf16[6,8,1024], index: 0, kind: input, shape index: {}]
  %s1 = inlined_call_operand.hbm [shape: bf16[1024,256], index: 1, kind: input, shape index: {}]
  %s2 = inlined_call_operand.vmem [shape: f32[1,256], index: 2, kind: input, shape index: {}]
  %s3 = inlined_call_operand.hbm [shape: bf16[64,256], index: 3, kind: input, shape index: {}]
  %s4 = inlined_call_operand.hbm [shape: bf16[64,256], index: 4, kind: input, shape index: {}]
  %s5 = inlined_call_operand.hbm [shape: bf16[64,256], index: 5, kind: input, shape index: {}]
  %s6 = inlined_call_operand.vmem [shape: f32[1,256], index: 6, kind: input, shape index: {}]
  %s7 = inlined_call_operand.hbm [shape: f32[2,8,64], index: 7, kind: output, shape index: {0}]
  %s8 = inlined_call_operand.hbm [shape: f32[2,8,64], index: 8, kind: output, shape index: {1}]
  %9 = xla_tuple %s7, %s8
  %s10 = sld [smem:[#allocation0]]
  $region74: #{tpu_custom_call.1} parent=0
    _
  %s12 = ssub.s32 1, %s10
  %s13 = scalar_select 0, %s12, %s10
  $region1: #{tpu_custom_call.1} parent=0
    #allocation5 [shape = 'u8[98304]{0}', space=vmem, size = 0x18000, scoped, tag = 'input window, operand 0, single buffered']
    #allocation6 [shape = 's32[1]{0}', space=sflag, size = 0x4, scoped, tag = 'scoped memory for tpu_custom_call.1']
    #allocation7 [shape = 's32[1]{0}', space=sflag, size = 0x4, scoped, tag = 'scoped memory for tpu_custom_call.1']
    #allocation8 [shape = 'u8[524288]{0}', space=vmem, size = 0x80000, scoped, tag = 'input window, operand 1, single buffered']
    #allocation9 [shape = 's32[1]{0}', space=sflag, size = 0x4, scoped, tag = 'scoped memory for tpu_custom_call.1']
    #allocation10 [shape = 'u8[32768]{0}', space=vmem, size = 0x8000, scoped, tag = 'input window, operand 3, single buffered']
    #allocation11 [shape = 'u8[32768]{0}', space=vmem, size = 0x8000, scoped, tag = 'input window, operand 4, single buffered']
    #allocation12 [shape = 's32[1]{0}', space=sflag, size = 0x4, scoped, tag = 'scoped memory for tpu_custom_call.1']
    #allocation13 [shape = 'u8[32768]{0}', space=vmem, size = 0x8000, scoped, tag = 'input window, operand 5, single buffered']
    #allocation14 [shape = 'u8[8192]{0}', space=vmem, size = 0x2000, scoped, tag = 'output window, operand 0, single buffered']
    #allocation15 [shape = 'u8[8192]{0}', space=vmem, size = 0x2000, scoped, tag = 'output window, operand 1, single buffered']
    #allocation16 [shape = 's32[1]{0}', space=sflag, size = 0x4, scoped, tag = 'scoped memory for tpu_custom_call.1']
    %14 = vsyncpa [#allocation6], 0
    %15 = vsyncpa [#allocation9], 0
    %16 = vsyncpa [#allocation12], 0
    %17 = vsyncpa [#allocation7], 0
    %18 = vsyncpa [#allocation16], 0
    // Predicated region
    $region2: #{tpu_custom_call.1} parent=1 // pred_check
      _
    $region3: #{tpu_custom_call.1} parent=1 // pred_check_branch
      %20 = sbr.rel (0) target = $region5
    $region4: #{tpu_custom_call.1} parent=1 // pred_region
      %s22 = ssub.s32 3072, 3072
      %23 = vsyncadd [#allocation6], %s22
      %s24 = sshll.u32 [#allocation5], 4
      %s25 = int_to_ptr.vmem [resolvable:$true] %s24
      %30 = dma.hbm_to_vmem [thread:$0]  %s0, 3072, %s25, [#allocation6], 512, 512, 32
    $region5: #{tpu_custom_call.1} parent=1 // pred_fallthru
      _
    // Predicated region
    $region6: #{tpu_custom_call.1} parent=1 // pred_check
      _
    $region7: #{tpu_custom_call.1} parent=1 // pred_check_branch
      %32 = sbr.rel (0) target = $region9
    $region8: #{tpu_custom_call.1} parent=1 // pred_region
      %s34 = ssub.s32 16384, 16384
      %35 = vsyncadd [#allocation9], %s34
      %s36 = sshll.u32 [#allocation8], 4
      %s37 = int_to_ptr.vmem [resolvable:$true] %s36
      %42 = dma.hbm_to_vmem [thread:$0]  %s1, 16384, %s37, [#allocation9], 128, 128, 8
    $region9: #{tpu_custom_call.1} parent=1 // pred_fallthru
      _
    // Predicated region
    $region10: #{tpu_custom_call.1} parent=1 // pred_check
      _
    $region11: #{tpu_custom_call.1} parent=1 // pred_check_branch
      %44 = sbr.rel (0) target = $region13
    $region12: #{tpu_custom_call.1} parent=1 // pred_region
      _
    $region13: #{tpu_custom_call.1} parent=1 // pred_fallthru
      _
    // Predicated region
    $region14: #{tpu_custom_call.1} parent=1 // pred_check
      _
    $region15: #{tpu_custom_call.1} parent=1 // pred_check_branch
      %46 = sbr.rel (0) target = $region17
    $region16: #{tpu_custom_call.1} parent=1 // pred_region
      %s48 = ssub.s32 1024, 1024
      %49 = vsyncadd [#allocation9], %s48
      %s50 = sshll.u32 [#allocation10], 4
      %s51 = int_to_ptr.vmem [resolvable:$true] %s50
      %56 = dma.hbm_to_vmem [thread:$0]  %s3, 1024, %s51, [#allocation9], 128, 128, 8
    $region17: #{tpu_custom_call.1} parent=1 // pred_fallthru
      _
    // Predicated region
    $region18: #{tpu_custom_call.1} parent=1 // pred_check
      _
    $region19: #{tpu_custom_call.1} parent=1 // pred_check_branch
      %58 = sbr.rel (0) target = $region21
    $region20: #{tpu_custom_call.1} parent=1 // pred_region
      %s60 = ssub.s32 1024, 1024
      %61 = vsyncadd [#allocation12], %s60
      %s62 = sshll.u32 [#allocation11], 4
      %s63 = int_to_ptr.vmem [resolvable:$true] %s62
      %68 = dma.hbm_to_vmem [thread:$0]  %s4, 1024, %s63, [#allocation12], 128, 128, 8
    $region21: #{tpu_custom_call.1} parent=1 // pred_fallthru
      _
    // Predicated region
    $region22: #{tpu_custom_call.1} parent=1 // pred_check
      _
    $region23: #{tpu_custom_call.1} parent=1 // pred_check_branch
      %70 = sbr.rel (0) target = $region25
    $region24: #{tpu_custom_call.1} parent=1 // pred_region
      %s72 = ssub.s32 1024, 1024
      %73 = vsyncadd [#allocation12], %s72
      %s74 = sshll.u32 [#allocation13], 4
      %s75 = int_to_ptr.vmem [resolvable:$true] %s74
      %80 = dma.hbm_to_vmem [thread:$0]  %s5, 1024, %s75, [#allocation12], 128, 128, 8
    $region25: #{tpu_custom_call.1} parent=1 // pred_fallthru
      _
    // Predicated region
    $region26: #{tpu_custom_call.1} parent=1 // pred_check
      _
    $region27: #{tpu_custom_call.1} parent=1 // pred_check_branch
      %82 = sbr.rel (0) target = $region29
    $region28: #{tpu_custom_call.1} parent=1 // pred_region
      _
    $region29: #{tpu_custom_call.1} parent=1 // pred_fallthru
      _
    // Predicated region
    $region30: #{tpu_custom_call.1} parent=1 // pred_check
      _
    $region31: #{tpu_custom_call.1} parent=1 // pred_check_branch
      %84 = sbr.rel (0) target = $region33
    $region32: #{tpu_custom_call.1} parent=1 // pred_region
      %85 = dma.done [#allocation6], 3072
    $region33: #{tpu_custom_call.1} parent=1 // pred_fallthru
      _
    // Predicated region
    $region34: #{tpu_custom_call.1} parent=1 // pred_check
      _
    $region35: #{tpu_custom_call.1} parent=1 // pred_check_branch
      %87 = sbr.rel (0) target = $region37
    $region36: #{tpu_custom_call.1} parent=1 // pred_region
      %88 = dma.done [#allocation9], 16384
    $region37: #{tpu_custom_call.1} parent=1 // pred_fallthru
      _
    // Predicated region
    $region38: #{tpu_custom_call.1} parent=1 // pred_check
      _
    $region39: #{tpu_custom_call.1} parent=1 // pred_check_branch
      %90 = sbr.rel (0) target = $region41
    $region40: #{tpu_custom_call.1} parent=1 // pred_region
      %91 = dma.done [#allocation9], 1024
    $region41: #{tpu_custom_call.1} parent=1 // pred_fallthru
      _
    // Predicated region
    $region42: #{tpu_custom_call.1} parent=1 // pred_check
      _
    $region43: #{tpu_custom_call.1} parent=1 // pred_check_branch
      %93 = sbr.rel (0) target = $region45
    $region44: #{tpu_custom_call.1} parent=1 // pred_region
      %94 = dma.done [#allocation12], 1024
    $region45: #{tpu_custom_call.1} parent=1 // pred_fallthru
      _
    // Predicated region
    $region46: #{tpu_custom_call.1} parent=1 // pred_check
      _
    $region47: #{tpu_custom_call.1} parent=1 // pred_check_branch
      %96 = sbr.rel (0) target = $region49
    $region48: #{tpu_custom_call.1} parent=1 // pred_region
      %97 = dma.done [#allocation12], 1024
    $region49: #{tpu_custom_call.1} parent=1 // pred_fallthru
      _
    %p99 = scmp.eq.s32.totalorder 0, 0
    // Predicated region
    $region50: #{tpu_custom_call.1} parent=1 // pred_check
      %p100 = pneg %p99
    $region51: #{tpu_custom_call.1} parent=1 // pred_check_branch
      %102 = sbr.rel (%p100) target = $region53
    $region52: #{tpu_custom_call.1} parent=1 // pred_region
      %vm103 = vcmask 523264
      %104 = vst.msk [vmem:[#allocation3] sm:$0xff] %vm103, 0.0
      %105 = vst.msk [vmem:[#allocation3 + $0x8] sm:$0xff] %vm103, 0.0
      %106 = vst.msk [vmem:[#allocation4] sm:$0xff] %vm103, 0.0
      %107 = vst.msk [vmem:[#allocation4 + $0x8] sm:$0xff] %vm103, 0.0
    $region53: #{tpu_custom_call.1} parent=1 // pred_fallthru
      _
    %v108 = vld [vmem:[#allocation5] sm:$0xff]
    %v109 = vld [vmem:[#allocation5 + $0x8] sm:$0xff]
    %v110 = vld [vmem:[#allocation5 + $0x10] sm:$0xff]
    %v111 = vld [vmem:[#allocation5 + $0x18] sm:$0xff]
    %v112 = vld [vmem:[#allocation5 + $0x20] sm:$0xff]
    %v113 = vld [vmem:[#allocation5 + $0x28] sm:$0xff]
    %v114 = vld [vmem:[#allocation5 + $0x30] sm:$0xff]
    %v115 = vld [vmem:[#allocation5 + $0x38] sm:$0xff]
    %v116 = vld [vmem:[#allocation5 + $0x40] sm:$0xff]
    %v117 = vld [vmem:[#allocation5 + $0x48] sm:$0xff]
    %v118 = vld [vmem:[#allocation5 + $0x50] sm:$0xff]
    %v119 = vld [vmem:[#allocation5 + $0x58] sm:$0xff]
    %v120 = vld [vmem:[#allocation5 + $0x60] sm:$0xff]
    %v121 = vld [vmem:[#allocation5 + $0x68] sm:$0xff]
    %v122 = vld [vmem:[#allocation5 + $0x70] sm:$0xff]
    %v123 = vld [vmem:[#allocation5 + $0x78] sm:$0xff]
    %v124 = vld [vmem:[#allocation5 + $0x80] sm:$0xff]
    %v125 = vld [vmem:[#allocation5 + $0x88] sm:$0xff]
    %v126 = vld [vmem:[#allocation5 + $0x90] sm:$0xff]
    %v127 = vld [vmem:[#allocation5 + $0x98] sm:$0xff]
    %v128 = vld [vmem:[#allocation5 + $0xa0] sm:$0xff]
    %v129 = vld [vmem:[#allocation5 + $0xa8] sm:$0xff]
    %v130 = vld [vmem:[#allocation5 + $0xb0] sm:$0xff]
    %v131 = vld [vmem:[#allocation5 + $0xb8] sm:$0xff]
    %v132 = vld [vmem:[#allocation8] sm:$0xff]
    %v133 = vld [vmem:[#allocation8 + $0x8] sm:$0xff]
    %v134 = vld [vmem:[#allocation8 + $0x10] sm:$0xff]
    %v135 = vld [vmem:[#allocation8 + $0x18] sm:$0xff]
    %v136 = vld [vmem:[#allocation8 + $0x20] sm:$0xff]
    %v137 = vld [vmem:[#allocation8 + $0x28] sm:$0xff]
    %v138 = vld [vmem:[#allocation8 + $0x30] sm:$0xff]
    %v139 = vld [vmem:[#allocation8 + $0x38] sm:$0xff]
    %v140 = vld [vmem:[#allocation8 + $0x40] sm:$0xff]
    %v141 = vld [vmem:[#allocation8 + $0x48] sm:$0xff]
    %v142 = vld [vmem:[#allocation8 + $0x50] sm:$0xff]
    %v143 = vld [vmem:[#allocation8 + $0x58] sm:$0xff]
    %v144 = vld [vmem:[#allocation8 + $0x60] sm:$0xff]
    %v145 = vld [vmem:[#allocation8 + $0x68] sm:$0xff]
    %v146 = vld [vmem:[#allocation8 + $0x70] sm:$0xff]
    %v147 = vld [vmem:[#allocation8 + $0x78] sm:$0xff]
    %v148 = vld [vmem:[#allocation8 + $0x80] sm:$0xff]
    %v149 = vld [vmem:[#allocation8 + $0x88] sm:$0xff]
    %v150 = vld [vmem:[#allocation8 + $0x90] sm:$0xff]
    %v151 = vld [vmem:[#allocation8 + $0x98] sm:$0xff]
    %v152 = vld [vmem:[#allocation8 + $0xa0] sm:$0xff]
    %v153 = vld [vmem:[#allocation8 + $0xa8] sm:$0xff]
    %v154 = vld [vmem:[#allocation8 + $0xb0] sm:$0xff]
    %v155 = vld [vmem:[#allocation8 + $0xb8] sm:$0xff]
    %v156 = vld [vmem:[#allocation8 + $0xc0] sm:$0xff]
    %v157 = vld [vmem:[#allocation8 + $0xc8] sm:$0xff]
    %v158 = vld [vmem:[#allocation8 + $0xd0] sm:$0xff]
    %v159 = vld [vmem:[#allocation8 + $0xd8] sm:$0xff]
    %v160 = vld [vmem:[#allocation8 + $0xe0] sm:$0xff]
    %v161 = vld [vmem:[#allocation8 + $0xe8] sm:$0xff]
    %v162 = vld [vmem:[#allocation8 + $0xf0] sm:$0xff]
    %v163 = vld [vmem:[#allocation8 + $0xf8] sm:$0xff]
    %v164 = vld [vmem:[#allocation8 + $0x100] sm:$0xff]
    %v165 = vld [vmem:[#allocation8 + $0x108] sm:$0xff]
    %v166 = vld [vmem:[#allocation8 + $0x110] sm:$0xff]
    %v167 = vld [vmem:[#allocation8 + $0x118] sm:$0xff]
    %v168 = vld [vmem:[#allocation8 + $0x120] sm:$0xff]
    %v169 = vld [vmem:[#allocation8 + $0x128] sm:$0xff]
    %v170 = vld [vmem:[#allocation8 + $0x130] sm:$0xff]
    %v171 = vld [vmem:[#allocation8 + $0x138] sm:$0xff]
    %v172 = vld [vmem:[#allocation8 + $0x140] sm:$0xff]
    %v173 = vld [vmem:[#allocation8 + $0x148] sm:$0xff]
    %v174 = vld [vmem:[#allocation8 + $0x150] sm:$0xff]
    %v175 = vld [vmem:[#allocation8 + $0x158] sm:$0xff]
    %v176 = vld [vmem:[#allocation8 + $0x160] sm:$0xff]
    %v177 = vld [vmem:[#allocation8 + $0x168] sm:$0xff]
    %v178 = vld [vmem:[#allocation8 + $0x170] sm:$0xff]
    %v179 = vld [vmem:[#allocation8 + $0x178] sm:$0xff]
    %v180 = vld [vmem:[#allocation8 + $0x180] sm:$0xff]
    %v181 = vld [vmem:[#allocation8 + $0x188] sm:$0xff]
    %v182 = vld [vmem:[#allocation8 + $0x190] sm:$0xff]
    %v183 = vld [vmem:[#allocation8 + $0x198] sm:$0xff]
    %v184 = vld [vmem:[#allocation8 + $0x1a0] sm:$0xff]
    %v185 = vld [vmem:[#allocation8 + $0x1a8] sm:$0xff]
    %v186 = vld [vmem:[#allocation8 + $0x1b0] sm:$0xff]
    %v187 = vld [vmem:[#allocation8 + $0x1b8] sm:$0xff]
    %v188 = vld [vmem:[#allocation8 + $0x1c0] sm:$0xff]
    %v189 = vld [vmem:[#allocation8 + $0x1c8] sm:$0xff]
    %v190 = vld [vmem:[#allocation8 + $0x1d0] sm:$0xff]
    %v191 = vld [vmem:[#allocation8 + $0x1d8] sm:$0xff]
    %v192 = vld [vmem:[#allocation8 + $0x1e0] sm:$0xff]
    %v193 = vld [vmem:[#allocation8 + $0x1e8] sm:$0xff]
    %v194 = vld [vmem:[#allocation8 + $0x1f0] sm:$0xff]
    %v195 = vld [vmem:[#allocation8 + $0x1f8] sm:$0xff]
    %v196 = vld [vmem:[#allocation8 + $0x200] sm:$0xff]
    %v197 = vld [vmem:[#allocation8 + $0x208] sm:$0xff]
    %v198 = vld [vmem:[#allocation8 + $0x210] sm:$0xff]
    %v199 = vld [vmem:[#allocation8 + $0x218] sm:$0xff]
    %v200 = vld [vmem:[#allocation8 + $0x220] sm:$0xff]
    %v201 = vld [vmem:[#allocation8 + $0x228] sm:$0xff]
    %v202 = vld [vmem:[#allocation8 + $0x230] sm:$0xff]
    %v203 = vld [vmem:[#allocation8 + $0x238] sm:$0xff]
    %v204 = vld [vmem:[#allocation8 + $0x240] sm:$0xff]
    %v205 = vld [vmem:[#allocation8 + $0x248] sm:$0xff]
    %v206 = vld [vmem:[#allocation8 + $0x250] sm:$0xff]
    %v207 = vld [vmem:[#allocation8 + $0x258] sm:$0xff]
    %v208 = vld [vmem:[#allocation8 + $0x260] sm:$0xff]
    %v209 = vld [vmem:[#allocation8 + $0x268] sm:$0xff]
    %v210 = vld [vmem:[#allocation8 + $0x270] sm:$0xff]
    %v211 = vld [vmem:[#allocation8 + $0x278] sm:$0xff]
    %v212 = vld [vmem:[#allocation8 + $0x280] sm:$0xff]
    %v213 = vld [vmem:[#allocation8 + $0x288] sm:$0xff]
    %v214 = vld [vmem:[#allocation8 + $0x290] sm:$0xff]
    %v215 = vld [vmem:[#allocation8 + $0x298] sm:$0xff]
    %v216 = vld [vmem:[#allocation8 + $0x2a0] sm:$0xff]
    %v217 = vld [vmem:[#allocation8 + $0x2a8] sm:$0xff]
    %v218 = vld [vmem:[#allocation8 + $0x2b0] sm:$0xff]
    %v219 = vld [vmem:[#allocation8 + $0x2b8] sm:$0xff]
    %v220 = vld [vmem:[#allocation8 + $0x2c0] sm:$0xff]
    %v221 = vld [vmem:[#allocation8 + $0x2c8] sm:$0xff]
    %v222 = vld [vmem:[#allocation8 + $0x2d0] sm:$0xff]
    %v223 = vld [vmem:[#allocation8 + $0x2d8] sm:$0xff]
    %v224 = vld [vmem:[#allocation8 + $0x2e0] sm:$0xff]
    %v225 = vld [vmem:[#allocation8 + $0x2e8] sm:$0xff]
    %v226 = vld [vmem:[#allocation8 + $0x2f0] sm:$0xff]
    %v227 = vld [vmem:[#allocation8 + $0x2f8] sm:$0xff]
    %v228 = vld [vmem:[#allocation8 + $0x300] sm:$0xff]
    %v229 = vld [vmem:[#allocation8 + $0x308] sm:$0xff]
    %v230 = vld [vmem:[#allocation8 + $0x310] sm:$0xff]
    %v231 = vld [vmem:[#allocation8 + $0x318] sm:$0xff]
    %v232 = vld [vmem:[#allocation8 + $0x320] sm:$0xff]
    %v233 = vld [vmem:[#allocation8 + $0x328] sm:$0xff]
    %v234 = vld [vmem:[#allocation8 + $0x330] sm:$0xff]
    %v235 = vld [vmem:[#allocation8 + $0x338] sm:$0xff]
    %v236 = vld [vmem:[#allocation8 + $0x340] sm:$0xff]
    %v237 = vld [vmem:[#allocation8 + $0x348] sm:$0xff]
    %v238 = vld [vmem:[#allocation8 + $0x350] sm:$0xff]
    %v239 = vld [vmem:[#allocation8 + $0x358] sm:$0xff]
    %v240 = vld [vmem:[#allocation8 + $0x360] sm:$0xff]
    %v241 = vld [vmem:[#allocation8 + $0x368] sm:$0xff]
    %v242 = vld [vmem:[#allocation8 + $0x370] sm:$0xff]
    %v243 = vld [vmem:[#allocation8 + $0x378] sm:$0xff]
    %v244 = vld [vmem:[#allocation8 + $0x380] sm:$0xff]
    %v245 = vld [vmem:[#allocation8 + $0x388] sm:$0xff]
    %v246 = vld [vmem:[#allocation8 + $0x390] sm:$0xff]
    %v247 = vld [vmem:[#allocation8 + $0x398] sm:$0xff]
    %v248 = vld [vmem:[#allocation8 + $0x3a0] sm:$0xff]
    %v249 = vld [vmem:[#allocation8 + $0x3a8] sm:$0xff]
    %v250 = vld [vmem:[#allocation8 + $0x3b0] sm:$0xff]
    %v251 = vld [vmem:[#allocation8 + $0x3b8] sm:$0xff]
    %v252 = vld [vmem:[#allocation8 + $0x3c0] sm:$0xff]
    %v253 = vld [vmem:[#allocation8 + $0x3c8] sm:$0xff]
    %v254 = vld [vmem:[#allocation8 + $0x3d0] sm:$0xff]
    %v255 = vld [vmem:[#allocation8 + $0x3d8] sm:$0xff]
    %v256 = vld [vmem:[#allocation8 + $0x3e0] sm:$0xff]
    %v257 = vld [vmem:[#allocation8 + $0x3e8] sm:$0xff]
    %v258 = vld [vmem:[#allocation8 + $0x3f0] sm:$0xff]
    %v259 = vld [vmem:[#allocation8 + $0x3f8] sm:$0xff]
    %v260 = vld [vmem:[%s2] sm:$0x3]
    %v262 = vlaneseq
    %v263 = vshrl.u32 %v262, 7
    %v264 = vsub.s32 0, %v263
    %v265 = vrot.slane %v260, %v264
    %v266 = vlaneseq
    %v267 = vshrl.u32 %v266, 7
    %v268 = vsub.s32 1, %v267
    %v269 = vrot.slane %v260, %v268
    %v296 = vunpack.c.l.b16 %v108
    %v297 = vunpack.c.h.b16 %v108
    %v298 = vunpack.c.l.b16 %v109
    %v299 = vunpack.c.h.b16 %v109
    %v300 = vunpack.c.l.b16 %v110
    %v301 = vunpack.c.h.b16 %v110
    %v302 = vunpack.c.l.b16 %v111
    %v303 = vunpack.c.h.b16 %v111
    %v304 = vunpack.c.l.b16 %v112
    %v305 = vunpack.c.h.b16 %v112
    %v306 = vunpack.c.l.b16 %v113
    %v307 = vunpack.c.h.b16 %v113
    %v308 = vunpack.c.l.b16 %v114
    %v309 = vunpack.c.h.b16 %v114
    %v310 = vunpack.c.l.b16 %v115
    %v311 = vunpack.c.h.b16 %v115
    %v312 = vunpack.c.l.b16 %v116
    %v313 = vunpack.c.h.b16 %v116
    %v314 = vunpack.c.l.b16 %v117
    %v315 = vunpack.c.h.b16 %v117
    %v316 = vunpack.c.l.b16 %v118
    %v317 = vunpack.c.h.b16 %v118
    %v318 = vunpack.c.l.b16 %v119
    %v319 = vunpack.c.h.b16 %v119
    %v320 = vunpack.c.l.b16 %v120
    %v321 = vunpack.c.h.b16 %v120
    %v322 = vunpack.c.l.b16 %v121
    %v323 = vunpack.c.h.b16 %v121
    %v324 = vunpack.c.l.b16 %v122
    %v325 = vunpack.c.h.b16 %v122
    %v326 = vunpack.c.l.b16 %v123
    %v327 = vunpack.c.h.b16 %v123
    %v328 = vunpack.c.l.b16 %v124
    %v329 = vunpack.c.h.b16 %v124
    %v330 = vunpack.c.l.b16 %v125
    %v331 = vunpack.c.h.b16 %v125
    %v332 = vunpack.c.l.b16 %v126
    %v333 = vunpack.c.h.b16 %v126
    %v334 = vunpack.c.l.b16 %v127
    %v335 = vunpack.c.h.b16 %v127
    %v336 = vunpack.c.l.b16 %v128
    %v337 = vunpack.c.h.b16 %v128
    %v338 = vunpack.c.l.b16 %v129
    %v339 = vunpack.c.h.b16 %v129
    %v340 = vunpack.c.l.b16 %v130
    %v341 = vunpack.c.h.b16 %v130
    %v342 = vunpack.c.l.b16 %v131
    %v343 = vunpack.c.h.b16 %v131
    %v344 = vpack.c.b16 %v304, %v296
    %v345 = vpack.c.b16 %v305, %v297
    %v346 = vpack.c.b16 %v306, %v298
    %v347 = vpack.c.b16 %v307, %v299
    %v348 = vpack.c.b16 %v308, %v300
    %v349 = vpack.c.b16 %v309, %v301
    %v350 = vpack.c.b16 %v310, %v302
    %v351 = vpack.c.b16 %v311, %v303
    %v352 = vpack.c.b16 %v320, %v312
    %v353 = vpack.c.b16 %v321, %v313
    %v354 = vpack.c.b16 %v322, %v314
    %v355 = vpack.c.b16 %v323, %v315
    %v356 = vpack.c.b16 %v324, %v316
    %v357 = vpack.c.b16 %v325, %v317
    %v358 = vpack.c.b16 %v326, %v318
    %v359 = vpack.c.b16 %v327, %v319
    %v360 = vpack.c.b16 %v336, %v328
    %v361 = vpack.c.b16 %v337, %v329
    %v362 = vpack.c.b16 %v338, %v330
    %v363 = vpack.c.b16 %v339, %v331
    %v364 = vpack.c.b16 %v340, %v332
    %v365 = vpack.c.b16 %v341, %v333
    %v366 = vpack.c.b16 %v342, %v334
    %v367 = vpack.c.b16 %v343, %v335
    %v520 = vunpack.c.l.b16 %v132
    %v521 = vunpack.c.h.b16 %v132
    %v522 = vunpack.c.l.b16 %v133
    %v523 = vunpack.c.h.b16 %v133
    %v524 = vunpack.c.l.b16 %v134
    %v525 = vunpack.c.h.b16 %v134
    %v526 = vunpack.c.l.b16 %v135
    %v527 = vunpack.c.h.b16 %v135
    %v528 = vunpack.c.l.b16 %v136
    %v529 = vunpack.c.h.b16 %v136
    %v530 = vunpack.c.l.b16 %v137
    %v531 = vunpack.c.h.b16 %v137
    %v532 = vunpack.c.l.b16 %v138
    %v533 = vunpack.c.h.b16 %v138
    %v534 = vunpack.c.l.b16 %v139
    %v535 = vunpack.c.h.b16 %v139
    %v536 = vunpack.c.l.b16 %v140
    %v537 = vunpack.c.h.b16 %v140
    %v538 = vunpack.c.l.b16 %v141
    %v539 = vunpack.c.h.b16 %v141
    %v540 = vunpack.c.l.b16 %v142
    %v541 = vunpack.c.h.b16 %v142
    %v542 = vunpack.c.l.b16 %v143
    %v543 = vunpack.c.h.b16 %v143
    %v544 = vunpack.c.l.b16 %v144
    %v545 = vunpack.c.h.b16 %v144
    %v546 = vunpack.c.l.b16 %v145
    %v547 = vunpack.c.h.b16 %v145
    %v548 = vunpack.c.l.b16 %v146
    %v549 = vunpack.c.h.b16 %v146
    %v550 = vunpack.c.l.b16 %v147
    %v551 = vunpack.c.h.b16 %v147
    %v552 = vunpack.c.l.b16 %v148
    %v553 = vunpack.c.h.b16 %v148
    %v554 = vunpack.c.l.b16 %v149
    %v555 = vunpack.c.h.b16 %v149
    %v556 = vunpack.c.l.b16 %v150
    %v557 = vunpack.c.h.b16 %v150
    %v558 = vunpack.c.l.b16 %v151
    %v559 = vunpack.c.h.b16 %v151
    %v560 = vunpack.c.l.b16 %v152
    %v561 = vunpack.c.h.b16 %v152
    %v562 = vunpack.c.l.b16 %v153
    %v563 = vunpack.c.h.b16 %v153
    %v564 = vunpack.c.l.b16 %v154
    %v565 = vunpack.c.h.b16 %v154
    %v566 = vunpack.c.l.b16 %v155
    %v567 = vunpack.c.h.b16 %v155
    %v568 = vunpack.c.l.b16 %v156
    %v569 = vunpack.c.h.b16 %v156
    %v570 = vunpack.c.l.b16 %v157
    %v571 = vunpack.c.h.b16 %v157
    %v572 = vunpack.c.l.b16 %v158
    %v573 = vunpack.c.h.b16 %v158
    %v574 = vunpack.c.l.b16 %v159
    %v575 = vunpack.c.h.b16 %v159
    %v576 = vunpack.c.l.b16 %v160
    %v577 = vunpack.c.h.b16 %v160
    %v578 = vunpack.c.l.b16 %v161
    %v579 = vunpack.c.h.b16 %v161
    %v580 = vunpack.c.l.b16 %v162
    %v581 = vunpack.c.h.b16 %v162
    %v582 = vunpack.c.l.b16 %v163
    %v583 = vunpack.c.h.b16 %v163
    %v584 = vunpack.c.l.b16 %v164
    %v585 = vunpack.c.h.b16 %v164
    %v586 = vunpack.c.l.b16 %v165
    %v587 = vunpack.c.h.b16 %v165
    %v588 = vunpack.c.l.b16 %v166
    %v589 = vunpack.c.h.b16 %v166
    %v590 = vunpack.c.l.b16 %v167
    %v591 = vunpack.c.h.b16 %v167
    %v592 = vunpack.c.l.b16 %v168
    %v593 = vunpack.c.h.b16 %v168
    %v594 = vunpack.c.l.b16 %v169
    %v595 = vunpack.c.h.b16 %v169
    %v596 = vunpack.c.l.b16 %v170
    %v597 = vunpack.c.h.b16 %v170
    %v598 = vunpack.c.l.b16 %v171
    %v599 = vunpack.c.h.b16 %v171
    %v600 = vunpack.c.l.b16 %v172
    %v601 = vunpack.c.h.b16 %v172
    %v602 = vunpack.c.l.b16 %v173
    %v603 = vunpack.c.h.b16 %v173
    %v604 = vunpack.c.l.b16 %v174
    %v605 = vunpack.c.h.b16 %v174
    %v606 = vunpack.c.l.b16 %v175
    %v607 = vunpack.c.h.b16 %v175
    %v608 = vunpack.c.l.b16 %v176
    %v609 = vunpack.c.h.b16 %v176
    %v610 = vunpack.c.l.b16 %v177
    %v611 = vunpack.c.h.b16 %v177
    %v612 = vunpack.c.l.b16 %v178
    %v613 = vunpack.c.h.b16 %v178
    %v614 = vunpack.c.l.b16 %v179
    %v615 = vunpack.c.h.b16 %v179
    %v616 = vunpack.c.l.b16 %v180
    %v617 = vunpack.c.h.b16 %v180
    %v618 = vunpack.c.l.b16 %v181
    %v619 = vunpack.c.h.b16 %v181
    %v620 = vunpack.c.l.b16 %v182
    %v621 = vunpack.c.h.b16 %v182
    %v622 = vunpack.c.l.b16 %v183
    %v623 = vunpack.c.h.b16 %v183
    %v624 = vunpack.c.l.b16 %v184
    %v625 = vunpack.c.h.b16 %v184
    %v626 = vunpack.c.l.b16 %v185
    %v627 = vunpack.c.h.b16 %v185
    %v628 = vunpack.c.l.b16 %v186
    %v629 = vunpack.c.h.b16 %v186
    %v630 = vunpack.c.l.b16 %v187
    %v631 = vunpack.c.h.b16 %v187
    %v632 = vunpack.c.l.b16 %v188
    %v633 = vunpack.c.h.b16 %v188
    %v634 = vunpack.c.l.b16 %v189
    %v635 = vunpack.c.h.b16 %v189
    %v636 = vunpack.c.l.b16 %v190
    %v637 = vunpack.c.h.b16 %v190
    %v638 = vunpack.c.l.b16 %v191
    %v639 = vunpack.c.h.b16 %v191
    %v640 = vunpack.c.l.b16 %v192
    %v641 = vunpack.c.h.b16 %v192
    %v642 = vunpack.c.l.b16 %v193
    %v643 = vunpack.c.h.b16 %v193
    %v644 = vunpack.c.l.b16 %v194
    %v645 = vunpack.c.h.b16 %v194
    %v646 = vunpack.c.l.b16 %v195
    %v647 = vunpack.c.h.b16 %v195
    %v648 = vunpack.c.l.b16 %v196
    %v649 = vunpack.c.h.b16 %v196
    %v650 = vunpack.c.l.b16 %v197
    %v651 = vunpack.c.h.b16 %v197
    %v652 = vunpack.c.l.b16 %v198
    %v653 = vunpack.c.h.b16 %v198
    %v654 = vunpack.c.l.b16 %v199
    %v655 = vunpack.c.h.b16 %v199
    %v656 = vunpack.c.l.b16 %v200
    %v657 = vunpack.c.h.b16 %v200
    %v658 = vunpack.c.l.b16 %v201
    %v659 = vunpack.c.h.b16 %v201
    %v660 = vunpack.c.l.b16 %v202
    %v661 = vunpack.c.h.b16 %v202
    %v662 = vunpack.c.l.b16 %v203
    %v663 = vunpack.c.h.b16 %v203
    %v664 = vunpack.c.l.b16 %v204
    %v665 = vunpack.c.h.b16 %v204
    %v666 = vunpack.c.l.b16 %v205
    %v667 = vunpack.c.h.b16 %v205
    %v668 = vunpack.c.l.b16 %v206
    %v669 = vunpack.c.h.b16 %v206
    %v670 = vunpack.c.l.b16 %v207
    %v671 = vunpack.c.h.b16 %v207
    %v672 = vunpack.c.l.b16 %v208
    %v673 = vunpack.c.h.b16 %v208
    %v674 = vunpack.c.l.b16 %v209
    %v675 = vunpack.c.h.b16 %v209
    %v676 = vunpack.c.l.b16 %v210
    %v677 = vunpack.c.h.b16 %v210
    %v678 = vunpack.c.l.b16 %v211
    %v679 = vunpack.c.h.b16 %v211
    %v680 = vunpack.c.l.b16 %v212
    %v681 = vunpack.c.h.b16 %v212
    %v682 = vunpack.c.l.b16 %v213
    %v683 = vunpack.c.h.b16 %v213
    %v684 = vunpack.c.l.b16 %v214
    %v685 = vunpack.c.h.b16 %v214
    %v686 = vunpack.c.l.b16 %v215
    %v687 = vunpack.c.h.b16 %v215
    %v688 = vunpack.c.l.b16 %v216
    %v689 = vunpack.c.h.b16 %v216
    %v690 = vunpack.c.l.b16 %v217
    %v691 = vunpack.c.h.b16 %v217
    %v692 = vunpack.c.l.b16 %v218
    %v693 = vunpack.c.h.b16 %v218
    %v694 = vunpack.c.l.b16 %v219
    %v695 = vunpack.c.h.b16 %v219
    %v696 = vunpack.c.l.b16 %v220
    %v697 = vunpack.c.h.b16 %v220
    %v698 = vunpack.c.l.b16 %v221
    %v699 = vunpack.c.h.b16 %v221
    %v700 = vunpack.c.l.b16 %v222
    %v701 = vunpack.c.h.b16 %v222
    %v702 = vunpack.c.l.b16 %v223
    %v703 = vunpack.c.h.b16 %v223
    %v704 = vunpack.c.l.b16 %v224
    %v705 = vunpack.c.h.b16 %v224
    %v706 = vunpack.c.l.b16 %v225
    %v707 = vunpack.c.h.b16 %v225
    %v708 = vunpack.c.l.b16 %v226
    %v709 = vunpack.c.h.b16 %v226
    %v710 = vunpack.c.l.b16 %v227
    %v711 = vunpack.c.h.b16 %v227
    %v712 = vunpack.c.l.b16 %v228
    %v713 = vunpack.c.h.b16 %v228
    %v714 = vunpack.c.l.b16 %v229
    %v715 = vunpack.c.h.b16 %v229
    %v716 = vunpack.c.l.b16 %v230
    %v717 = vunpack.c.h.b16 %v230
    %v718 = vunpack.c.l.b16 %v231
    %v719 = vunpack.c.h.b16 %v231
    %v720 = vunpack.c.l.b16 %v232
    %v721 = vunpack.c.h.b16 %v232
    %v722 = vunpack.c.l.b16 %v233
    %v723 = vunpack.c.h.b16 %v233
    %v724 = vunpack.c.l.b16 %v234
    %v725 = vunpack.c.h.b16 %v234
    %v726 = vunpack.c.l.b16 %v235
    %v727 = vunpack.c.h.b16 %v235
    %v728 = vunpack.c.l.b16 %v236
    %v729 = vunpack.c.h.b16 %v236
    %v730 = vunpack.c.l.b16 %v237
    %v731 = vunpack.c.h.b16 %v237
    %v732 = vunpack.c.l.b16 %v238
    %v733 = vunpack.c.h.b16 %v238
    %v734 = vunpack.c.l.b16 %v239
    %v735 = vunpack.c.h.b16 %v239
    %v736 = vunpack.c.l.b16 %v240
    %v737 = vunpack.c.h.b16 %v240
    %v738 = vunpack.c.l.b16 %v241
    %v739 = vunpack.c.h.b16 %v241
    %v740 = vunpack.c.l.b16 %v242
    %v741 = vunpack.c.h.b16 %v242
    %v742 = vunpack.c.l.b16 %v243
    %v743 = vunpack.c.h.b16 %v243
    %v744 = vunpack.c.l.b16 %v244
    %v745 = vunpack.c.h.b16 %v244
    %v746 = vunpack.c.l.b16 %v245
    %v747 = vunpack.c.h.b16 %v245
    %v748 = vunpack.c.l.b16 %v246
    %v749 = vunpack.c.h.b16 %v246
    %v750 = vunpack.c.l.b16 %v247
    %v751 = vunpack.c.h.b16 %v247
    %v752 = vunpack.c.l.b16 %v248
    %v753 = vunpack.c.h.b16 %v248
    %v754 = vunpack.c.l.b16 %v249
    %v755 = vunpack.c.h.b16 %v249
    %v756 = vunpack.c.l.b16 %v250
    %v757 = vunpack.c.h.b16 %v250
    %v758 = vunpack.c.l.b16 %v251
    %v759 = vunpack.c.h.b16 %v251
    %v760 = vunpack.c.l.b16 %v252
    %v761 = vunpack.c.h.b16 %v252
    %v762 = vunpack.c.l.b16 %v253
    %v763 = vunpack.c.h.b16 %v253
    %v764 = vunpack.c.l.b16 %v254
    %v765 = vunpack.c.h.b16 %v254
    %v766 = vunpack.c.l.b16 %v255
    %v767 = vunpack.c.h.b16 %v255
    %v768 = vunpack.c.l.b16 %v256
    %v769 = vunpack.c.h.b16 %v256
    %v770 = vunpack.c.l.b16 %v257
    %v771 = vunpack.c.h.b16 %v257
    %v772 = vunpack.c.l.b16 %v258
    %v773 = vunpack.c.h.b16 %v258
    %v774 = vunpack.c.l.b16 %v259
    %v775 = vunpack.c.h.b16 %v259
    %v776 = vpack.c.b16 %v522, %v520
    %v777 = vpack.c.b16 %v523, %v521
    %v778 = vpack.c.b16 %v526, %v524
    %v779 = vpack.c.b16 %v527, %v525
    %v780 = vpack.c.b16 %v530, %v528
    %v781 = vpack.c.b16 %v531, %v529
    %v782 = vpack.c.b16 %v534, %v532
    %v783 = vpack.c.b16 %v535, %v533
    %v784 = vpack.c.b16 %v538, %v536
    %v785 = vpack.c.b16 %v539, %v537
    %v786 = vpack.c.b16 %v542, %v540
    %v787 = vpack.c.b16 %v543, %v541
    %v788 = vpack.c.b16 %v546, %v544
    %v789 = vpack.c.b16 %v547, %v545
    %v790 = vpack.c.b16 %v550, %v548
    %v791 = vpack.c.b16 %v551, %v549
    %v792 = vpack.c.b16 %v554, %v552
    %v793 = vpack.c.b16 %v555, %v553
    %v794 = vpack.c.b16 %v558, %v556
    %v795 = vpack.c.b16 %v559, %v557
    %v796 = vpack.c.b16 %v562, %v560
    %v797 = vpack.c.b16 %v563, %v561
    %v798 = vpack.c.b16 %v566, %v564
    %v799 = vpack.c.b16 %v567, %v565
    %v800 = vpack.c.b16 %v570, %v568
    %v801 = vpack.c.b16 %v571, %v569
    %v802 = vpack.c.b16 %v574, %v572
    %v803 = vpack.c.b16 %v575, %v573
    %v804 = vpack.c.b16 %v578, %v576
    %v805 = vpack.c.b16 %v579, %v577
    %v806 = vpack.c.b16 %v582, %v580
    %v807 = vpack.c.b16 %v583, %v581
    %v808 = vpack.c.b16 %v586, %v584
    %v809 = vpack.c.b16 %v587, %v585
    %v810 = vpack.c.b16 %v590, %v588
    %v811 = vpack.c.b16 %v591, %v589
    %v812 = vpack.c.b16 %v594, %v592
    %v813 = vpack.c.b16 %v595, %v593
    %v814 = vpack.c.b16 %v598, %v596
    %v815 = vpack.c.b16 %v599, %v597
    %v816 = vpack.c.b16 %v602, %v600
    %v817 = vpack.c.b16 %v603, %v601
    %v818 = vpack.c.b16 %v606, %v604
    %v819 = vpack.c.b16 %v607, %v605
    %v820 = vpack.c.b16 %v610, %v608
    %v821 = vpack.c.b16 %v611, %v609
    %v822 = vpack.c.b16 %v614, %v612
    %v823 = vpack.c.b16 %v615, %v613
    %v824 = vpack.c.b16 %v618, %v616
    %v825 = vpack.c.b16 %v619, %v617
    %v826 = vpack.c.b16 %v622, %v620
    %v827 = vpack.c.b16 %v623, %v621
    %v828 = vpack.c.b16 %v626, %v624
    %v829 = vpack.c.b16 %v627, %v625
    %v830 = vpack.c.b16 %v630, %v628
    %v831 = vpack.c.b16 %v631, %v629
    %v832 = vpack.c.b16 %v634, %v632
    %v833 = vpack.c.b16 %v635, %v633
    %v834 = vpack.c.b16 %v638, %v636
    %v835 = vpack.c.b16 %v639, %v637
    %v836 = vpack.c.b16 %v642, %v640
    %v837 = vpack.c.b16 %v643, %v641
    %v838 = vpack.c.b16 %v646, %v644
    %v839 = vpack.c.b16 %v647, %v645
    %v840 = vpack.c.b16 %v650, %v648
    %v841 = vpack.c.b16 %v651, %v649
    %v842 = vpack.c.b16 %v654, %v652
    %v843 = vpack.c.b16 %v655, %v653
    %v844 = vpack.c.b16 %v658, %v656
    %v845 = vpack.c.b16 %v659, %v657
    %v846 = vpack.c.b16 %v662, %v660
    %v847 = vpack.c.b16 %v663, %v661
    %v848 = vpack.c.b16 %v666, %v664
    %v849 = vpack.c.b16 %v667, %v665
    %v850 = vpack.c.b16 %v670, %v668
    %v851 = vpack.c.b16 %v671, %v669
    %v852 = vpack.c.b16 %v674, %v672
    %v853 = vpack.c.b16 %v675, %v673
    %v854 = vpack.c.b16 %v678, %v676
    %v855 = vpack.c.b16 %v679, %v677
    %v856 = vpack.c.b16 %v682, %v680
    %v857 = vpack.c.b16 %v683, %v681
    %v858 = vpack.c.b16 %v686, %v684
    %v859 = vpack.c.b16 %v687, %v685
    %v860 = vpack.c.b16 %v690, %v688
    %v861 = vpack.c.b16 %v691, %v689
    %v862 = vpack.c.b16 %v694, %v692
    %v863 = vpack.c.b16 %v695, %v693
    %v864 = vpack.c.b16 %v698, %v696
    %v865 = vpack.c.b16 %v699, %v697
    %v866 = vpack.c.b16 %v702, %v700
    %v867 = vpack.c.b16 %v703, %v701
    %v868 = vpack.c.b16 %v706, %v704
    %v869 = vpack.c.b16 %v707, %v705
    %v870 = vpack.c.b16 %v710, %v708
    %v871 = vpack.c.b16 %v711, %v709
    %v872 = vpack.c.b16 %v714, %v712
    %v873 = vpack.c.b16 %v715, %v713
    %v874 = vpack.c.b16 %v718, %v716
    %v875 = vpack.c.b16 %v719, %v717
    %v876 = vpack.c.b16 %v722, %v720
    %v877 = vpack.c.b16 %v723, %v721
    %v878 = vpack.c.b16 %v726, %v724
    %v879 = vpack.c.b16 %v727, %v725
    %v880 = vpack.c.b16 %v730, %v728
    %v881 = vpack.c.b16 %v731, %v729
    %v882 = vpack.c.b16 %v734, %v732
    %v883 = vpack.c.b16 %v735, %v733
    %v884 = vpack.c.b16 %v738, %v736
    %v885 = vpack.c.b16 %v739, %v737
    %v886 = vpack.c.b16 %v742, %v740
    %v887 = vpack.c.b16 %v743, %v741
    %v888 = vpack.c.b16 %v746, %v744
    %v889 = vpack.c.b16 %v747, %v745
    %v890 = vpack.c.b16 %v750, %v748
    %v891 = vpack.c.b16 %v751, %v749
    %v892 = vpack.c.b16 %v754, %v752
    %v893 = vpack.c.b16 %v755, %v753
    %v894 = vpack.c.b16 %v758, %v756
    %v895 = vpack.c.b16 %v759, %v757
    %v896 = vpack.c.b16 %v762, %v760
    %v897 = vpack.c.b16 %v763, %v761
    %v898 = vpack.c.b16 %v766, %v764
    %v899 = vpack.c.b16 %v767, %v765
    %v900 = vpack.c.b16 %v770, %v768
    %v901 = vpack.c.b16 %v771, %v769
    %v902 = vpack.c.b16 %v774, %v772
    %v903 = vpack.c.b16 %v775, %v773
    %1032 = vmatprep.subr.bf16.mxu0 %v791
    %1033 = vmatpush1.bf16.msra.mxu0 %v790
    %1034 = vmatprep.subr.bf16.mxu0 %v789
    %1035 = vmatpush1.bf16.msra.mxu0 %v788
    %1036 = vmatprep.subr.bf16.mxu0 %v787
    %1037 = vmatpush1.bf16.msra.mxu0 %v786
    %1038 = vmatprep.subr.bf16.mxu0 %v785
    %1039 = vmatpush1.bf16.msra.mxu0 %v784
    %1040 = vmatprep.subr.bf16.mxu0 %v783
    %1041 = vmatpush1.bf16.msra.mxu0 %v782
    %1042 = vmatprep.subr.bf16.mxu0 %v781
    %1043 = vmatpush1.bf16.msra.mxu0 %v780
    %1044 = vmatprep.subr.bf16.mxu0 %v779
    %1045 = vmatpush1.bf16.msra.mxu0 %v778
    %1046 = vmatprep.subr.bf16.mxu0 %v777
    %1047 = vmatpush1.bf16.msra.mxu0 %v776
    %1048 = vmatprep.subr.bf16.mxu0 %v807
    %1049 = vmatpush2.bf16.msra.mxu0 %v806
    %1050 = vmatprep.subr.bf16.mxu0 %v805
    %1051 = vmatpush2.bf16.msra.mxu0 %v804
    %1052 = vmatprep.subr.bf16.mxu0 %v803
    %1053 = vmatpush2.bf16.msra.mxu0 %v802
    %1054 = vmatprep.subr.bf16.mxu0 %v801
    %1055 = vmatpush2.bf16.msra.mxu0 %v800
    %1056 = vmatprep.subr.bf16.mxu0 %v799
    %1057 = vmatpush2.bf16.msra.mxu0 %v798
    %1058 = vmatprep.subr.bf16.mxu0 %v797
    %1059 = vmatpush2.bf16.msra.mxu0 %v796
    %1060 = vmatprep.subr.bf16.mxu0 %v795
    %1061 = vmatpush2.bf16.msra.mxu0 %v794
    %1062 = vmatprep.subr.bf16.mxu0 %v793
    %1063 = vmatpush2.bf16.msra.mxu0 %v792
    %1064 = vmatprep.mubr.bf16.mxu0 %v345
    %1065 = vmatmul.mubr.bf16.gmra.mxu0 %v344
    %v1066 = vpop.f32.mrf.mxu0
    %v1067 = vadd.f32 %v265, %v1066
    %v1068 = vpop.f32.mrf.mxu0
    %v1069 = vadd.f32 %v269, %v1068
    %v1070 = vpop.f32.mrf.mxu0
    %v1071 = vadd.f32 %v265, %v1070
    %v1072 = vpop.f32.mrf.mxu0
    %v1073 = vadd.f32 %v269, %v1072
    %1074 = vmatprep.mubr.bf16.mxu0 %v353
    %1075 = vmatmul.mubr.bf16.gmra.mxu0 %v352
    %v1076 = vpop.f32.mrf.mxu0
    %v1077 = vadd.f32 %v265, %v1076
    %v1078 = vpop.f32.mrf.mxu0
    %v1079 = vadd.f32 %v269, %v1078
    %v1080 = vpop.f32.mrf.mxu0
    %v1081 = vadd.f32 %v265, %v1080
    %v1082 = vpop.f32.mrf.mxu0
    %v1083 = vadd.f32 %v269, %v1082
    %1084 = vmatprep.mubr.bf16.mxu0 %v361
    %1085 = vmatmul.mubr.bf16.gmra.mxu0 %v360
    %v1086 = vpop.f32.mrf.mxu0
    %v1087 = vadd.f32 %v265, %v1086
    %v1088 = vpop.f32.mrf.mxu0
    %v1089 = vadd.f32 %v269, %v1088
    %v1090 = vpop.f32.mrf.mxu0
    %v1091 = vadd.f32 %v265, %v1090
    %v1092 = vpop.f32.mrf.mxu0
    %v1093 = vadd.f32 %v269, %v1092
    %1094 = vdwg.mxu0
    %1095 = vmatprep.subr.bf16.mxu0 %v823
    %1096 = vmatpush1.bf16.msra.mxu0 %v822
    %1097 = vmatprep.subr.bf16.mxu0 %v821
    %1098 = vmatpush1.bf16.msra.mxu0 %v820
    %1099 = vmatprep.subr.bf16.mxu0 %v819
    %1100 = vmatpush1.bf16.msra.mxu0 %v818
    %1101 = vmatprep.subr.bf16.mxu0 %v817
    %1102 = vmatpush1.bf16.msra.mxu0 %v816
    %1103 = vmatprep.subr.bf16.mxu0 %v815
    %1104 = vmatpush1.bf16.msra.mxu0 %v814
    %1105 = vmatprep.subr.bf16.mxu0 %v813
    %1106 = vmatpush1.bf16.msra.mxu0 %v812
    %1107 = vmatprep.subr.bf16.mxu0 %v811
    %1108 = vmatpush1.bf16.msra.mxu0 %v810
    %1109 = vmatprep.subr.bf16.mxu0 %v809
    %1110 = vmatpush1.bf16.msra.mxu0 %v808
    %1111 = vmatprep.subr.bf16.mxu0 %v839
    %1112 = vmatpush2.bf16.msra.mxu0 %v838
    %1113 = vmatprep.subr.bf16.mxu0 %v837
    %1114 = vmatpush2.bf16.msra.mxu0 %v836
    %1115 = vmatprep.subr.bf16.mxu0 %v835
    %1116 = vmatpush2.bf16.msra.mxu0 %v834
    %1117 = vmatprep.subr.bf16.mxu0 %v833
    %1118 = vmatpush2.bf16.msra.mxu0 %v832
    %1119 = vmatprep.subr.bf16.mxu0 %v831
    %1120 = vmatpush2.bf16.msra.mxu0 %v830
    %1121 = vmatprep.subr.bf16.mxu0 %v829
    %1122 = vmatpush2.bf16.msra.mxu0 %v828
    %1123 = vmatprep.subr.bf16.mxu0 %v827
    %1124 = vmatpush2.bf16.msra.mxu0 %v826
    %1125 = vmatprep.subr.bf16.mxu0 %v825
    %1126 = vmatpush2.bf16.msra.mxu0 %v824
    %1127 = vmatprep.mubr.bf16.mxu0 %v347
    %1128 = vmatmul.mubr.bf16.gmra.mxu0 %v346
    %v1129 = vpop.f32.mrf.mxu0
    %v1130 = vadd.f32 %v1067, %v1129
    %v1131 = vpop.f32.mrf.mxu0
    %v1132 = vadd.f32 %v1069, %v1131
    %v1133 = vpop.f32.mrf.mxu0
    %v1134 = vadd.f32 %v1071, %v1133
    %v1135 = vpop.f32.mrf.mxu0
    %v1136 = vadd.f32 %v1073, %v1135
    %1137 = vmatprep.mubr.bf16.mxu0 %v355
    %1138 = vmatmul.mubr.bf16.gmra.mxu0 %v354
    %v1139 = vpop.f32.mrf.mxu0
    %v1140 = vadd.f32 %v1077, %v1139
    %v1141 = vpop.f32.mrf.mxu0
    %v1142 = vadd.f32 %v1079, %v1141
    %v1143 = vpop.f32.mrf.mxu0
    %v1144 = vadd.f32 %v1081, %v1143
    %v1145 = vpop.f32.mrf.mxu0
    %v1146 = vadd.f32 %v1083, %v1145
    %1147 = vmatprep.mubr.bf16.mxu0 %v363
    %1148 = vmatmul.mubr.bf16.gmra.mxu0 %v362
    %v1149 = vpop.f32.mrf.mxu0
    %v1150 = vadd.f32 %v1087, %v1149
    %v1151 = vpop.f32.mrf.mxu0
    %v1152 = vadd.f32 %v1089, %v1151
    %v1153 = vpop.f32.mrf.mxu0
    %v1154 = vadd.f32 %v1091, %v1153
    %v1155 = vpop.f32.mrf.mxu0
    %v1156 = vadd.f32 %v1093, %v1155
    %1157 = vdwg.mxu0
    %1158 = vmatprep.subr.bf16.mxu0 %v855
    %1159 = vmatpush1.bf16.msra.mxu0 %v854
    %1160 = vmatprep.subr.bf16.mxu0 %v853
    %1161 = vmatpush1.bf16.msra.mxu0 %v852
    %1162 = vmatprep.subr.bf16.mxu0 %v851
    %1163 = vmatpush1.bf16.msra.mxu0 %v850
    %1164 = vmatprep.subr.bf16.mxu0 %v849
    %1165 = vmatpush1.bf16.msra.mxu0 %v848
    %1166 = vmatprep.subr.bf16.mxu0 %v847
    %1167 = vmatpush1.bf16.msra.mxu0 %v846
    %1168 = vmatprep.subr.bf16.mxu0 %v845
    %1169 = vmatpush1.bf16.msra.mxu0 %v844
    %1170 = vmatprep.subr.bf16.mxu0 %v843
    %1171 = vmatpush1.bf16.msra.mxu0 %v842
    %1172 = vmatprep.subr.bf16.mxu0 %v841
    %1173 = vmatpush1.bf16.msra.mxu0 %v840
    %1174 = vmatprep.subr.bf16.mxu0 %v871
    %1175 = vmatpush2.bf16.msra.mxu0 %v870
    %1176 = vmatprep.subr.bf16.mxu0 %v869
    %1177 = vmatpush2.bf16.msra.mxu0 %v868
    %1178 = vmatprep.subr.bf16.mxu0 %v867
    %1179 = vmatpush2.bf16.msra.mxu0 %v866
    %1180 = vmatprep.subr.bf16.mxu0 %v865
    %1181 = vmatpush2.bf16.msra.mxu0 %v864
    %1182 = vmatprep.subr.bf16.mxu0 %v863
    %1183 = vmatpush2.bf16.msra.mxu0 %v862
    %1184 = vmatprep.subr.bf16.mxu0 %v861
    %1185 = vmatpush2.bf16.msra.mxu0 %v860
    %1186 = vmatprep.subr.bf16.mxu0 %v859
    %1187 = vmatpush2.bf16.msra.mxu0 %v858
    %1188 = vmatprep.subr.bf16.mxu0 %v857
    %1189 = vmatpush2.bf16.msra.mxu0 %v856
    %1190 = vmatprep.mubr.bf16.mxu0 %v349
    %1191 = vmatmul.mubr.bf16.gmra.mxu0 %v348
    %v1192 = vpop.f32.mrf.mxu0
    %v1193 = vadd.f32 %v1130, %v1192
    %v1194 = vpop.f32.mrf.mxu0
    %v1195 = vadd.f32 %v1132, %v1194
    %v1196 = vpop.f32.mrf.mxu0
    %v1197 = vadd.f32 %v1134, %v1196
    %v1198 = vpop.f32.mrf.mxu0
    %v1199 = vadd.f32 %v1136, %v1198
    %1200 = vmatprep.mubr.bf16.mxu0 %v357
    %1201 = vmatmul.mubr.bf16.gmra.mxu0 %v356
    %v1202 = vpop.f32.mrf.mxu0
    %v1203 = vadd.f32 %v1140, %v1202
    %v1204 = vpop.f32.mrf.mxu0
    %v1205 = vadd.f32 %v1142, %v1204
    %v1206 = vpop.f32.mrf.mxu0
    %v1207 = vadd.f32 %v1144, %v1206
    %v1208 = vpop.f32.mrf.mxu0
    %v1209 = vadd.f32 %v1146, %v1208
    %1210 = vmatprep.mubr.bf16.mxu0 %v365
    %1211 = vmatmul.mubr.bf16.gmra.mxu0 %v364
    %v1212 = vpop.f32.mrf.mxu0
    %v1213 = vadd.f32 %v1150, %v1212
    %v1214 = vpop.f32.mrf.mxu0
    %v1215 = vadd.f32 %v1152, %v1214
    %v1216 = vpop.f32.mrf.mxu0
    %v1217 = vadd.f32 %v1154, %v1216
    %v1218 = vpop.f32.mrf.mxu0
    %v1219 = vadd.f32 %v1156, %v1218
    %1220 = vdwg.mxu0
    %1221 = vmatprep.subr.bf16.mxu0 %v887
    %1222 = vmatpush1.bf16.msra.mxu0 %v886
    %1223 = vmatprep.subr.bf16.mxu0 %v885
    %1224 = vmatpush1.bf16.msra.mxu0 %v884
    %1225 = vmatprep.subr.bf16.mxu0 %v883
    %1226 = vmatpush1.bf16.msra.mxu0 %v882
    %1227 = vmatprep.subr.bf16.mxu0 %v881
    %1228 = vmatpush1.bf16.msra.mxu0 %v880
    %1229 = vmatprep.subr.bf16.mxu0 %v879
    %1230 = vmatpush1.bf16.msra.mxu0 %v878
    %1231 = vmatprep.subr.bf16.mxu0 %v877
    %1232 = vmatpush1.bf16.msra.mxu0 %v876
    %1233 = vmatprep.subr.bf16.mxu0 %v875
    %1234 = vmatpush1.bf16.msra.mxu0 %v874
    %1235 = vmatprep.subr.bf16.mxu0 %v873
    %1236 = vmatpush1.bf16.msra.mxu0 %v872
    %1237 = vmatprep.subr.bf16.mxu0 %v903
    %1238 = vmatpush2.bf16.msra.mxu0 %v902
    %1239 = vmatprep.subr.bf16.mxu0 %v901
    %1240 = vmatpush2.bf16.msra.mxu0 %v900
    %1241 = vmatprep.subr.bf16.mxu0 %v899
    %1242 = vmatpush2.bf16.msra.mxu0 %v898
    %1243 = vmatprep.subr.bf16.mxu0 %v897
    %1244 = vmatpush2.bf16.msra.mxu0 %v896
    %1245 = vmatprep.subr.bf16.mxu0 %v895
    %1246 = vmatpush2.bf16.msra.mxu0 %v894
    %1247 = vmatprep.subr.bf16.mxu0 %v893
    %1248 = vmatpush2.bf16.msra.mxu0 %v892
    %1249 = vmatprep.subr.bf16.mxu0 %v891
    %1250 = vmatpush2.bf16.msra.mxu0 %v890
    %1251 = vmatprep.subr.bf16.mxu0 %v889
    %1252 = vmatpush2.bf16.msra.mxu0 %v888
    %1253 = vmatprep.mubr.bf16.mxu0 %v351
    %1254 = vmatmul.mubr.bf16.gmra.mxu0 %v350
    %v1255 = vpop.f32.mrf.mxu0
    %v1256 = vadd.f32 %v1193, %v1255
    %v1257 = vpop.f32.mrf.mxu0
    %v1258 = vadd.f32 %v1195, %v1257
    %v1259 = vpop.f32.mrf.mxu0
    %v1260 = vadd.f32 %v1197, %v1259
    %v1261 = vpop.f32.mrf.mxu0
    %v1262 = vadd.f32 %v1199, %v1261
    %1263 = vmatprep.mubr.bf16.mxu0 %v359
    %1264 = vmatmul.mubr.bf16.gmra.mxu0 %v358
    %v1265 = vpop.f32.mrf.mxu0
    %v1266 = vadd.f32 %v1203, %v1265
    %v1267 = vpop.f32.mrf.mxu0
    %v1268 = vadd.f32 %v1205, %v1267
    %v1269 = vpop.f32.mrf.mxu0
    %v1270 = vadd.f32 %v1207, %v1269
    %v1271 = vpop.f32.mrf.mxu0
    %v1272 = vadd.f32 %v1209, %v1271
    %1273 = vmatprep.mubr.bf16.mxu0 %v367
    %1274 = vmatmul.mubr.bf16.gmra.mxu0 %v366
    %v1275 = vpop.f32.mrf.mxu0
    %v1276 = vadd.f32 %v1213, %v1275
    %v1277 = vpop.f32.mrf.mxu0
    %v1278 = vadd.f32 %v1215, %v1277
    %v1279 = vpop.f32.mrf.mxu0
    %v1280 = vadd.f32 %v1217, %v1279
    %v1281 = vpop.f32.mrf.mxu0
    %v1282 = vadd.f32 %v1219, %v1281
    %1283 = vdwg.mxu0
    %1284 = vst [vmem:[#allocation2] sm:$0xff] %v1256
    %1285 = vst [vmem:[#allocation2 + $0x8] sm:$0xff] %v1258
    %1286 = vst [vmem:[#allocation2 + $0x10] sm:$0xff] %v1260
    %1287 = vst [vmem:[#allocation2 + $0x18] sm:$0xff] %v1262
    %1288 = vst [vmem:[#allocation2 + $0x20] sm:$0xff] %v1266
    %1289 = vst [vmem:[#allocation2 + $0x28] sm:$0xff] %v1268
    %1290 = vst [vmem:[#allocation2 + $0x30] sm:$0xff] %v1270
    %1291 = vst [vmem:[#allocation2 + $0x38] sm:$0xff] %v1272
    %1292 = vst [vmem:[#allocation2 + $0x40] sm:$0xff] %v1276
    %1293 = vst [vmem:[#allocation2 + $0x48] sm:$0xff] %v1278
    %1294 = vst [vmem:[#allocation2 + $0x50] sm:$0xff] %v1280
    %1295 = vst [vmem:[#allocation2 + $0x58] sm:$0xff] %v1282
    %v1296 = vld [vmem:[#allocation3] sm:$0xff]
    %s1297 = scalar_lea.vmem [#allocation3], 8
    %v1298 = vld [vmem:[%s1297] sm:$0xff]
    %v1299 = vld [vmem:[#allocation4] sm:$0xff]
    %s1300 = scalar_lea.vmem [#allocation4], 8
    %v1301 = vld [vmem:[%s1300] sm:$0xff]
    %v1302 = vld [vmem:[#allocation2] sm:$0xff]
    %v1303 = vld [vmem:[#allocation2 + $0x8] sm:$0xff]
    %v1304 = vpack.c.bf16 %v1296, %v1296
    %v1305 = vld [vmem:[#allocation10] sm:$0xff]
    %v1306 = vld [vmem:[#allocation10 + $0x8] sm:$0xff]
    %v1307 = vld [vmem:[#allocation10 + $0x10] sm:$0xff]
    %v1308 = vld [vmem:[#allocation10 + $0x18] sm:$0xff]
    %v1309 = vld [vmem:[#allocation10 + $0x20] sm:$0xff]
    %v1310 = vld [vmem:[#allocation10 + $0x28] sm:$0xff]
    %v1311 = vld [vmem:[#allocation10 + $0x30] sm:$0xff]
    %v1312 = vld [vmem:[#allocation10 + $0x38] sm:$0xff]
    %v1321 = vunpack.c.l.b16 %v1305
    %v1322 = vunpack.c.h.b16 %v1305
    %v1323 = vunpack.c.l.b16 %v1306
    %v1324 = vunpack.c.h.b16 %v1306
    %v1325 = vunpack.c.l.b16 %v1307
    %v1326 = vunpack.c.h.b16 %v1307
    %v1327 = vunpack.c.l.b16 %v1308
    %v1328 = vunpack.c.h.b16 %v1308
    %v1329 = vunpack.c.l.b16 %v1309
    %v1330 = vunpack.c.h.b16 %v1309
    %v1331 = vunpack.c.l.b16 %v1310
    %v1332 = vunpack.c.h.b16 %v1310
    %v1333 = vunpack.c.l.b16 %v1311
    %v1334 = vunpack.c.h.b16 %v1311
    %v1335 = vunpack.c.l.b16 %v1312
    %v1336 = vunpack.c.h.b16 %v1312
    %v1337 = vpack.c.b16 %v1323, %v1321
    %v1338 = vpack.c.b16 %v1324, %v1322
    %v1339 = vpack.c.b16 %v1327, %v1325
    %v1340 = vpack.c.b16 %v1328, %v1326
    %v1341 = vpack.c.b16 %v1331, %v1329
    %v1342 = vpack.c.b16 %v1332, %v1330
    %v1343 = vpack.c.b16 %v1335, %v1333
    %v1344 = vpack.c.b16 %v1336, %v1334
    %vm1353 = vcmask 523264
    %v1355 = vsel %vm1353, %v1304, 0
    %1357 = vmatprep.subr.bf16.mxu0 0
    %1358 = vmatpush1.bf16.msra.mxu0 0
    %1359 = vmatprep.subr.bf16.mxu0 0
    %1360 = vmatpush1.bf16.msra.mxu0 0
    %1361 = vmatprep.subr.bf16.mxu0 0
    %1362 = vmatpush1.bf16.msra.mxu0 0
    %1363 = vmatprep.subr.bf16.mxu0 0
    %1364 = vmatpush1.bf16.msra.mxu0 0
    %1365 = vmatprep.subr.bf16.mxu0 %v1344
    %1366 = vmatpush1.bf16.msra.mxu0 %v1343
    %1367 = vmatprep.subr.bf16.mxu0 %v1342
    %1368 = vmatpush1.bf16.msra.mxu0 %v1341
    %1369 = vmatprep.subr.bf16.mxu0 %v1340
    %1370 = vmatpush1.bf16.msra.mxu0 %v1339
    %1371 = vmatprep.subr.bf16.mxu0 %v1338
    %1372 = vmatpush1.bf16.msra.mxu0 %v1337
    %1373 = vmatprep.subr.bf16.mxu0 0
    %1374 = vmatpush2.bf16.msra.mxu0 0
    %1375 = vmatprep.subr.bf16.mxu0 0
    %1376 = vmatpush2.bf16.msra.mxu0 0
    %1377 = vmatprep.subr.bf16.mxu0 0
    %1378 = vmatpush2.bf16.msra.mxu0 0
    %1379 = vmatprep.subr.bf16.mxu0 0
    %1380 = vmatpush2.bf16.msra.mxu0 0
    %1381 = vmatprep.subr.bf16.mxu0 0
    %1382 = vmatpush2.bf16.msra.mxu0 0
    %1383 = vmatprep.subr.bf16.mxu0 0
    %1384 = vmatpush2.bf16.msra.mxu0 0
    %1385 = vmatprep.subr.bf16.mxu0 0
    %1386 = vmatpush2.bf16.msra.mxu0 0
    %1387 = vmatprep.subr.bf16.mxu0 0
    %1388 = vmatpush2.bf16.msra.mxu0 0
    %1389 = vmatprep.mubr.bf16.mxu0 0
    %1390 = vmatmul.mubr.bf16.gmra.mxu0 %v1355
    %v1391 = vpop.f32.mrf.mxu0
    %v1392 = vadd.f32 0.0, %v1391
    %v1393 = vpop.f32.mrf.mxu0
    %v1394 = vadd.f32 0.0, %v1393
    %v1395 = vpop.f32.mrf.mxu0
    %v1396 = vpop.f32.mrf.mxu0
    %1397 = vdwg.mxu0
    %v1398 = vadd.f32 %v1302, %v1392
    %v1399 = vadd.f32 %v1303, %v1394
    %v1400 = vxor.u32 %v1398, 2147483648
    %v1401 = vxor.u32 %v1399, 2147483648
    %v1402 = vmul.f32 %v1400, 1.442695
    %v1403 = vpow.pop %v1402
    %v1404 = vmul.f32 %v1401, 1.442695
    %v1405 = vpow.pop %v1404
    %v1406 = vadd.f32 %v1403, 1.0
    %v1407 = vadd.f32 %v1405, 1.0
    %v1408 = vrcp.pop %v1406
    %v1409 = vmul.f32 1.0, %v1408
    %v1410 = vrcp.pop %v1407
    %v1411 = vmul.f32 1.0, %v1410
    %v1412 = vtanh.pop %v1399
    %1414 = vrot.lane.b32.xlu0 %v1299, 64
    %v1415 = vpop.permute.xlu0 %1414
    %v1417 = vmul.f32 %v1409, %v1415
    %1419 = vrot.lane.b32.xlu0 %v1412, 64
    %v1420 = vpop.permute.xlu0 %1419
    %v1422 = vmul.f32 %v1409, %v1420
    %1424 = vrot.lane.b32.xlu0 %v1422, 64
    %v1425 = vpop.permute.xlu0 %1424
    %v1427 = vadd.f32 %v1417, %v1425
    %v1428 = vtanh.pop %v1427
    %1430 = vrot.lane.b32.xlu0 %v1428, 64
    %v1431 = vpop.permute.xlu0 %1430
    %v1433 = vmul.f32 %v1411, %v1431
    %v1434 = vpack.c.bf16 %v1433, %v1433
    %v1435 = vpack.c.bf16 %v1298, %v1298
    %v1436 = vld [vmem:[#allocation11] sm:$0xff]
    %v1437 = vld [vmem:[#allocation11 + $0x8] sm:$0xff]
    %v1438 = vld [vmem:[#allocation11 + $0x10] sm:$0xff]
    %v1439 = vld [vmem:[#allocation11 + $0x18] sm:$0xff]
    %v1440 = vld [vmem:[#allocation11 + $0x20] sm:$0xff]
    %v1441 = vld [vmem:[#allocation11 + $0x28] sm:$0xff]
    %v1442 = vld [vmem:[#allocation11 + $0x30] sm:$0xff]
    %v1443 = vld [vmem:[#allocation11 + $0x38] sm:$0xff]
    %v1452 = vunpack.c.l.b16 %v1436
    %v1453 = vunpack.c.h.b16 %v1436
    %v1454 = vunpack.c.l.b16 %v1437
    %v1455 = vunpack.c.h.b16 %v1437
    %v1456 = vunpack.c.l.b16 %v1438
    %v1457 = vunpack.c.h.b16 %v1438
    %v1458 = vunpack.c.l.b16 %v1439
    %v1459 = vunpack.c.h.b16 %v1439
    %v1460 = vunpack.c.l.b16 %v1440
    %v1461 = vunpack.c.h.b16 %v1440
    %v1462 = vunpack.c.l.b16 %v1441
    %v1463 = vunpack.c.h.b16 %v1441
    %v1464 = vunpack.c.l.b16 %v1442
    %v1465 = vunpack.c.h.b16 %v1442
    %v1466 = vunpack.c.l.b16 %v1443
    %v1467 = vunpack.c.h.b16 %v1443
    %v1468 = vpack.c.b16 %v1454, %v1452
    %v1469 = vpack.c.b16 %v1455, %v1453
    %v1470 = vpack.c.b16 %v1458, %v1456
    %v1471 = vpack.c.b16 %v1459, %v1457
    %v1472 = vpack.c.b16 %v1462, %v1460
    %v1473 = vpack.c.b16 %v1463, %v1461
    %v1474 = vpack.c.b16 %v1466, %v1464
    %v1475 = vpack.c.b16 %v1467, %v1465
    %v1485 = vsel %vm1353, %v1435, 0
    %1487 = vmatprep.subr.bf16.mxu0 0
    %1488 = vmatpush1.bf16.msra.mxu0 0
    %1489 = vmatprep.subr.bf16.mxu0 0
    %1490 = vmatpush1.bf16.msra.mxu0 0
    %1491 = vmatprep.subr.bf16.mxu0 0
    %1492 = vmatpush1.bf16.msra.mxu0 0
    %1493 = vmatprep.subr.bf16.mxu0 0
    %1494 = vmatpush1.bf16.msra.mxu0 0
    %1495 = vmatprep.subr.bf16.mxu0 %v1475
    %1496 = vmatpush1.bf16.msra.mxu0 %v1474
    %1497 = vmatprep.subr.bf16.mxu0 %v1473
    %1498 = vmatpush1.bf16.msra.mxu0 %v1472
    %1499 = vmatprep.subr.bf16.mxu0 %v1471
    %1500 = vmatpush1.bf16.msra.mxu0 %v1470
    %1501 = vmatprep.subr.bf16.mxu0 %v1469
    %1502 = vmatpush1.bf16.msra.mxu0 %v1468
    %1503 = vmatprep.subr.bf16.mxu0 0
    %1504 = vmatpush2.bf16.msra.mxu0 0
    %1505 = vmatprep.subr.bf16.mxu0 0
    %1506 = vmatpush2.bf16.msra.mxu0 0
    %1507 = vmatprep.subr.bf16.mxu0 0
    %1508 = vmatpush2.bf16.msra.mxu0 0
    %1509 = vmatprep.subr.bf16.mxu0 0
    %1510 = vmatpush2.bf16.msra.mxu0 0
    %1511 = vmatprep.subr.bf16.mxu0 0
    %1512 = vmatpush2.bf16.msra.mxu0 0
    %1513 = vmatprep.subr.bf16.mxu0 0
    %1514 = vmatpush2.bf16.msra.mxu0 0
    %1515 = vmatprep.subr.bf16.mxu0 0
    %1516 = vmatpush2.bf16.msra.mxu0 0
    %1517 = vmatprep.subr.bf16.mxu0 0
    %1518 = vmatpush2.bf16.msra.mxu0 0
    %1519 = vmatprep.mubr.bf16.mxu0 0
    %1520 = vmatmul.mubr.bf16.gmra.mxu0 %v1485
    %v1521 = vpop.f32.mrf.mxu0
    %v1522 = vadd.f32 0.0, %v1521
    %v1523 = vpop.f32.mrf.mxu0
    %v1524 = vadd.f32 0.0, %v1523
    %v1525 = vpop.f32.mrf.mxu0
    %v1526 = vpop.f32.mrf.mxu0
    %1527 = vdwg.mxu0
    %v1528 = vld [vmem:[#allocation13] sm:$0xff]
    %v1529 = vld [vmem:[#allocation13 + $0x8] sm:$0xff]
    %v1530 = vld [vmem:[#allocation13 + $0x10] sm:$0xff]
    %v1531 = vld [vmem:[#allocation13 + $0x18] sm:$0xff]
    %v1532 = vld [vmem:[#allocation13 + $0x20] sm:$0xff]
    %v1533 = vld [vmem:[#allocation13 + $0x28] sm:$0xff]
    %v1534 = vld [vmem:[#allocation13 + $0x30] sm:$0xff]
    %v1535 = vld [vmem:[#allocation13 + $0x38] sm:$0xff]
    %v1544 = vunpack.c.l.b16 %v1528
    %v1545 = vunpack.c.h.b16 %v1528
    %v1546 = vunpack.c.l.b16 %v1529
    %v1547 = vunpack.c.h.b16 %v1529
    %v1548 = vunpack.c.l.b16 %v1530
    %v1549 = vunpack.c.h.b16 %v1530
    %v1550 = vunpack.c.l.b16 %v1531
    %v1551 = vunpack.c.h.b16 %v1531
    %v1552 = vunpack.c.l.b16 %v1532
    %v1553 = vunpack.c.h.b16 %v1532
    %v1554 = vunpack.c.l.b16 %v1533
    %v1555 = vunpack.c.h.b16 %v1533
    %v1556 = vunpack.c.l.b16 %v1534
    %v1557 = vunpack.c.h.b16 %v1534
    %v1558 = vunpack.c.l.b16 %v1535
    %v1559 = vunpack.c.h.b16 %v1535
    %v1560 = vpack.c.b16 %v1546, %v1544
    %v1561 = vpack.c.b16 %v1547, %v1545
    %v1562 = vpack.c.b16 %v1550, %v1548
    %v1563 = vpack.c.b16 %v1551, %v1549
    %v1564 = vpack.c.b16 %v1554, %v1552
    %v1565 = vpack.c.b16 %v1555, %v1553
    %v1566 = vpack.c.b16 %v1558, %v1556
    %v1567 = vpack.c.b16 %v1559, %v1557
    %v1577 = vsel %vm1353, %v1434, 0
    %1579 = vmatprep.subr.bf16.mxu0 0
    %1580 = vmatpush1.bf16.msra.mxu0 0
    %1581 = vmatprep.subr.bf16.mxu0 0
    %1582 = vmatpush1.bf16.msra.mxu0 0
    %1583 = vmatprep.subr.bf16.mxu0 0
    %1584 = vmatpush1.bf16.msra.mxu0 0
    %1585 = vmatprep.subr.bf16.mxu0 0
    %1586 = vmatpush1.bf16.msra.mxu0 0
    %1587 = vmatprep.subr.bf16.mxu0 %v1567
    %1588 = vmatpush1.bf16.msra.mxu0 %v1566
    %1589 = vmatprep.subr.bf16.mxu0 %v1565
    %1590 = vmatpush1.bf16.msra.mxu0 %v1564
    %1591 = vmatprep.subr.bf16.mxu0 %v1563
    %1592 = vmatpush1.bf16.msra.mxu0 %v1562
    %1593 = vmatprep.subr.bf16.mxu0 %v1561
    %1594 = vmatpush1.bf16.msra.mxu0 %v1560
    %1595 = vmatprep.subr.bf16.mxu0 0
    %1596 = vmatpush2.bf16.msra.mxu0 0
    %1597 = vmatprep.subr.bf16.mxu0 0
    %1598 = vmatpush2.bf16.msra.mxu0 0
    %1599 = vmatprep.subr.bf16.mxu0 0
    %1600 = vmatpush2.bf16.msra.mxu0 0
    %1601 = vmatprep.subr.bf16.mxu0 0
    %1602 = vmatpush2.bf16.msra.mxu0 0
    %1603 = vmatprep.subr.bf16.mxu0 0
    %1604 = vmatpush2.bf16.msra.mxu0 0
    %1605 = vmatprep.subr.bf16.mxu0 0
    %1606 = vmatpush2.bf16.msra.mxu0 0
    %1607 = vmatprep.subr.bf16.mxu0 0
    %1608 = vmatpush2.bf16.msra.mxu0 0
    %1609 = vmatprep.subr.bf16.mxu0 0
    %1610 = vmatpush2.bf16.msra.mxu0 0
    %1611 = vmatprep.mubr.bf16.mxu0 0
    %1612 = vmatmul.mubr.bf16.gmra.mxu0 %v1577
    %v1613 = vpop.f32.mrf.mxu0
    %v1614 = vadd.f32 %v1522, %v1613
    %v1615 = vpop.f32.mrf.mxu0
    %v1616 = vadd.f32 %v1524, %v1615
    %v1617 = vpop.f32.mrf.mxu0
    %v1618 = vpop.f32.mrf.mxu0
    %1619 = vdwg.mxu0
    %v1620 = vld [vmem:[%s6] sm:$0x3]
    %v1622 = vlaneseq
    %v1623 = vshrl.u32 %v1622, 7
    %v1624 = vsub.s32 0, %v1623
    %v1625 = vrot.slane %v1620, %v1624
    %v1626 = vlaneseq
    %v1627 = vshrl.u32 %v1626, 7
    %v1628 = vsub.s32 1, %v1627
    %v1629 = vrot.slane %v1620, %v1628
    %v1632 = vadd.f32 %v1614, %v1625
    %v1633 = vadd.f32 %v1616, %v1629
    %v1634 = vxor.u32 %v1632, 2147483648
    %v1635 = vxor.u32 %v1633, 2147483648
    %v1636 = vmul.f32 %v1634, 1.442695
    %v1637 = vpow.pop %v1636
    %v1638 = vmul.f32 %v1635, 1.442695
    %v1639 = vpow.pop %v1638
    %v1640 = vadd.f32 %v1637, 1.0
    %v1641 = vadd.f32 %v1639, 1.0
    %v1642 = vrcp.pop %v1640
    %v1643 = vmul.f32 1.0, %v1642
    %v1644 = vrcp.pop %v1641
    %v1645 = vmul.f32 1.0, %v1644
    %v1646 = vtanh.pop %v1633
    %1648 = vrot.lane.b32.xlu0 %v1301, 64
    %v1649 = vpop.permute.xlu0 %1648
    %v1651 = vmul.f32 %v1643, %v1649
    %1653 = vrot.lane.b32.xlu0 %v1646, 64
    %v1654 = vpop.permute.xlu0 %1653
    %v1656 = vmul.f32 %v1643, %v1654
    %1658 = vrot.lane.b32.xlu0 %v1656, 64
    %v1659 = vpop.permute.xlu0 %1658
    %v1661 = vadd.f32 %v1651, %v1659
    %v1662 = vtanh.pop %v1661
    %1664 = vrot.lane.b32.xlu0 %v1662, 64
    %v1665 = vpop.permute.xlu0 %1664
    %v1667 = vmul.f32 %v1645, %v1665
    %s1668 = scalar_lea.vmem [#allocation2], 16
    %v1669 = vld [vmem:[%s1668] sm:$0xff]
    %v1670 = vld [vmem:[%s1668 + $0x8] sm:$0xff]
    %1671 = vmatprep.subr.bf16.mxu0 0
    %1672 = vmatpush1.bf16.msra.mxu0 0
    %1673 = vmatprep.subr.bf16.mxu0 0
    %1674 = vmatpush1.bf16.msra.mxu0 0
    %1675 = vmatprep.subr.bf16.mxu0 0
    %1676 = vmatpush1.bf16.msra.mxu0 0
    %1677 = vmatprep.subr.bf16.mxu0 0
    %1678 = vmatpush1.bf16.msra.mxu0 0
    %1679 = vmatprep.subr.bf16.mxu0 %v1344
    %1680 = vmatpush1.bf16.msra.mxu0 %v1343
    %1681 = vmatprep.subr.bf16.mxu0 %v1342
    %1682 = vmatpush1.bf16.msra.mxu0 %v1341
    %1683 = vmatprep.subr.bf16.mxu0 %v1340
    %1684 = vmatpush1.bf16.msra.mxu0 %v1339
    %1685 = vmatprep.subr.bf16.mxu0 %v1338
    %1686 = vmatpush1.bf16.msra.mxu0 %v1337
    %1687 = vmatprep.subr.bf16.mxu0 0
    %1688 = vmatpush2.bf16.msra.mxu0 0
    %1689 = vmatprep.subr.bf16.mxu0 0
    %1690 = vmatpush2.bf16.msra.mxu0 0
    %1691 = vmatprep.subr.bf16.mxu0 0
    %1692 = vmatpush2.bf16.msra.mxu0 0
    %1693 = vmatprep.subr.bf16.mxu0 0
    %1694 = vmatpush2.bf16.msra.mxu0 0
    %1695 = vmatprep.subr.bf16.mxu0 0
    %1696 = vmatpush2.bf16.msra.mxu0 0
    %1697 = vmatprep.subr.bf16.mxu0 0
    %1698 = vmatpush2.bf16.msra.mxu0 0
    %1699 = vmatprep.subr.bf16.mxu0 0
    %1700 = vmatpush2.bf16.msra.mxu0 0
    %1701 = vmatprep.subr.bf16.mxu0 0
    %1702 = vmatpush2.bf16.msra.mxu0 0
    %1703 = vmatprep.mubr.bf16.mxu0 0
    %1704 = vmatmul.mubr.bf16.gmra.mxu0 %v1577
    %v1705 = vpop.f32.mrf.mxu0
    %v1706 = vadd.f32 0.0, %v1705
    %v1707 = vpop.f32.mrf.mxu0
    %v1708 = vadd.f32 0.0, %v1707
    %v1709 = vpop.f32.mrf.mxu0
    %v1710 = vpop.f32.mrf.mxu0
    %1711 = vdwg.mxu0
    %v1712 = vadd.f32 %v1669, %v1706
    %v1713 = vadd.f32 %v1670, %v1708
    %v1714 = vxor.u32 %v1712, 2147483648
    %v1715 = vxor.u32 %v1713, 2147483648
    %v1716 = vmul.f32 %v1714, 1.442695
    %v1717 = vpow.pop %v1716
    %v1718 = vmul.f32 %v1715, 1.442695
    %v1719 = vpow.pop %v1718
    %v1720 = vadd.f32 %v1717, 1.0
    %v1721 = vadd.f32 %v1719, 1.0
    %v1722 = vrcp.pop %v1720
    %v1723 = vmul.f32 1.0, %v1722
    %v1724 = vrcp.pop %v1721
    %v1725 = vmul.f32 1.0, %v1724
    %v1726 = vtanh.pop %v1713
    %v1727 = vmul.f32 %v1723, %v1427
    %1729 = vrot.lane.b32.xlu0 %v1726, 64
    %v1730 = vpop.permute.xlu0 %1729
    %v1732 = vmul.f32 %v1723, %v1730
    %1734 = vrot.lane.b32.xlu0 %v1732, 64
    %v1735 = vpop.permute.xlu0 %1734
    %v1737 = vadd.f32 %v1727, %v1735
    %v1738 = vtanh.pop %v1737
    %1740 = vrot.lane.b32.xlu0 %v1738, 64
    %v1741 = vpop.permute.xlu0 %1740
    %v1743 = vmul.f32 %v1725, %v1741
    %v1744 = vpack.c.bf16 %v1743, %v1743
    %v1745 = vpack.c.bf16 %v1667, %v1667
    %v1747 = vsel %vm1353, %v1745, 0
    %1749 = vmatprep.subr.bf16.mxu0 0
    %1750 = vmatpush1.bf16.msra.mxu0 0
    %1751 = vmatprep.subr.bf16.mxu0 0
    %1752 = vmatpush1.bf16.msra.mxu0 0
    %1753 = vmatprep.subr.bf16.mxu0 0
    %1754 = vmatpush1.bf16.msra.mxu0 0
    %1755 = vmatprep.subr.bf16.mxu0 0
    %1756 = vmatpush1.bf16.msra.mxu0 0
    %1757 = vmatprep.subr.bf16.mxu0 %v1475
    %1758 = vmatpush1.bf16.msra.mxu0 %v1474
    %1759 = vmatprep.subr.bf16.mxu0 %v1473
    %1760 = vmatpush1.bf16.msra.mxu0 %v1472
    %1761 = vmatprep.subr.bf16.mxu0 %v1471
    %1762 = vmatpush1.bf16.msra.mxu0 %v1470
    %1763 = vmatprep.subr.bf16.mxu0 %v1469
    %1764 = vmatpush1.bf16.msra.mxu0 %v1468
    %1765 = vmatprep.subr.bf16.mxu0 0
    %1766 = vmatpush2.bf16.msra.mxu0 0
    %1767 = vmatprep.subr.bf16.mxu0 0
    %1768 = vmatpush2.bf16.msra.mxu0 0
    %1769 = vmatprep.subr.bf16.mxu0 0
    %1770 = vmatpush2.bf16.msra.mxu0 0
    %1771 = vmatprep.subr.bf16.mxu0 0
    %1772 = vmatpush2.bf16.msra.mxu0 0
    %1773 = vmatprep.subr.bf16.mxu0 0
    %1774 = vmatpush2.bf16.msra.mxu0 0
    %1775 = vmatprep.subr.bf16.mxu0 0
    %1776 = vmatpush2.bf16.msra.mxu0 0
    %1777 = vmatprep.subr.bf16.mxu0 0
    %1778 = vmatpush2.bf16.msra.mxu0 0
    %1779 = vmatprep.subr.bf16.mxu0 0
    %1780 = vmatpush2.bf16.msra.mxu0 0
    %1781 = vmatprep.mubr.bf16.mxu0 0
    %1782 = vmatmul.mubr.bf16.gmra.mxu0 %v1747
    %v1783 = vpop.f32.mrf.mxu0
    %v1784 = vadd.f32 0.0, %v1783
    %v1785 = vpop.f32.mrf.mxu0
    %v1786 = vadd.f32 0.0, %v1785
    %v1787 = vpop.f32.mrf.mxu0
    %v1788 = vpop.f32.mrf.mxu0
    %1789 = vdwg.mxu0
    %v1791 = vsel %vm1353, %v1744, 0
    %1793 = vmatprep.subr.bf16.mxu0 0
    %1794 = vmatpush1.bf16.msra.mxu0 0
    %1795 = vmatprep.subr.bf16.mxu0 0
    %1796 = vmatpush1.bf16.msra.mxu0 0
    %1797 = vmatprep.subr.bf16.mxu0 0
    %1798 = vmatpush1.bf16.msra.mxu0 0
    %1799 = vmatprep.subr.bf16.mxu0 0
    %1800 = vmatpush1.bf16.msra.mxu0 0
    %1801 = vmatprep.subr.bf16.mxu0 %v1567
    %1802 = vmatpush1.bf16.msra.mxu0 %v1566
    %1803 = vmatprep.subr.bf16.mxu0 %v1565
    %1804 = vmatpush1.bf16.msra.mxu0 %v1564
    %1805 = vmatprep.subr.bf16.mxu0 %v1563
    %1806 = vmatpush1.bf16.msra.mxu0 %v1562
    %1807 = vmatprep.subr.bf16.mxu0 %v1561
    %1808 = vmatpush1.bf16.msra.mxu0 %v1560
    %1809 = vmatprep.subr.bf16.mxu0 0
    %1810 = vmatpush2.bf16.msra.mxu0 0
    %1811 = vmatprep.subr.bf16.mxu0 0
    %1812 = vmatpush2.bf16.msra.mxu0 0
    %1813 = vmatprep.subr.bf16.mxu0 0
    %1814 = vmatpush2.bf16.msra.mxu0 0
    %1815 = vmatprep.subr.bf16.mxu0 0
    %1816 = vmatpush2.bf16.msra.mxu0 0
    %1817 = vmatprep.subr.bf16.mxu0 0
    %1818 = vmatpush2.bf16.msra.mxu0 0
    %1819 = vmatprep.subr.bf16.mxu0 0
    %1820 = vmatpush2.bf16.msra.mxu0 0
    %1821 = vmatprep.subr.bf16.mxu0 0
    %1822 = vmatpush2.bf16.msra.mxu0 0
    %1823 = vmatprep.subr.bf16.mxu0 0
    %1824 = vmatpush2.bf16.msra.mxu0 0
    %1825 = vmatprep.mubr.bf16.mxu0 0
    %1826 = vmatmul.mubr.bf16.gmra.mxu0 %v1791
    %v1827 = vpop.f32.mrf.mxu0
    %v1828 = vadd.f32 %v1784, %v1827
    %v1829 = vpop.f32.mrf.mxu0
    %v1830 = vadd.f32 %v1786, %v1829
    %v1831 = vpop.f32.mrf.mxu0
    %v1832 = vpop.f32.mrf.mxu0
    %1833 = vdwg.mxu0
    %v1834 = vadd.f32 %v1828, %v1625
    %v1835 = vadd.f32 %v1830, %v1629
    %v1836 = vxor.u32 %v1834, 2147483648
    %v1837 = vxor.u32 %v1835, 2147483648
    %v1838 = vmul.f32 %v1836, 1.442695
    %v1839 = vpow.pop %v1838
    %v1840 = vmul.f32 %v1837, 1.442695
    %v1841 = vpow.pop %v1840
    %v1842 = vadd.f32 %v1839, 1.0
    %v1843 = vadd.f32 %v1841, 1.0
    %v1844 = vrcp.pop %v1842
    %v1845 = vmul.f32 1.0, %v1844
    %v1846 = vrcp.pop %v1843
    %v1847 = vmul.f32 1.0, %v1846
    %v1848 = vtanh.pop %v1835
    %v1849 = vmul.f32 %v1845, %v1661
    %1851 = vrot.lane.b32.xlu0 %v1848, 64
    %v1852 = vpop.permute.xlu0 %1851
    %v1854 = vmul.f32 %v1845, %v1852
    %1856 = vrot.lane.b32.xlu0 %v1854, 64
    %v1857 = vpop.permute.xlu0 %1856
    %v1859 = vadd.f32 %v1849, %v1857
    %v1860 = vtanh.pop %v1859
    %1862 = vrot.lane.b32.xlu0 %v1860, 64
    %v1863 = vpop.permute.xlu0 %1862
    %v1865 = vmul.f32 %v1847, %v1863
    %s1866 = scalar_lea.vmem [#allocation2], 32
    %v1867 = vld [vmem:[%s1866] sm:$0xff]
    %v1868 = vld [vmem:[%s1866 + $0x8] sm:$0xff]
    %1869 = vmatprep.subr.bf16.mxu0 0
    %1870 = vmatpush1.bf16.msra.mxu0 0
    %1871 = vmatprep.subr.bf16.mxu0 0
    %1872 = vmatpush1.bf16.msra.mxu0 0
    %1873 = vmatprep.subr.bf16.mxu0 0
    %1874 = vmatpush1.bf16.msra.mxu0 0
    %1875 = vmatprep.subr.bf16.mxu0 0
    %1876 = vmatpush1.bf16.msra.mxu0 0
    %1877 = vmatprep.subr.bf16.mxu0 %v1344
    %1878 = vmatpush1.bf16.msra.mxu0 %v1343
    %1879 = vmatprep.subr.bf16.mxu0 %v1342
    %1880 = vmatpush1.bf16.msra.mxu0 %v1341
    %1881 = vmatprep.subr.bf16.mxu0 %v1340
    %1882 = vmatpush1.bf16.msra.mxu0 %v1339
    %1883 = vmatprep.subr.bf16.mxu0 %v1338
    %1884 = vmatpush1.bf16.msra.mxu0 %v1337
    %1885 = vmatprep.subr.bf16.mxu0 0
    %1886 = vmatpush2.bf16.msra.mxu0 0
    %1887 = vmatprep.subr.bf16.mxu0 0
    %1888 = vmatpush2.bf16.msra.mxu0 0
    %1889 = vmatprep.subr.bf16.mxu0 0
    %1890 = vmatpush2.bf16.msra.mxu0 0
    %1891 = vmatprep.subr.bf16.mxu0 0
    %1892 = vmatpush2.bf16.msra.mxu0 0
    %1893 = vmatprep.subr.bf16.mxu0 0
    %1894 = vmatpush2.bf16.msra.mxu0 0
    %1895 = vmatprep.subr.bf16.mxu0 0
    %1896 = vmatpush2.bf16.msra.mxu0 0
    %1897 = vmatprep.subr.bf16.mxu0 0
    %1898 = vmatpush2.bf16.msra.mxu0 0
    %1899 = vmatprep.subr.bf16.mxu0 0
    %1900 = vmatpush2.bf16.msra.mxu0 0
    %1901 = vmatprep.mubr.bf16.mxu0 0
    %1902 = vmatmul.mubr.bf16.gmra.mxu0 %v1791
    %v1903 = vpop.f32.mrf.mxu0
    %v1904 = vadd.f32 0.0, %v1903
    %v1905 = vpop.f32.mrf.mxu0
    %v1906 = vadd.f32 0.0, %v1905
    %v1907 = vpop.f32.mrf.mxu0
    %v1908 = vpop.f32.mrf.mxu0
    %1909 = vdwg.mxu0
    %v1910 = vadd.f32 %v1867, %v1904
    %v1911 = vadd.f32 %v1868, %v1906
    %v1912 = vxor.u32 %v1910, 2147483648
    %v1913 = vxor.u32 %v1911, 2147483648
    %v1914 = vmul.f32 %v1912, 1.442695
    %v1915 = vpow.pop %v1914
    %v1916 = vmul.f32 %v1913, 1.442695
    %v1917 = vpow.pop %v1916
    %v1918 = vadd.f32 %v1915, 1.0
    %v1919 = vadd.f32 %v1917, 1.0
    %v1920 = vrcp.pop %v1918
    %v1921 = vmul.f32 1.0, %v1920
    %v1922 = vrcp.pop %v1919
    %v1923 = vmul.f32 1.0, %v1922
    %v1924 = vtanh.pop %v1911
    %v1925 = vmul.f32 %v1921, %v1737
    %1927 = vrot.lane.b32.xlu0 %v1924, 64
    %v1928 = vpop.permute.xlu0 %1927
    %v1930 = vmul.f32 %v1921, %v1928
    %1932 = vrot.lane.b32.xlu0 %v1930, 64
    %v1933 = vpop.permute.xlu0 %1932
    %v1935 = vadd.f32 %v1925, %v1933
    %v1936 = vtanh.pop %v1935
    %1938 = vrot.lane.b32.xlu0 %v1936, 64
    %v1939 = vpop.permute.xlu0 %1938
    %v1941 = vmul.f32 %v1923, %v1939
    %v1942 = vpack.c.bf16 %v1941, %v1941
    %v1943 = vpack.c.bf16 %v1865, %v1865
    %v1945 = vsel %vm1353, %v1943, 0
    %1947 = vmatprep.subr.bf16.mxu0 0
    %1948 = vmatpush1.bf16.msra.mxu0 0
    %1949 = vmatprep.subr.bf16.mxu0 0
    %1950 = vmatpush1.bf16.msra.mxu0 0
    %1951 = vmatprep.subr.bf16.mxu0 0
    %1952 = vmatpush1.bf16.msra.mxu0 0
    %1953 = vmatprep.subr.bf16.mxu0 0
    %1954 = vmatpush1.bf16.msra.mxu0 0
    %1955 = vmatprep.subr.bf16.mxu0 %v1475
    %1956 = vmatpush1.bf16.msra.mxu0 %v1474
    %1957 = vmatprep.subr.bf16.mxu0 %v1473
    %1958 = vmatpush1.bf16.msra.mxu0 %v1472
    %1959 = vmatprep.subr.bf16.mxu0 %v1471
    %1960 = vmatpush1.bf16.msra.mxu0 %v1470
    %1961 = vmatprep.subr.bf16.mxu0 %v1469
    %1962 = vmatpush1.bf16.msra.mxu0 %v1468
    %1963 = vmatprep.subr.bf16.mxu0 0
    %1964 = vmatpush2.bf16.msra.mxu0 0
    %1965 = vmatprep.subr.bf16.mxu0 0
    %1966 = vmatpush2.bf16.msra.mxu0 0
    %1967 = vmatprep.subr.bf16.mxu0 0
    %1968 = vmatpush2.bf16.msra.mxu0 0
    %1969 = vmatprep.subr.bf16.mxu0 0
    %1970 = vmatpush2.bf16.msra.mxu0 0
    %1971 = vmatprep.subr.bf16.mxu0 0
    %1972 = vmatpush2.bf16.msra.mxu0 0
    %1973 = vmatprep.subr.bf16.mxu0 0
    %1974 = vmatpush2.bf16.msra.mxu0 0
    %1975 = vmatprep.subr.bf16.mxu0 0
    %1976 = vmatpush2.bf16.msra.mxu0 0
    %1977 = vmatprep.subr.bf16.mxu0 0
    %1978 = vmatpush2.bf16.msra.mxu0 0
    %1979 = vmatprep.mubr.bf16.mxu0 0
    %1980 = vmatmul.mubr.bf16.gmra.mxu0 %v1945
    %v1981 = vpop.f32.mrf.mxu0
    %v1982 = vadd.f32 0.0, %v1981
    %v1983 = vpop.f32.mrf.mxu0
    %v1984 = vadd.f32 0.0, %v1983
    %v1985 = vpop.f32.mrf.mxu0
    %v1986 = vpop.f32.mrf.mxu0
    %1987 = vdwg.mxu0
    %v1989 = vsel %vm1353, %v1942, 0
    %1991 = vmatprep.subr.bf16.mxu0 0
    %1992 = vmatpush1.bf16.msra.mxu0 0
    %1993 = vmatprep.subr.bf16.mxu0 0
    %1994 = vmatpush1.bf16.msra.mxu0 0
    %1995 = vmatprep.subr.bf16.mxu0 0
    %1996 = vmatpush1.bf16.msra.mxu0 0
    %1997 = vmatprep.subr.bf16.mxu0 0
    %1998 = vmatpush1.bf16.msra.mxu0 0
    %1999 = vmatprep.subr.bf16.mxu0 %v1567
    %2000 = vmatpush1.bf16.msra.mxu0 %v1566
    %2001 = vmatprep.subr.bf16.mxu0 %v1565
    %2002 = vmatpush1.bf16.msra.mxu0 %v1564
    %2003 = vmatprep.subr.bf16.mxu0 %v1563
    %2004 = vmatpush1.bf16.msra.mxu0 %v1562
    %2005 = vmatprep.subr.bf16.mxu0 %v1561
    %2006 = vmatpush1.bf16.msra.mxu0 %v1560
    %2007 = vmatprep.subr.bf16.mxu0 0
    %2008 = vmatpush2.bf16.msra.mxu0 0
    %2009 = vmatprep.subr.bf16.mxu0 0
    %2010 = vmatpush2.bf16.msra.mxu0 0
    %2011 = vmatprep.subr.bf16.mxu0 0
    %2012 = vmatpush2.bf16.msra.mxu0 0
    %2013 = vmatprep.subr.bf16.mxu0 0
    %2014 = vmatpush2.bf16.msra.mxu0 0
    %2015 = vmatprep.subr.bf16.mxu0 0
    %2016 = vmatpush2.bf16.msra.mxu0 0
    %2017 = vmatprep.subr.bf16.mxu0 0
    %2018 = vmatpush2.bf16.msra.mxu0 0
    %2019 = vmatprep.subr.bf16.mxu0 0
    %2020 = vmatpush2.bf16.msra.mxu0 0
    %2021 = vmatprep.subr.bf16.mxu0 0
    %2022 = vmatpush2.bf16.msra.mxu0 0
    %2023 = vmatprep.mubr.bf16.mxu0 0
    %2024 = vmatmul.mubr.bf16.gmra.mxu0 %v1989
    %v2025 = vpop.f32.mrf.mxu0
    %v2026 = vadd.f32 %v1982, %v2025
    %v2027 = vpop.f32.mrf.mxu0
    %v2028 = vadd.f32 %v1984, %v2027
    %v2029 = vpop.f32.mrf.mxu0
    %v2030 = vpop.f32.mrf.mxu0
    %2031 = vdwg.mxu0
    %v2032 = vadd.f32 %v2026, %v1625
    %v2033 = vadd.f32 %v2028, %v1629
    %v2034 = vxor.u32 %v2032, 2147483648
    %v2035 = vxor.u32 %v2033, 2147483648
    %v2036 = vmul.f32 %v2034, 1.442695
    %v2037 = vpow.pop %v2036
    %v2038 = vmul.f32 %v2035, 1.442695
    %v2039 = vpow.pop %v2038
    %v2040 = vadd.f32 %v2037, 1.0
    %v2041 = vadd.f32 %v2039, 1.0
    %v2042 = vrcp.pop %v2040
    %v2043 = vmul.f32 1.0, %v2042
    %v2044 = vrcp.pop %v2041
    %v2045 = vmul.f32 1.0, %v2044
    %v2046 = vtanh.pop %v2033
    %v2047 = vmul.f32 %v2043, %v1859
    %2049 = vrot.lane.b32.xlu0 %v2046, 64
    %v2050 = vpop.permute.xlu0 %2049
    %v2052 = vmul.f32 %v2043, %v2050
    %2054 = vrot.lane.b32.xlu0 %v2052, 64
    %v2055 = vpop.permute.xlu0 %2054
    %v2057 = vadd.f32 %v2047, %v2055
    %v2058 = vtanh.pop %v2057
    %2060 = vrot.lane.b32.xlu0 %v2058, 64
    %v2061 = vpop.permute.xlu0 %2060
    %v2063 = vmul.f32 %v2045, %v2061
    %s2064 = scalar_lea.vmem [#allocation2], 48
    %v2065 = vld [vmem:[%s2064] sm:$0xff]
    %v2066 = vld [vmem:[%s2064 + $0x8] sm:$0xff]
    %2067 = vmatprep.subr.bf16.mxu0 0
    %2068 = vmatpush1.bf16.msra.mxu0 0
    %2069 = vmatprep.subr.bf16.mxu0 0
    %2070 = vmatpush1.bf16.msra.mxu0 0
    %2071 = vmatprep.subr.bf16.mxu0 0
    %2072 = vmatpush1.bf16.msra.mxu0 0
    %2073 = vmatprep.subr.bf16.mxu0 0
    %2074 = vmatpush1.bf16.msra.mxu0 0
    %2075 = vmatprep.subr.bf16.mxu0 %v1344
    %2076 = vmatpush1.bf16.msra.mxu0 %v1343
    %2077 = vmatprep.subr.bf16.mxu0 %v1342
    %2078 = vmatpush1.bf16.msra.mxu0 %v1341
    %2079 = vmatprep.subr.bf16.mxu0 %v1340
    %2080 = vmatpush1.bf16.msra.mxu0 %v1339
    %2081 = vmatprep.subr.bf16.mxu0 %v1338
    %2082 = vmatpush1.bf16.msra.mxu0 %v1337
    %2083 = vmatprep.subr.bf16.mxu0 0
    %2084 = vmatpush2.bf16.msra.mxu0 0
    %2085 = vmatprep.subr.bf16.mxu0 0
    %2086 = vmatpush2.bf16.msra.mxu0 0
    %2087 = vmatprep.subr.bf16.mxu0 0
    %2088 = vmatpush2.bf16.msra.mxu0 0
    %2089 = vmatprep.subr.bf16.mxu0 0
    %2090 = vmatpush2.bf16.msra.mxu0 0
    %2091 = vmatprep.subr.bf16.mxu0 0
    %2092 = vmatpush2.bf16.msra.mxu0 0
    %2093 = vmatprep.subr.bf16.mxu0 0
    %2094 = vmatpush2.bf16.msra.mxu0 0
    %2095 = vmatprep.subr.bf16.mxu0 0
    %2096 = vmatpush2.bf16.msra.mxu0 0
    %2097 = vmatprep.subr.bf16.mxu0 0
    %2098 = vmatpush2.bf16.msra.mxu0 0
    %2099 = vmatprep.mubr.bf16.mxu0 0
    %2100 = vmatmul.mubr.bf16.gmra.mxu0 %v1989
    %v2101 = vpop.f32.mrf.mxu0
    %v2102 = vadd.f32 0.0, %v2101
    %v2103 = vpop.f32.mrf.mxu0
    %v2104 = vadd.f32 0.0, %v2103
    %v2105 = vpop.f32.mrf.mxu0
    %v2106 = vpop.f32.mrf.mxu0
    %2107 = vdwg.mxu0
    %v2108 = vadd.f32 %v2065, %v2102
    %v2109 = vadd.f32 %v2066, %v2104
    %v2110 = vxor.u32 %v2108, 2147483648
    %v2111 = vxor.u32 %v2109, 2147483648
    %v2112 = vmul.f32 %v2110, 1.442695
    %v2113 = vpow.pop %v2112
    %v2114 = vmul.f32 %v2111, 1.442695
    %v2115 = vpow.pop %v2114
    %v2116 = vadd.f32 %v2113, 1.0
    %v2117 = vadd.f32 %v2115, 1.0
    %v2118 = vrcp.pop %v2116
    %v2119 = vmul.f32 1.0, %v2118
    %v2120 = vrcp.pop %v2117
    %v2121 = vmul.f32 1.0, %v2120
    %v2122 = vtanh.pop %v2109
    %v2123 = vmul.f32 %v2119, %v1935
    %2125 = vrot.lane.b32.xlu0 %v2122, 64
    %v2126 = vpop.permute.xlu0 %2125
    %v2128 = vmul.f32 %v2119, %v2126
    %2130 = vrot.lane.b32.xlu0 %v2128, 64
    %v2131 = vpop.permute.xlu0 %2130
    %v2133 = vadd.f32 %v2123, %v2131
    %v2134 = vtanh.pop %v2133
    %2136 = vrot.lane.b32.xlu0 %v2134, 64
    %v2137 = vpop.permute.xlu0 %2136
    %v2139 = vmul.f32 %v2121, %v2137
    %v2140 = vpack.c.bf16 %v2139, %v2139
    %v2141 = vpack.c.bf16 %v2063, %v2063
    %v2143 = vsel %vm1353, %v2141, 0
    %2145 = vmatprep.subr.bf16.mxu0 0
    %2146 = vmatpush1.bf16.msra.mxu0 0
    %2147 = vmatprep.subr.bf16.mxu0 0
    %2148 = vmatpush1.bf16.msra.mxu0 0
    %2149 = vmatprep.subr.bf16.mxu0 0
    %2150 = vmatpush1.bf16.msra.mxu0 0
    %2151 = vmatprep.subr.bf16.mxu0 0
    %2152 = vmatpush1.bf16.msra.mxu0 0
    %2153 = vmatprep.subr.bf16.mxu0 %v1475
    %2154 = vmatpush1.bf16.msra.mxu0 %v1474
    %2155 = vmatprep.subr.bf16.mxu0 %v1473
    %2156 = vmatpush1.bf16.msra.mxu0 %v1472
    %2157 = vmatprep.subr.bf16.mxu0 %v1471
    %2158 = vmatpush1.bf16.msra.mxu0 %v1470
    %2159 = vmatprep.subr.bf16.mxu0 %v1469
    %2160 = vmatpush1.bf16.msra.mxu0 %v1468
    %2161 = vmatprep.subr.bf16.mxu0 0
    %2162 = vmatpush2.bf16.msra.mxu0 0
    %2163 = vmatprep.subr.bf16.mxu0 0
    %2164 = vmatpush2.bf16.msra.mxu0 0
    %2165 = vmatprep.subr.bf16.mxu0 0
    %2166 = vmatpush2.bf16.msra.mxu0 0
    %2167 = vmatprep.subr.bf16.mxu0 0
    %2168 = vmatpush2.bf16.msra.mxu0 0
    %2169 = vmatprep.subr.bf16.mxu0 0
    %2170 = vmatpush2.bf16.msra.mxu0 0
    %2171 = vmatprep.subr.bf16.mxu0 0
    %2172 = vmatpush2.bf16.msra.mxu0 0
    %2173 = vmatprep.subr.bf16.mxu0 0
    %2174 = vmatpush2.bf16.msra.mxu0 0
    %2175 = vmatprep.subr.bf16.mxu0 0
    %2176 = vmatpush2.bf16.msra.mxu0 0
    %2177 = vmatprep.mubr.bf16.mxu0 0
    %2178 = vmatmul.mubr.bf16.gmra.mxu0 %v2143
    %v2179 = vpop.f32.mrf.mxu0
    %v2180 = vadd.f32 0.0, %v2179
    %v2181 = vpop.f32.mrf.mxu0
    %v2182 = vadd.f32 0.0, %v2181
    %v2183 = vpop.f32.mrf.mxu0
    %v2184 = vpop.f32.mrf.mxu0
    %2185 = vdwg.mxu0
    %v2187 = vsel %vm1353, %v2140, 0
    %2189 = vmatprep.subr.bf16.mxu0 0
    %2190 = vmatpush1.bf16.msra.mxu0 0
    %2191 = vmatprep.subr.bf16.mxu0 0
    %2192 = vmatpush1.bf16.msra.mxu0 0
    %2193 = vmatprep.subr.bf16.mxu0 0
    %2194 = vmatpush1.bf16.msra.mxu0 0
    %2195 = vmatprep.subr.bf16.mxu0 0
    %2196 = vmatpush1.bf16.msra.mxu0 0
    %2197 = vmatprep.subr.bf16.mxu0 %v1567
    %2198 = vmatpush1.bf16.msra.mxu0 %v1566
    %2199 = vmatprep.subr.bf16.mxu0 %v1565
    %2200 = vmatpush1.bf16.msra.mxu0 %v1564
    %2201 = vmatprep.subr.bf16.mxu0 %v1563
    %2202 = vmatpush1.bf16.msra.mxu0 %v1562
    %2203 = vmatprep.subr.bf16.mxu0 %v1561
    %2204 = vmatpush1.bf16.msra.mxu0 %v1560
    %2205 = vmatprep.subr.bf16.mxu0 0
    %2206 = vmatpush2.bf16.msra.mxu0 0
    %2207 = vmatprep.subr.bf16.mxu0 0
    %2208 = vmatpush2.bf16.msra.mxu0 0
    %2209 = vmatprep.subr.bf16.mxu0 0
    %2210 = vmatpush2.bf16.msra.mxu0 0
    %2211 = vmatprep.subr.bf16.mxu0 0
    %2212 = vmatpush2.bf16.msra.mxu0 0
    %2213 = vmatprep.subr.bf16.mxu0 0
    %2214 = vmatpush2.bf16.msra.mxu0 0
    %2215 = vmatprep.subr.bf16.mxu0 0
    %2216 = vmatpush2.bf16.msra.mxu0 0
    %2217 = vmatprep.subr.bf16.mxu0 0
    %2218 = vmatpush2.bf16.msra.mxu0 0
    %2219 = vmatprep.subr.bf16.mxu0 0
    %2220 = vmatpush2.bf16.msra.mxu0 0
    %2221 = vmatprep.mubr.bf16.mxu0 0
    %2222 = vmatmul.mubr.bf16.gmra.mxu0 %v2187
    %v2223 = vpop.f32.mrf.mxu0
    %v2224 = vadd.f32 %v2180, %v2223
    %v2225 = vpop.f32.mrf.mxu0
    %v2226 = vadd.f32 %v2182, %v2225
    %v2227 = vpop.f32.mrf.mxu0
    %v2228 = vpop.f32.mrf.mxu0
    %2229 = vdwg.mxu0
    %v2230 = vadd.f32 %v2224, %v1625
    %v2231 = vadd.f32 %v2226, %v1629
    %v2232 = vxor.u32 %v2230, 2147483648
    %v2233 = vxor.u32 %v2231, 2147483648
    %v2234 = vmul.f32 %v2232, 1.442695
    %v2235 = vpow.pop %v2234
    %v2236 = vmul.f32 %v2233, 1.442695
    %v2237 = vpow.pop %v2236
    %v2238 = vadd.f32 %v2235, 1.0
    %v2239 = vadd.f32 %v2237, 1.0
    %v2240 = vrcp.pop %v2238
    %v2241 = vmul.f32 1.0, %v2240
    %v2242 = vrcp.pop %v2239
    %v2243 = vmul.f32 1.0, %v2242
    %v2244 = vtanh.pop %v2231
    %v2245 = vmul.f32 %v2241, %v2057
    %2247 = vrot.lane.b32.xlu0 %v2244, 64
    %v2248 = vpop.permute.xlu0 %2247
    %v2250 = vmul.f32 %v2241, %v2248
    %2252 = vrot.lane.b32.xlu0 %v2250, 64
    %v2253 = vpop.permute.xlu0 %2252
    %v2255 = vadd.f32 %v2245, %v2253
    %v2256 = vtanh.pop %v2255
    %2258 = vrot.lane.b32.xlu0 %v2256, 64
    %v2259 = vpop.permute.xlu0 %2258
    %v2261 = vmul.f32 %v2243, %v2259
    %s2262 = scalar_lea.vmem [#allocation2], 64
    %v2263 = vld [vmem:[%s2262] sm:$0xff]
    %v2264 = vld [vmem:[%s2262 + $0x8] sm:$0xff]
    %2265 = vmatprep.subr.bf16.mxu0 0
    %2266 = vmatpush1.bf16.msra.mxu0 0
    %2267 = vmatprep.subr.bf16.mxu0 0
    %2268 = vmatpush1.bf16.msra.mxu0 0
    %2269 = vmatprep.subr.bf16.mxu0 0
    %2270 = vmatpush1.bf16.msra.mxu0 0
    %2271 = vmatprep.subr.bf16.mxu0 0
    %2272 = vmatpush1.bf16.msra.mxu0 0
    %2273 = vmatprep.subr.bf16.mxu0 %v1344
    %2274 = vmatpush1.bf16.msra.mxu0 %v1343
    %2275 = vmatprep.subr.bf16.mxu0 %v1342
    %2276 = vmatpush1.bf16.msra.mxu0 %v1341
    %2277 = vmatprep.subr.bf16.mxu0 %v1340
    %2278 = vmatpush1.bf16.msra.mxu0 %v1339
    %2279 = vmatprep.subr.bf16.mxu0 %v1338
    %2280 = vmatpush1.bf16.msra.mxu0 %v1337
    %2281 = vmatprep.subr.bf16.mxu0 0
    %2282 = vmatpush2.bf16.msra.mxu0 0
    %2283 = vmatprep.subr.bf16.mxu0 0
    %2284 = vmatpush2.bf16.msra.mxu0 0
    %2285 = vmatprep.subr.bf16.mxu0 0
    %2286 = vmatpush2.bf16.msra.mxu0 0
    %2287 = vmatprep.subr.bf16.mxu0 0
    %2288 = vmatpush2.bf16.msra.mxu0 0
    %2289 = vmatprep.subr.bf16.mxu0 0
    %2290 = vmatpush2.bf16.msra.mxu0 0
    %2291 = vmatprep.subr.bf16.mxu0 0
    %2292 = vmatpush2.bf16.msra.mxu0 0
    %2293 = vmatprep.subr.bf16.mxu0 0
    %2294 = vmatpush2.bf16.msra.mxu0 0
    %2295 = vmatprep.subr.bf16.mxu0 0
    %2296 = vmatpush2.bf16.msra.mxu0 0
    %2297 = vmatprep.mubr.bf16.mxu0 0
    %2298 = vmatmul.mubr.bf16.gmra.mxu0 %v2187
    %v2299 = vpop.f32.mrf.mxu0
    %v2300 = vadd.f32 0.0, %v2299
    %v2301 = vpop.f32.mrf.mxu0
    %v2302 = vadd.f32 0.0, %v2301
    %v2303 = vpop.f32.mrf.mxu0
    %v2304 = vpop.f32.mrf.mxu0
    %2305 = vdwg.mxu0
    %v2306 = vadd.f32 %v2263, %v2300
    %v2307 = vadd.f32 %v2264, %v2302
    %v2308 = vxor.u32 %v2306, 2147483648
    %v2309 = vxor.u32 %v2307, 2147483648
    %v2310 = vmul.f32 %v2308, 1.442695
    %v2311 = vpow.pop %v2310
    %v2312 = vmul.f32 %v2309, 1.442695
    %v2313 = vpow.pop %v2312
    %v2314 = vadd.f32 %v2311, 1.0
    %v2315 = vadd.f32 %v2313, 1.0
    %v2316 = vrcp.pop %v2314
    %v2317 = vmul.f32 1.0, %v2316
    %v2318 = vrcp.pop %v2315
    %v2319 = vmul.f32 1.0, %v2318
    %v2320 = vtanh.pop %v2307
    %v2321 = vmul.f32 %v2317, %v2133
    %2323 = vrot.lane.b32.xlu0 %v2320, 64
    %v2324 = vpop.permute.xlu0 %2323
    %v2326 = vmul.f32 %v2317, %v2324
    %2328 = vrot.lane.b32.xlu0 %v2326, 64
    %v2329 = vpop.permute.xlu0 %2328
    %v2331 = vadd.f32 %v2321, %v2329
    %v2332 = vtanh.pop %v2331
    %2334 = vrot.lane.b32.xlu0 %v2332, 64
    %v2335 = vpop.permute.xlu0 %2334
    %v2337 = vmul.f32 %v2319, %v2335
    %v2338 = vpack.c.bf16 %v2337, %v2337
    %v2339 = vpack.c.bf16 %v2261, %v2261
    %v2341 = vsel %vm1353, %v2339, 0
    %2343 = vmatprep.subr.bf16.mxu0 0
    %2344 = vmatpush1.bf16.msra.mxu0 0
    %2345 = vmatprep.subr.bf16.mxu0 0
    %2346 = vmatpush1.bf16.msra.mxu0 0
    %2347 = vmatprep.subr.bf16.mxu0 0
    %2348 = vmatpush1.bf16.msra.mxu0 0
    %2349 = vmatprep.subr.bf16.mxu0 0
    %2350 = vmatpush1.bf16.msra.mxu0 0
    %2351 = vmatprep.subr.bf16.mxu0 %v1475
    %2352 = vmatpush1.bf16.msra.mxu0 %v1474
    %2353 = vmatprep.subr.bf16.mxu0 %v1473
    %2354 = vmatpush1.bf16.msra.mxu0 %v1472
    %2355 = vmatprep.subr.bf16.mxu0 %v1471
    %2356 = vmatpush1.bf16.msra.mxu0 %v1470
    %2357 = vmatprep.subr.bf16.mxu0 %v1469
    %2358 = vmatpush1.bf16.msra.mxu0 %v1468
    %2359 = vmatprep.subr.bf16.mxu0 0
    %2360 = vmatpush2.bf16.msra.mxu0 0
    %2361 = vmatprep.subr.bf16.mxu0 0
    %2362 = vmatpush2.bf16.msra.mxu0 0
    %2363 = vmatprep.subr.bf16.mxu0 0
    %2364 = vmatpush2.bf16.msra.mxu0 0
    %2365 = vmatprep.subr.bf16.mxu0 0
    %2366 = vmatpush2.bf16.msra.mxu0 0
    %2367 = vmatprep.subr.bf16.mxu0 0
    %2368 = vmatpush2.bf16.msra.mxu0 0
    %2369 = vmatprep.subr.bf16.mxu0 0
    %2370 = vmatpush2.bf16.msra.mxu0 0
    %2371 = vmatprep.subr.bf16.mxu0 0
    %2372 = vmatpush2.bf16.msra.mxu0 0
    %2373 = vmatprep.subr.bf16.mxu0 0
    %2374 = vmatpush2.bf16.msra.mxu0 0
    %2375 = vmatprep.mubr.bf16.mxu0 0
    %2376 = vmatmul.mubr.bf16.gmra.mxu0 %v2341
    %v2377 = vpop.f32.mrf.mxu0
    %v2378 = vadd.f32 0.0, %v2377
    %v2379 = vpop.f32.mrf.mxu0
    %v2380 = vadd.f32 0.0, %v2379
    %v2381 = vpop.f32.mrf.mxu0
    %v2382 = vpop.f32.mrf.mxu0
    %2383 = vdwg.mxu0
    %v2385 = vsel %vm1353, %v2338, 0
    %2387 = vmatprep.subr.bf16.mxu0 0
    %2388 = vmatpush1.bf16.msra.mxu0 0
    %2389 = vmatprep.subr.bf16.mxu0 0
    %2390 = vmatpush1.bf16.msra.mxu0 0
    %2391 = vmatprep.subr.bf16.mxu0 0
    %2392 = vmatpush1.bf16.msra.mxu0 0
    %2393 = vmatprep.subr.bf16.mxu0 0
    %2394 = vmatpush1.bf16.msra.mxu0 0
    %2395 = vmatprep.subr.bf16.mxu0 %v1567
    %2396 = vmatpush1.bf16.msra.mxu0 %v1566
    %2397 = vmatprep.subr.bf16.mxu0 %v1565
    %2398 = vmatpush1.bf16.msra.mxu0 %v1564
    %2399 = vmatprep.subr.bf16.mxu0 %v1563
    %2400 = vmatpush1.bf16.msra.mxu0 %v1562
    %2401 = vmatprep.subr.bf16.mxu0 %v1561
    %2402 = vmatpush1.bf16.msra.mxu0 %v1560
    %2403 = vmatprep.subr.bf16.mxu0 0
    %2404 = vmatpush2.bf16.msra.mxu0 0
    %2405 = vmatprep.subr.bf16.mxu0 0
    %2406 = vmatpush2.bf16.msra.mxu0 0
    %2407 = vmatprep.subr.bf16.mxu0 0
    %2408 = vmatpush2.bf16.msra.mxu0 0
    %2409 = vmatprep.subr.bf16.mxu0 0
    %2410 = vmatpush2.bf16.msra.mxu0 0
    %2411 = vmatprep.subr.bf16.mxu0 0
    %2412 = vmatpush2.bf16.msra.mxu0 0
    %2413 = vmatprep.subr.bf16.mxu0 0
    %2414 = vmatpush2.bf16.msra.mxu0 0
    %2415 = vmatprep.subr.bf16.mxu0 0
    %2416 = vmatpush2.bf16.msra.mxu0 0
    %2417 = vmatprep.subr.bf16.mxu0 0
    %2418 = vmatpush2.bf16.msra.mxu0 0
    %2419 = vmatprep.mubr.bf16.mxu0 0
    %2420 = vmatmul.mubr.bf16.gmra.mxu0 %v2385
    %v2421 = vpop.f32.mrf.mxu0
    %v2422 = vadd.f32 %v2378, %v2421
    %v2423 = vpop.f32.mrf.mxu0
    %v2424 = vadd.f32 %v2380, %v2423
    %v2425 = vpop.f32.mrf.mxu0
    %v2426 = vpop.f32.mrf.mxu0
    %2427 = vdwg.mxu0
    %v2428 = vadd.f32 %v2422, %v1625
    %v2429 = vadd.f32 %v2424, %v1629
    %v2430 = vxor.u32 %v2428, 2147483648
    %v2431 = vxor.u32 %v2429, 2147483648
    %v2432 = vmul.f32 %v2430, 1.442695
    %v2433 = vpow.pop %v2432
    %v2434 = vmul.f32 %v2431, 1.442695
    %v2435 = vpow.pop %v2434
    %v2436 = vadd.f32 %v2433, 1.0
    %v2437 = vadd.f32 %v2435, 1.0
    %v2438 = vrcp.pop %v2436
    %v2439 = vmul.f32 1.0, %v2438
    %v2440 = vrcp.pop %v2437
    %v2441 = vmul.f32 1.0, %v2440
    %v2442 = vtanh.pop %v2429
    %v2443 = vmul.f32 %v2439, %v2255
    %2445 = vrot.lane.b32.xlu0 %v2442, 64
    %v2446 = vpop.permute.xlu0 %2445
    %v2448 = vmul.f32 %v2439, %v2446
    %2450 = vrot.lane.b32.xlu0 %v2448, 64
    %v2451 = vpop.permute.xlu0 %2450
    %v2453 = vadd.f32 %v2443, %v2451
    %v2454 = vtanh.pop %v2453
    %2456 = vrot.lane.b32.xlu0 %v2454, 64
    %v2457 = vpop.permute.xlu0 %2456
    %v2459 = vmul.f32 %v2441, %v2457
    %s2460 = scalar_lea.vmem [#allocation2], 80
    %v2461 = vld [vmem:[%s2460] sm:$0xff]
    %v2462 = vld [vmem:[%s2460 + $0x8] sm:$0xff]
    %2463 = vmatprep.subr.bf16.mxu0 0
    %2464 = vmatpush1.bf16.msra.mxu0 0
    %2465 = vmatprep.subr.bf16.mxu0 0
    %2466 = vmatpush1.bf16.msra.mxu0 0
    %2467 = vmatprep.subr.bf16.mxu0 0
    %2468 = vmatpush1.bf16.msra.mxu0 0
    %2469 = vmatprep.subr.bf16.mxu0 0
    %2470 = vmatpush1.bf16.msra.mxu0 0
    %2471 = vmatprep.subr.bf16.mxu0 %v1344
    %2472 = vmatpush1.bf16.msra.mxu0 %v1343
    %2473 = vmatprep.subr.bf16.mxu0 %v1342
    %2474 = vmatpush1.bf16.msra.mxu0 %v1341
    %2475 = vmatprep.subr.bf16.mxu0 %v1340
    %2476 = vmatpush1.bf16.msra.mxu0 %v1339
    %2477 = vmatprep.subr.bf16.mxu0 %v1338
    %2478 = vmatpush1.bf16.msra.mxu0 %v1337
    %2479 = vmatprep.subr.bf16.mxu0 0
    %2480 = vmatpush2.bf16.msra.mxu0 0
    %2481 = vmatprep.subr.bf16.mxu0 0
    %2482 = vmatpush2.bf16.msra.mxu0 0
    %2483 = vmatprep.subr.bf16.mxu0 0
    %2484 = vmatpush2.bf16.msra.mxu0 0
    %2485 = vmatprep.subr.bf16.mxu0 0
    %2486 = vmatpush2.bf16.msra.mxu0 0
    %2487 = vmatprep.subr.bf16.mxu0 0
    %2488 = vmatpush2.bf16.msra.mxu0 0
    %2489 = vmatprep.subr.bf16.mxu0 0
    %2490 = vmatpush2.bf16.msra.mxu0 0
    %2491 = vmatprep.subr.bf16.mxu0 0
    %2492 = vmatpush2.bf16.msra.mxu0 0
    %2493 = vmatprep.subr.bf16.mxu0 0
    %2494 = vmatpush2.bf16.msra.mxu0 0
    %2495 = vmatprep.mubr.bf16.mxu0 0
    %2496 = vmatmul.mubr.bf16.gmra.mxu0 %v2385
    %v2497 = vpop.f32.mrf.mxu0
    %v2498 = vadd.f32 0.0, %v2497
    %v2499 = vpop.f32.mrf.mxu0
    %v2500 = vadd.f32 0.0, %v2499
    %v2501 = vpop.f32.mrf.mxu0
    %v2502 = vpop.f32.mrf.mxu0
    %2503 = vdwg.mxu0
    %v2504 = vadd.f32 %v2461, %v2498
    %v2505 = vadd.f32 %v2462, %v2500
    %v2506 = vxor.u32 %v2504, 2147483648
    %v2507 = vxor.u32 %v2505, 2147483648
    %v2508 = vmul.f32 %v2506, 1.442695
    %v2509 = vpow.pop %v2508
    %v2510 = vmul.f32 %v2507, 1.442695
    %v2511 = vpow.pop %v2510
    %v2512 = vadd.f32 %v2509, 1.0
    %v2513 = vadd.f32 %v2511, 1.0
    %v2514 = vrcp.pop %v2512
    %v2515 = vmul.f32 1.0, %v2514
    %v2516 = vrcp.pop %v2513
    %v2517 = vmul.f32 1.0, %v2516
    %v2518 = vtanh.pop %v2505
    %v2519 = vmul.f32 %v2515, %v2331
    %2521 = vrot.lane.b32.xlu0 %v2518, 64
    %v2522 = vpop.permute.xlu0 %2521
    %v2524 = vmul.f32 %v2515, %v2522
    %2526 = vrot.lane.b32.xlu0 %v2524, 64
    %v2527 = vpop.permute.xlu0 %2526
    %v2529 = vadd.f32 %v2519, %v2527
    %v2530 = vtanh.pop %v2529
    %2532 = vrot.lane.b32.xlu0 %v2530, 64
    %v2533 = vpop.permute.xlu0 %2532
    %v2535 = vmul.f32 %v2517, %v2533
    %v2536 = vpack.c.bf16 %v2535, %v2535
    %v2537 = vpack.c.bf16 %v2459, %v2459
    %v2539 = vsel %vm1353, %v2537, 0
    %2541 = vmatprep.subr.bf16.mxu0 0
    %2542 = vmatpush1.bf16.msra.mxu0 0
    %2543 = vmatprep.subr.bf16.mxu0 0
    %2544 = vmatpush1.bf16.msra.mxu0 0
    %2545 = vmatprep.subr.bf16.mxu0 0
    %2546 = vmatpush1.bf16.msra.mxu0 0
    %2547 = vmatprep.subr.bf16.mxu0 0
    %2548 = vmatpush1.bf16.msra.mxu0 0
    %2549 = vmatprep.subr.bf16.mxu0 %v1475
    %2550 = vmatpush1.bf16.msra.mxu0 %v1474
    %2551 = vmatprep.subr.bf16.mxu0 %v1473
    %2552 = vmatpush1.bf16.msra.mxu0 %v1472
    %2553 = vmatprep.subr.bf16.mxu0 %v1471
    %2554 = vmatpush1.bf16.msra.mxu0 %v1470
    %2555 = vmatprep.subr.bf16.mxu0 %v1469
    %2556 = vmatpush1.bf16.msra.mxu0 %v1468
    %2557 = vmatprep.subr.bf16.mxu0 0
    %2558 = vmatpush2.bf16.msra.mxu0 0
    %2559 = vmatprep.subr.bf16.mxu0 0
    %2560 = vmatpush2.bf16.msra.mxu0 0
    %2561 = vmatprep.subr.bf16.mxu0 0
    %2562 = vmatpush2.bf16.msra.mxu0 0
    %2563 = vmatprep.subr.bf16.mxu0 0
    %2564 = vmatpush2.bf16.msra.mxu0 0
    %2565 = vmatprep.subr.bf16.mxu0 0
    %2566 = vmatpush2.bf16.msra.mxu0 0
    %2567 = vmatprep.subr.bf16.mxu0 0
    %2568 = vmatpush2.bf16.msra.mxu0 0
    %2569 = vmatprep.subr.bf16.mxu0 0
    %2570 = vmatpush2.bf16.msra.mxu0 0
    %2571 = vmatprep.subr.bf16.mxu0 0
    %2572 = vmatpush2.bf16.msra.mxu0 0
    %2573 = vmatprep.mubr.bf16.mxu0 0
    %2574 = vmatmul.mubr.bf16.gmra.mxu0 %v2539
    %v2575 = vpop.f32.mrf.mxu0
    %v2576 = vadd.f32 0.0, %v2575
    %v2577 = vpop.f32.mrf.mxu0
    %v2578 = vadd.f32 0.0, %v2577
    %v2579 = vpop.f32.mrf.mxu0
    %v2580 = vpop.f32.mrf.mxu0
    %2581 = vdwg.mxu0
    %v2583 = vsel %vm1353, %v2536, 0
    %2585 = vmatprep.subr.bf16.mxu0 0
    %2586 = vmatpush1.bf16.msra.mxu0 0
    %2587 = vmatprep.subr.bf16.mxu0 0
    %2588 = vmatpush1.bf16.msra.mxu0 0
    %2589 = vmatprep.subr.bf16.mxu0 0
    %2590 = vmatpush1.bf16.msra.mxu0 0
    %2591 = vmatprep.subr.bf16.mxu0 0
    %2592 = vmatpush1.bf16.msra.mxu0 0
    %2593 = vmatprep.subr.bf16.mxu0 %v1567
    %2594 = vmatpush1.bf16.msra.mxu0 %v1566
    %2595 = vmatprep.subr.bf16.mxu0 %v1565
    %2596 = vmatpush1.bf16.msra.mxu0 %v1564
    %2597 = vmatprep.subr.bf16.mxu0 %v1563
    %2598 = vmatpush1.bf16.msra.mxu0 %v1562
    %2599 = vmatprep.subr.bf16.mxu0 %v1561
    %2600 = vmatpush1.bf16.msra.mxu0 %v1560
    %2601 = vmatprep.subr.bf16.mxu0 0
    %2602 = vmatpush2.bf16.msra.mxu0 0
    %2603 = vmatprep.subr.bf16.mxu0 0
    %2604 = vmatpush2.bf16.msra.mxu0 0
    %2605 = vmatprep.subr.bf16.mxu0 0
    %2606 = vmatpush2.bf16.msra.mxu0 0
    %2607 = vmatprep.subr.bf16.mxu0 0
    %2608 = vmatpush2.bf16.msra.mxu0 0
    %2609 = vmatprep.subr.bf16.mxu0 0
    %2610 = vmatpush2.bf16.msra.mxu0 0
    %2611 = vmatprep.subr.bf16.mxu0 0
    %2612 = vmatpush2.bf16.msra.mxu0 0
    %2613 = vmatprep.subr.bf16.mxu0 0
    %2614 = vmatpush2.bf16.msra.mxu0 0
    %2615 = vmatprep.subr.bf16.mxu0 0
    %2616 = vmatpush2.bf16.msra.mxu0 0
    %2617 = vmatprep.mubr.bf16.mxu0 0
    %2618 = vmatmul.mubr.bf16.gmra.mxu0 %v2583
    %v2619 = vpop.f32.mrf.mxu0
    %v2620 = vadd.f32 %v2576, %v2619
    %v2621 = vpop.f32.mrf.mxu0
    %v2622 = vadd.f32 %v2578, %v2621
    %v2623 = vpop.f32.mrf.mxu0
    %v2624 = vpop.f32.mrf.mxu0
    %2625 = vdwg.mxu0
    %v2626 = vadd.f32 %v2620, %v1625
    %v2627 = vadd.f32 %v2622, %v1629
    %v2628 = vxor.u32 %v2626, 2147483648
    %v2629 = vxor.u32 %v2627, 2147483648
    %v2630 = vmul.f32 %v2628, 1.442695
    %v2631 = vpow.pop %v2630
    %v2632 = vmul.f32 %v2629, 1.442695
    %v2633 = vpow.pop %v2632
    %v2634 = vadd.f32 %v2631, 1.0
    %v2635 = vadd.f32 %v2633, 1.0
    %v2636 = vrcp.pop %v2634
    %v2637 = vmul.f32 1.0, %v2636
    %v2638 = vrcp.pop %v2635
    %v2639 = vmul.f32 1.0, %v2638
    %v2640 = vtanh.pop %v2627
    %v2641 = vmul.f32 %v2637, %v2453
    %2643 = vrot.lane.b32.xlu0 %v2640, 64
    %v2644 = vpop.permute.xlu0 %2643
    %v2646 = vmul.f32 %v2637, %v2644
    %2648 = vrot.lane.b32.xlu0 %v2646, 64
    %v2649 = vpop.permute.xlu0 %2648
    %v2651 = vadd.f32 %v2641, %v2649
    %v2652 = vtanh.pop %v2651
    %2654 = vrot.lane.b32.xlu0 %v2652, 64
    %v2655 = vpop.permute.xlu0 %2654
    %v2657 = vmul.f32 %v2639, %v2655
    %2658 = vst.msk [vmem:[#allocation3] sm:$0xff] %vm1353, %v2535
    %2660 = vrot.lane.b32.xlu0 %v2529, 64
    %v2661 = vpop.permute.xlu0 %2660
    %2663 = vst.msk [vmem:[#allocation4] sm:$0xff] %vm1353, %v2661
    %2664 = vst.msk [vmem:[%s1297] sm:$0xff] %vm1353, %v2657
    %2666 = vrot.lane.b32.xlu0 %v2651, 64
    %v2667 = vpop.permute.xlu0 %2666
    %2669 = vst.msk [vmem:[%s1300] sm:$0xff] %vm1353, %v2667
    // Predicated region
    $region54: #{tpu_custom_call.1} parent=1 // pred_check
      %p2670 = pneg %p99
    $region55: #{tpu_custom_call.1} parent=1 // pred_check_branch
      %2672 = sbr.rel (%p2670) target = $region57
    $region56: #{tpu_custom_call.1} parent=1 // pred_region
      %v2673 = vld [vmem:[#allocation3] sm:$0xff]
      %v2674 = vld [vmem:[#allocation3 + $0x8] sm:$0xff]
      %2675 = vst.msk [vmem:[#allocation14] sm:$0xff] %vm1353, %v2673
      %2676 = vst.msk [vmem:[#allocation14 + $0x8] sm:$0xff] %vm1353, %v2674
      %v2677 = vld [vmem:[#allocation4] sm:$0xff]
      %v2678 = vld [vmem:[#allocation4 + $0x8] sm:$0xff]
      %2679 = vst.msk [vmem:[#allocation15] sm:$0xff] %vm1353, %v2677
      %2680 = vst.msk [vmem:[#allocation15 + $0x8] sm:$0xff] %vm1353, %v2678
    $region57: #{tpu_custom_call.1} parent=1 // pred_fallthru
      _
    // Predicated region
    $region58: #{tpu_custom_call.1} parent=1 // pred_check
      _
    $region59: #{tpu_custom_call.1} parent=1 // pred_check_branch
      %2682 = sbr.rel (0) target = $region61
    $region60: #{tpu_custom_call.1} parent=1 // pred_region
      %s2684 = ssub.s32 256, 256
      %2685 = vsyncadd [#allocation7], %s2684
      %s2686 = sshll.u32 [#allocation14], 4
      %s2687 = int_to_ptr.vmem [resolvable:$true] %s2686
      %2692 = dma.vmem_to_hbm [thread:$0]  %s2687, 256, %s7, [#allocation7], 128, 128, 8
    $region61: #{tpu_custom_call.1} parent=1 // pred_fallthru
      _
    // Predicated region
    $region62: #{tpu_custom_call.1} parent=1 // pred_check
      _
    $region63: #{tpu_custom_call.1} parent=1 // pred_check_branch
      %2694 = sbr.rel (0) target = $region65
    $region64: #{tpu_custom_call.1} parent=1 // pred_region
      %s2696 = ssub.s32 256, 256
      %2697 = vsyncadd [#allocation16], %s2696
      %s2698 = sshll.u32 [#allocation15], 4
      %s2699 = int_to_ptr.vmem [resolvable:$true] %s2698
      %2704 = dma.vmem_to_hbm [thread:$0]  %s2699, 256, %s8, [#allocation16], 128, 128, 8
    $region65: #{tpu_custom_call.1} parent=1 // pred_fallthru
      _
    // Predicated region
    $region66: #{tpu_custom_call.1} parent=1 // pred_check
      _
    $region67: #{tpu_custom_call.1} parent=1 // pred_check_branch
      %2706 = sbr.rel (0) target = $region69
    $region68: #{tpu_custom_call.1} parent=1 // pred_region
      %2707 = dma.done [#allocation7], 256
    $region69: #{tpu_custom_call.1} parent=1 // pred_fallthru
      _
    // Predicated region
    $region70: #{tpu_custom_call.1} parent=1 // pred_check
      _
    $region71: #{tpu_custom_call.1} parent=1 // pred_check_branch
      %2709 = sbr.rel (0) target = $region73
    $region72: #{tpu_custom_call.1} parent=1 // pred_region
      %2710 = dma.done [#allocation16], 256
    $region73: #{tpu_custom_call.1} parent=1 // pred_fallthru
      _
    %2711 = vsyncpa [#allocation6], 1
    %2712 = vsyncpa [#allocation9], 1
    %2713 = vsyncpa [#allocation12], 1
    %2714 = vsyncpa [#allocation7], 1
    %2715 = vsyncpa [#allocation16], 1

</llo_original>
